<compile_context>
chip_gen: v7x
topology: tpu7x:2x2x1
jax: 0.10.0
libtpu: 0.0.40
codegen_flags: <defaults>
</compile_context>

<pallas_src>
import functools

import jax
import jax.numpy as jnp
from jax.experimental import pallas as pl
from jax.experimental.pallas import tpu as pltpu

LANE = 128      # lane-padded channel / output width
KP1 = 128       # padded im2col feature width for conv1 (1*5*5 = 25 -> 128)
NCLASS = 10


# ----------------------------------------------------------------------------
# Pallas kernels (3 fused kernels = the whole forward pass)
# ----------------------------------------------------------------------------
def conv_pool_relu_kernel(p_ref, w_ref, b_ref, o_ref):
    """Fused conv (im2col matmul) + bias + 2x2 maxpool + ReLU.

    p_ref: (4*R, Kp)  patches, rows ordered (dy, dx, n, ph, pw): the four
                      pool members of output row q sit at q, q+R, q+2R, q+3R.
    w_ref: (Kp, 128)  zero-padded weights (lane-dense output channels)
    b_ref: (1, 128)   zero-padded bias
    o_ref: (R, 128)   pooled activations, rows ordered (n, ph, pw)
    """
    acc = jnp.dot(p_ref[...], w_ref[...], preferred_element_type=jnp.float32)
    acc = acc + b_ref[...]
    r = o_ref.shape[0]
    m = jnp.maximum(jnp.maximum(acc[0 * r:1 * r], acc[1 * r:2 * r]),
                    jnp.maximum(acc[2 * r:3 * r], acc[3 * r:4 * r]))
    # relu(maxpool(.)) == maxpool(relu(.)) (ReLU is monotone) -> matches PyTorch.
    o_ref[...] = jnp.maximum(m, 0.0).astype(o_ref.dtype)


def fc_head_kernel(x_ref, w1_ref, b1_ref, w2_ref, b2_ref, o_ref, *, n_classes):
    """Fused fc1 + ReLU + (dropout: eval identity) + fc2 + log_softmax.

    x_ref : (N, 2048)   lane-padded flattened conv2 output (perm folded in w1)
    w1_ref: (2048, 128), b1_ref: (1, 128)   fc1, outputs padded 50 -> 128
    w2_ref: (128, 128),  b2_ref: (1, 128)   fc2, outputs padded 10 -> 128
    o_ref : (N, 128)    log-probs in cols [0, n_classes); pad cols are junk
    """
    h = jnp.dot(x_ref[...], w1_ref[...], preferred_element_type=jnp.float32)
    h = jnp.maximum(h + b1_ref[...], 0.0)
    # TODO(synk): F.dropout after fc1 treated as identity (inference mode).
    logits = jnp.dot(h, w2_ref[...], preferred_element_type=jnp.float32)
    logits = logits + b2_ref[...]
    col = jax.lax.broadcasted_iota(jnp.int32, logits.shape, 1)
    logits = jnp.where(col < n_classes, logits, jnp.float32(-1e30))
    m = jnp.max(logits, axis=-1, keepdims=True)
    lse = m + jnp.log(jnp.sum(jnp.exp(logits - m), axis=-1, keepdims=True))
    o_ref[...] = (logits - lse).astype(o_ref.dtype)


# ----------------------------------------------------------------------------
# pallas_call helpers (everything fits in VMEM -> one full-array block)
# ----------------------------------------------------------------------------
def _full_spec(shape):
    nd = len(shape)
    return pl.BlockSpec(shape, lambda i, nd=nd: (0,) * nd)


def _run(kernel, out_shape, *args):
    return pl.pallas_call(
        kernel,
        out_shape=jax.ShapeDtypeStruct(out_shape, jnp.float32),
        grid=(1,),
        in_specs=[_full_spec(a.shape) for a in args],
        out_specs=_full_spec(out_shape),
        compiler_params=pltpu.CompilerParams(dimension_semantics=("arbitrary",)),
    )(*args)


def conv_block(patches, w, b, rows_out):
    return _run(conv_pool_relu_kernel, (rows_out, w.shape[1]), patches, w, b)


def fc_head(x, w1, b1, w2, b2):
    return _run(functools.partial(fc_head_kernel, n_classes=NCLASS),
                (x.shape[0], w2.shape[1]), x, w1, b1, w2, b2)


# ----------------------------------------------------------------------------
# Glue: im2col with pool-grouped row ordering (data movement only)
# ----------------------------------------------------------------------------
def im2col_pool(x, k):
    """x: (N, H, W, C) -> patches (4*N*(OH//2)*(OW//2), C*k*k).

    Rows ordered (dy, dx, n, ph, pw) with (oh, ow) = (2*ph+dy, 2*pw+dx);
    per-row features ordered (c, kh, kw) to match PyTorch's
    Conv2d weight (Cout, Cin, KH, KW).reshape(Cout, -1)."""
    n, h, w, c = x.shape
    oh, ow = h - k + 1, w - k + 1
    assert oh % 2 == 0 and ow % 2 == 0, "maxpool(2) needs even conv output dims"
    taps = [x[:, kh:kh + oh, kw:kw + ow, :] for kh in range(k) for kw in range(k)]
    p = jnp.stack(taps, axis=-1)                       # (N, OH, OW, C, k*k)
    f = c * k * k
    p = p.reshape(n, oh, ow, f)                        # feature = c*k*k + kh*k + kw
    p = p.reshape(n, oh // 2, 2, ow // 2, 2, f)        # (n, ph, dy, pw, dx, f)
    p = p.transpose(2, 4, 0, 1, 3, 5)                  # (dy, dx, n, ph, pw, f)
    return p.reshape(4 * n * (oh // 2) * (ow // 2), f), (n, oh // 2, ow // 2)


# ----------------------------------------------------------------------------
# Parameters: PyTorch-shaped init, then a one-time fold/pad (outside jit)
# ----------------------------------------------------------------------------
def init_params(key):
    def uniform(key, shape, fan_in):
        bound = 1.0 / jnp.sqrt(jnp.float32(fan_in))
        return jax.random.uniform(key, shape, jnp.float32, -bound, bound)

    ks = jax.random.split(key, 8)
    return {
        "w1": uniform(ks[0], (10, 1, 5, 5), 1 * 5 * 5),
        "b1": uniform(ks[1], (1, 10), 1 * 5 * 5),
        "w2": uniform(ks[2], (20, 10, 5, 5), 10 * 5 * 5),
        "b2": uniform(ks[3], (1, 20), 10 * 5 * 5),
        "wfc1": uniform(ks[4], (50, 320), 320),
        "bfc1": uniform(ks[5], (1, 50), 320),
        "wfc2": uniform(ks[6], (10, 50), 50),
        "bfc2": uniform(ks[7], (1, 10), 50),
    }


def prepare_params(p):
    """Fold all weight reshapes/transposes, the PyTorch flatten permutation and
    the lane padding (channels -> 128) into the weights, once, outside jit."""
    f32 = jnp.float32

    # conv1: (10,1,5,5) -> (K=25, 10) placed in a (128, 128) zero slab.
    w1 = jnp.zeros((KP1, LANE), f32).at[:25, :10].set(p["w1"].reshape(10, 25).T)
    b1 = jnp.zeros((1, LANE), f32).at[:, :10].set(p["b1"])

    # conv2: consumes the lane-padded 128-channel map; feature = c*25 + kh*5 + kw.
    w2 = jnp.zeros((LANE, 5, 5, LANE), f32)
    w2 = w2.at[:10, :, :, :20].set(jnp.transpose(p["w2"], (1, 2, 3, 0)))
    w2 = w2.reshape(LANE * 25, LANE)
    b2 = jnp.zeros((1, LANE), f32).at[:, :20].set(p["b2"])

    # fc1: fold PyTorch's x.view(-1, 320) ordering (c, h, w) into columns of the
    # (h, w, c_pad) row-major flatten of the conv2 block output; pad out to 128.
    wfc1 = jnp.zeros((4, 4, LANE, LANE), f32)          # (h, w, c_pad, out_pad)
    wpt = p["wfc1"].reshape(50, 20, 4, 4)              # (out, c, h, w)
    wfc1 = wfc1.at[:, :, :20, :50].set(jnp.transpose(wpt, (2, 3, 1, 0)))
    wfc1 = wfc1.reshape(4 * 4 * LANE, LANE)
    bfc1 = jnp.zeros((1, LANE), f32).at[:, :50].set(p["bfc1"])

    wfc2 = jnp.zeros((LANE, LANE), f32).at[:50, :10].set(p["wfc2"].T)
    bfc2 = jnp.zeros((1, LANE), f32).at[:, :10].set(p["bfc2"])

    return {"w1": w1, "b1": b1, "w2": w2, "b2": b2,
            "wfc1": wfc1, "bfc1": bfc1, "wfc2": wfc2, "bfc2": bfc2}


# ----------------------------------------------------------------------------
# Forward pass
# ----------------------------------------------------------------------------
@jax.jit
def net_forward(x_nchw, params):
    n = x_nchw.shape[0]
    x = jnp.transpose(x_nchw, (0, 2, 3, 1))                    # NCHW -> NHWC

    # conv1 (1 -> 10, k=5) + maxpool(2) + relu, fused.  K padded 25 -> 128.
    p1, (_, h1, w1) = im2col_pool(x, 5)                        # (4*N*144, 25)
    p1 = jnp.pad(p1, ((0, 0), (0, KP1 - p1.shape[1])))         # (4*N*144, 128)
    y1 = conv_block(p1, params["w1"], params["b1"], n * h1 * w1)   # (N*144, 128)

    # conv2 (10 -> 20, k=5) + dropout2d (eval: identity) + maxpool(2) + relu.
    # TODO(synk): Dropout2d treated as identity (inference mode).
    x2 = y1.reshape(n, h1, w1, LANE)                           # contiguous, free
    p2, (_, h2, w2) = im2col_pool(x2, 5)                       # (4*N*16, 3200)
    y2 = conv_block(p2, params["w2"], params["b2"], n * h2 * w2)   # (N*16, 128)

    # flatten: (N*4*4, 128) row-major == (N, 4*4*128); the PyTorch (c, h, w)
    # flatten permutation + channel padding are folded into wfc1 at init.
    xf = y2.reshape(n, h2 * w2 * LANE)                         # (N, 2048), free

    # fc1 + relu + dropout(eval) + fc2 + log_softmax, fused.
    out = fc_head(xf, params["wfc1"], params["bfc1"],
                  params["wfc2"], params["bfc2"])              # (N, 128)
    return out[:, :NCLASS]                                     # single de-pad slice


# ----------------------------------------------------------------------------
# Pure-JAX reference (no Pallas) for a numerical sanity check
# ----------------------------------------------------------------------------
def reference_forward(x_nchw, p):
    hi = jax.lax.Precision.HIGHEST
    x = jnp.transpose(x_nchw, (0, 2, 3, 1))

    def conv(x, w, b):
        y = jax.lax.conv_general_dilated(
            x, jnp.transpose(w, (2, 3, 1, 0)), (1, 1), "VALID",
            dimension_numbers=("NHWC", "HWIO", "NHWC"), precision=hi)
        return y + b.reshape(1, 1, 1, -1)

    def pool_relu(y):
        n, h, w, c = y.shape
        y = y.reshape(n, h // 2, 2, w // 2, 2, c).max(axis=(2, 4))
        return jnp.maximum(y, 0.0)

    h1 = pool_relu(conv(x, p["w1"], p["b1"]))
    h2 = pool_relu(conv(h1, p["w2"], p["b2"]))
    h2 = jnp.transpose(h2, (0, 3, 1, 2)).reshape(x.shape[0], 320)
    h3 = jnp.maximum(jnp.dot(h2, p["wfc1"].T, precision=hi) + p["bfc1"], 0.0)
    logits = jnp.dot(h3, p["wfc2"].T, precision=hi) + p["bfc2"]
    return jax.nn.log_softmax(logits, axis=-1)


if __name__ == "__main__":
    key = jax.random.PRNGKey(0)
    k_x, k_p = jax.random.split(key)
    # MNIST-shaped input: fc1's 320 = 20*4*4 forces 28x28 spatial.
    x = jax.random.normal(k_x, (2, 1, 28, 28), jnp.float32)
    raw = init_params(k_p)
    params = prepare_params(raw)          # one-time fold/pad, outside jit

    out = jax.block_until_ready(net_forward(x, params))

    assert out.shape == (2, NCLASS)
    # log-softmax rows sum (in prob space) to ~1
    assert jnp.allclose(jnp.sum(jnp.exp(out), axis=1), 1.0, atol=1e-4)
    # matches the plain-JAX reference of the PyTorch module (eval mode)
    ref = reference_forward(x, raw)
    assert jnp.allclose(out, ref, atol=5e-2), float(jnp.max(jnp.abs(out - ref)))
    print("KERNEL_OK")
</pallas_src>

<mosaic_0001>
module attributes {stable_mosaic.version = 11 : i64} {
  func.func @conv_pool_relu_kernel(%arg0: i32, %arg1: memref<1152x128xf32, #tpu.memory_space<vmem>>, %arg2: memref<128x128xf32, #tpu.memory_space<vmem>>, %arg3: memref<1x128xf32, #tpu.memory_space<vmem>>, %arg4: memref<288x128xf32, #tpu.memory_space<vmem>>) attributes {dimension_semantics = [#tpu.dimension_semantics<arbitrary>], iteration_bounds = array<i64: 1>, scalar_prefetch = 0 : i64, scratch_operands = 0 : i64, tpu.core_type = #tpu.core_type<tc>, window_params = [{pipeline_mode = #tpu.pipeline_mode<synchronous>, transform_indices = @transform_0, window_bounds = array<i64: 1152, 128>}, {pipeline_mode = #tpu.pipeline_mode<synchronous>, transform_indices = @transform_1, window_bounds = array<i64: 128, 128>}, {pipeline_mode = #tpu.pipeline_mode<synchronous>, transform_indices = @transform_2, window_bounds = array<i64: 1, 128>}, {pipeline_mode = #tpu.pipeline_mode<synchronous>, transform_indices = @transform_3, window_bounds = array<i64: 288, 128>}]} {
    %c0 = arith.constant 0 : index
    %c0_0 = arith.constant 0 : index
    %0 = vector.load %arg1[%c0, %c0_0] : memref<1152x128xf32, #tpu.memory_space<vmem>>, vector<1152x128xf32>
    %c0_1 = arith.constant 0 : index
    %c0_2 = arith.constant 0 : index
    %1 = vector.load %arg2[%c0_1, %c0_2] : memref<128x128xf32, #tpu.memory_space<vmem>>, vector<128x128xf32>
    %cst = arith.constant dense<0.000000e+00> : vector<1152x128xf32>
    %2 = tpu.matmul %0, %1, %cst {dimension_numbers = #tpu.dot_dimension_numbers<[1], [0], [0], [1], [0, 0, 1, 1], [], []>} : vector<1152x128xf32>, vector<128x128xf32>, vector<1152x128xf32> -> vector<1152x128xf32>
    %c0_3 = arith.constant 0 : index
    %c0_4 = arith.constant 0 : index
    %3 = vector.load %arg3[%c0_3, %c0_4] : memref<1x128xf32, #tpu.memory_space<vmem>>, vector<1x128xf32>
    %4 = vector.broadcast %3 : vector<1x128xf32> to vector<1152x128xf32>
    %5 = arith.addf %2, %4 : vector<1152x128xf32>
    %6 = vector.extract_strided_slice %5 {offsets = [0, 0], sizes = [288, 128], strides = [1, 1]} : vector<1152x128xf32> to vector<288x128xf32>
    %7 = vector.extract_strided_slice %5 {offsets = [288, 0], sizes = [288, 128], strides = [1, 1]} : vector<1152x128xf32> to vector<288x128xf32>
    %8 = arith.maximumf %6, %7 : vector<288x128xf32>
    %9 = vector.extract_strided_slice %5 {offsets = [576, 0], sizes = [288, 128], strides = [1, 1]} : vector<1152x128xf32> to vector<288x128xf32>
    %10 = vector.extract_strided_slice %5 {offsets = [864, 0], sizes = [288, 128], strides = [1, 1]} : vector<1152x128xf32> to vector<288x128xf32>
    %11 = arith.maximumf %9, %10 : vector<288x128xf32>
    %12 = arith.maximumf %8, %11 : vector<288x128xf32>
    %cst_5 = arith.constant 0.000000e+00 : f32
    %13 = vector.broadcast %cst_5 : f32 to vector<288x128xf32>
    %14 = arith.maximumf %12, %13 : vector<288x128xf32>
    %c0_6 = arith.constant 0 : index
    %c0_7 = arith.constant 0 : index
    %15 = vector.load %arg4[%c0_6, %c0_7] : memref<288x128xf32, #tpu.memory_space<vmem>>, vector<288x128xf32>
    tpu.vector_store %arg4[%c0_6, %c0_7], %14 {strides = array<i32>} : memref<288x128xf32, #tpu.memory_space<vmem>>, vector<288x128xf32>,
    return
  }
  func.func @transform_0(%arg0: i32) -> (i32, i32) {
    %c0_i32 = arith.constant 0 : i32
    %c0_i32_0 = arith.constant 0 : i32
    %c0_i32_1 = arith.constant 0 : i32
    return %c0_i32, %c0_i32_0 : i32, i32
  }
  func.func @transform_1(%arg0: i32) -> (i32, i32) {
    %c0_i32 = arith.constant 0 : i32
    %c0_i32_0 = arith.constant 0 : i32
    %c0_i32_1 = arith.constant 0 : i32
    return %c0_i32, %c0_i32_0 : i32, i32
  }
  func.func @transform_2(%arg0: i32) -> (i32, i32) {
    %c0_i32 = arith.constant 0 : i32
    %c0_i32_0 = arith.constant 0 : i32
    %c0_i32_1 = arith.constant 0 : i32
    return %c0_i32, %c0_i32_0 : i32, i32
  }
  func.func @transform_3(%arg0: i32) -> (i32, i32) {
    %c0_i32 = arith.constant 0 : i32
    %c0_i32_0 = arith.constant 0 : i32
    %c0_i32_1 = arith.constant 0 : i32
    return %c0_i32, %c0_i32_0 : i32, i32
  }
}

module attributes {stable_mosaic.version = 11 : i64} {
  func.func @conv_pool_relu_kernel(%arg0: i32, %arg1: memref<128x3200xf32, #tpu.memory_space<vmem>>, %arg2: memref<3200x128xf32, #tpu.memory_space<vmem>>, %arg3: memref<1x128xf32, #tpu.memory_space<vmem>>, %arg4: memref<32x128xf32, #tpu.memory_space<vmem>>) attributes {dimension_semantics = [#tpu.dimension_semantics<arbitrary>], iteration_bounds = array<i64: 1>, scalar_prefetch = 0 : i64, scratch_operands = 0 : i64, tpu.core_type = #tpu.core_type<tc>, window_params = [{pipeline_mode = #tpu.pipeline_mode<synchronous>, transform_indices = @transform_0, window_bounds = array<i64: 128, 3200>}, {pipeline_mode = #tpu.pipeline_mode<synchronous>, transform_indices = @transform_1, window_bounds = array<i64: 3200, 128>}, {pipeline_mode = #tpu.pipeline_mode<synchronous>, transform_indices = @transform_2, window_bounds = array<i64: 1, 128>}, {pipeline_mode = #tpu.pipeline_mode<synchronous>, transform_indices = @transform_3, window_bounds = array<i64: 32, 128>}]} {
    %c0 = arith.constant 0 : index
    %c0_0 = arith.constant 0 : index
    %0 = vector.load %arg1[%c0, %c0_0] : memref<128x3200xf32, #tpu.memory_space<vmem>>, vector<128x3200xf32>
    %c0_1 = arith.constant 0 : index
    %c0_2 = arith.constant 0 : index
    %1 = vector.load %arg2[%c0_1, %c0_2] : memref<3200x128xf32, #tpu.memory_space<vmem>>, vector<3200x128xf32>
    %cst = arith.constant dense<0.000000e+00> : vector<128x128xf32>
    %2 = tpu.matmul %0, %1, %cst {dimension_numbers = #tpu.dot_dimension_numbers<[1], [0], [0], [1], [0, 0, 1, 1], [], []>} : vector<128x3200xf32>, vector<3200x128xf32>, vector<128x128xf32> -> vector<128x128xf32>
    %c0_3 = arith.constant 0 : index
    %c0_4 = arith.constant 0 : index
    %3 = vector.load %arg3[%c0_3, %c0_4] : memref<1x128xf32, #tpu.memory_space<vmem>>, vector<1x128xf32>
    %4 = vector.broadcast %3 : vector<1x128xf32> to vector<128x128xf32>
    %5 = arith.addf %2, %4 : vector<128x128xf32>
    %6 = vector.extract_strided_slice %5 {offsets = [0, 0], sizes = [32, 128], strides = [1, 1]} : vector<128x128xf32> to vector<32x128xf32>
    %7 = vector.extract_strided_slice %5 {offsets = [32, 0], sizes = [32, 128], strides = [1, 1]} : vector<128x128xf32> to vector<32x128xf32>
    %8 = arith.maximumf %6, %7 : vector<32x128xf32>
    %9 = vector.extract_strided_slice %5 {offsets = [64, 0], sizes = [32, 128], strides = [1, 1]} : vector<128x128xf32> to vector<32x128xf32>
    %10 = vector.extract_strided_slice %5 {offsets = [96, 0], sizes = [32, 128], strides = [1, 1]} : vector<128x128xf32> to vector<32x128xf32>
    %11 = arith.maximumf %9, %10 : vector<32x128xf32>
    %12 = arith.maximumf %8, %11 : vector<32x128xf32>
    %cst_5 = arith.constant 0.000000e+00 : f32
    %13 = vector.broadcast %cst_5 : f32 to vector<32x128xf32>
    %14 = arith.maximumf %12, %13 : vector<32x128xf32>
    %c0_6 = arith.constant 0 : index
    %c0_7 = arith.constant 0 : index
    %15 = vector.load %arg4[%c0_6, %c0_7] : memref<32x128xf32, #tpu.memory_space<vmem>>, vector<32x128xf32>
    tpu.vector_store %arg4[%c0_6, %c0_7], %14 {strides = array<i32>} : memref<32x128xf32, #tpu.memory_space<vmem>>, vector<32x128xf32>,
    return
  }
  func.func @transform_0(%arg0: i32) -> (i32, i32) {
    %c0_i32 = arith.constant 0 : i32
    %c0_i32_0 = arith.constant 0 : i32
    %c0_i32_1 = arith.constant 0 : i32
    return %c0_i32, %c0_i32_0 : i32, i32
  }
  func.func @transform_1(%arg0: i32) -> (i32, i32) {
    %c0_i32 = arith.constant 0 : i32
    %c0_i32_0 = arith.constant 0 : i32
    %c0_i32_1 = arith.constant 0 : i32
    return %c0_i32, %c0_i32_0 : i32, i32
  }
  func.func @transform_2(%arg0: i32) -> (i32, i32) {
    %c0_i32 = arith.constant 0 : i32
    %c0_i32_0 = arith.constant 0 : i32
    %c0_i32_1 = arith.constant 0 : i32
    return %c0_i32, %c0_i32_0 : i32, i32
  }
  func.func @transform_3(%arg0: i32) -> (i32, i32) {
    %c0_i32 = arith.constant 0 : i32
    %c0_i32_0 = arith.constant 0 : i32
    %c0_i32_1 = arith.constant 0 : i32
    return %c0_i32, %c0_i32_0 : i32, i32
  }
}

module attributes {stable_mosaic.version = 11 : i64} {
  func.func @fc_head_kernel(%arg0: i32, %arg1: memref<2x2048xf32, #tpu.memory_space<vmem>>, %arg2: memref<2048x128xf32, #tpu.memory_space<vmem>>, %arg3: memref<1x128xf32, #tpu.memory_space<vmem>>, %arg4: memref<128x128xf32, #tpu.memory_space<vmem>>, %arg5: memref<1x128xf32, #tpu.memory_space<vmem>>, %arg6: memref<2x128xf32, #tpu.memory_space<vmem>>) attributes {dimension_semantics = [#tpu.dimension_semantics<arbitrary>], iteration_bounds = array<i64: 1>, scalar_prefetch = 0 : i64, scratch_operands = 0 : i64, tpu.core_type = #tpu.core_type<tc>, window_params = [{pipeline_mode = #tpu.pipeline_mode<synchronous>, transform_indices = @transform_0, window_bounds = array<i64: 2, 2048>}, {pipeline_mode = #tpu.pipeline_mode<synchronous>, transform_indices = @transform_1, window_bounds = array<i64: 2048, 128>}, {pipeline_mode = #tpu.pipeline_mode<synchronous>, transform_indices = @transform_2, window_bounds = array<i64: 1, 128>}, {pipeline_mode = #tpu.pipeline_mode<synchronous>, transform_indices = @transform_3, window_bounds = array<i64: 128, 128>}, {pipeline_mode = #tpu.pipeline_mode<synchronous>, transform_indices = @transform_4, window_bounds = array<i64: 1, 128>}, {pipeline_mode = #tpu.pipeline_mode<synchronous>, transform_indices = @transform_5, window_bounds = array<i64: 2, 128>}]} {
    %c0 = arith.constant 0 : index
    %c0_0 = arith.constant 0 : index
    %0 = vector.load %arg1[%c0, %c0_0] : memref<2x2048xf32, #tpu.memory_space<vmem>>, vector<2x2048xf32>
    %c0_1 = arith.constant 0 : index
    %c0_2 = arith.constant 0 : index
    %1 = vector.load %arg2[%c0_1, %c0_2] : memref<2048x128xf32, #tpu.memory_space<vmem>>, vector<2048x128xf32>
    %cst = arith.constant dense<0.000000e+00> : vector<2x128xf32>
    %2 = tpu.matmul %0, %1, %cst {dimension_numbers = #tpu.dot_dimension_numbers<[1], [0], [0], [1], [0, 0, 1, 1], [], []>} : vector<2x2048xf32>, vector<2048x128xf32>, vector<2x128xf32> -> vector<2x128xf32>
    %c0_3 = arith.constant 0 : index
    %c0_4 = arith.constant 0 : index
    %3 = vector.load %arg3[%c0_3, %c0_4] : memref<1x128xf32, #tpu.memory_space<vmem>>, vector<1x128xf32>
    %4 = vector.broadcast %3 : vector<1x128xf32> to vector<2x128xf32>
    %5 = arith.addf %2, %4 : vector<2x128xf32>
    %cst_5 = arith.constant 0.000000e+00 : f32
    %6 = vector.broadcast %cst_5 : f32 to vector<2x128xf32>
    %7 = arith.maximumf %5, %6 : vector<2x128xf32>
    %c0_6 = arith.constant 0 : index
    %c0_7 = arith.constant 0 : index
    %8 = vector.load %arg4[%c0_6, %c0_7] : memref<128x128xf32, #tpu.memory_space<vmem>>, vector<128x128xf32>
    %cst_8 = arith.constant dense<0.000000e+00> : vector<2x128xf32>
    %9 = tpu.matmul %7, %8, %cst_8 {dimension_numbers = #tpu.dot_dimension_numbers<[1], [0], [0], [1], [0, 0, 1, 1], [], []>} : vector<2x128xf32>, vector<128x128xf32>, vector<2x128xf32> -> vector<2x128xf32>
    %c0_9 = arith.constant 0 : index
    %c0_10 = arith.constant 0 : index
    %10 = vector.load %arg5[%c0_9, %c0_10] : memref<1x128xf32, #tpu.memory_space<vmem>>, vector<1x128xf32>
    %11 = vector.broadcast %10 : vector<1x128xf32> to vector<2x128xf32>
    %12 = arith.addf %9, %11 : vector<2x128xf32>
    %13 = tpu.iota {dimensions = array<i32: 1>} : vector<2x128xi32>
    %c10_i32 = arith.constant 10 : i32
    %14 = vector.broadcast %c10_i32 : i32 to vector<2x128xi32>
    %15 = arith.cmpi slt, %13, %14 : vector<2x128xi32>
    %cst_11 = arith.constant -1.000000e+30 : f32
    %16 = vector.broadcast %cst_11 : f32 to vector<2x128xf32>
    %17 = arith.select %15, %12, %16 : vector<2x128xi1>, vector<2x128xf32>
    %cst_12 = arith.constant dense<0xFF800000> : vector<2xf32>
    %18 = vector.multi_reduction <maximumf>, %17, %cst_12 [1] : vector<2x128xf32> to vector<2xf32>
    %19 = vector.shape_cast %18 : vector<2xf32> to vector<2x1xf32>
    %20 = vector.broadcast %19 : vector<2x1xf32> to vector<2x128xf32>
    %21 = arith.subf %17, %20 : vector<2x128xf32>
    %22 = math.exp %21 : vector<2x128xf32>
    %cst_13 = arith.constant dense<0.000000e+00> : vector<2xf32>
    %23 = vector.multi_reduction <add>, %22, %cst_13 [1] : vector<2x128xf32> to vector<2xf32>
    %24 = vector.shape_cast %23 : vector<2xf32> to vector<2x1xf32>
    %25 = math.log %24 : vector<2x1xf32>
    %26 = arith.addf %19, %25 : vector<2x1xf32>
    %27 = vector.broadcast %26 : vector<2x1xf32> to vector<2x128xf32>
    %28 = arith.subf %17, %27 : vector<2x128xf32>
    %c0_14 = arith.constant 0 : index
    %c0_15 = arith.constant 0 : index
    %29 = vector.load %arg6[%c0_14, %c0_15] : memref<2x128xf32, #tpu.memory_space<vmem>>, vector<2x128xf32>
    tpu.vector_store %arg6[%c0_14, %c0_15], %28 {strides = array<i32>} : memref<2x128xf32, #tpu.memory_space<vmem>>, vector<2x128xf32>,
    return
  }
  func.func @transform_0(%arg0: i32) -> (i32, i32) {
    %c0_i32 = arith.constant 0 : i32
    %c0_i32_0 = arith.constant 0 : i32
    %c0_i32_1 = arith.constant 0 : i32
    return %c0_i32, %c0_i32_0 : i32, i32
  }
  func.func @transform_1(%arg0: i32) -> (i32, i32) {
    %c0_i32 = arith.constant 0 : i32
    %c0_i32_0 = arith.constant 0 : i32
    %c0_i32_1 = arith.constant 0 : i32
    return %c0_i32, %c0_i32_0 : i32, i32
  }
  func.func @transform_2(%arg0: i32) -> (i32, i32) {
    %c0_i32 = arith.constant 0 : i32
    %c0_i32_0 = arith.constant 0 : i32
    %c0_i32_1 = arith.constant 0 : i32
    return %c0_i32, %c0_i32_0 : i32, i32
  }
  func.func @transform_3(%arg0: i32) -> (i32, i32) {
    %c0_i32 = arith.constant 0 : i32
    %c0_i32_0 = arith.constant 0 : i32
    %c0_i32_1 = arith.constant 0 : i32
    return %c0_i32, %c0_i32_0 : i32, i32
  }
  func.func @transform_4(%arg0: i32) -> (i32, i32) {
    %c0_i32 = arith.constant 0 : i32
    %c0_i32_0 = arith.constant 0 : i32
    %c0_i32_1 = arith.constant 0 : i32
    return %c0_i32, %c0_i32_0 : i32, i32
  }
  func.func @transform_5(%arg0: i32) -> (i32, i32) {
    %c0_i32 = arith.constant 0 : i32
    %c0_i32_0 = arith.constant 0 : i32
    %c0_i32_1 = arith.constant 0 : i32
    return %c0_i32, %c0_i32_0 : i32, i32
  }
}

</mosaic_0001>

<llo_original>
// kernel: net_forward.3
$region0: #{net_forward.3}
  #allocation0 [shape = 'u32[]', space=smem, size = 0x4, offset = 0x4, fixed_abs, tag = 'smem constant byte address 0x4 - core index']
  #allocation1 [shape = 'u32[144,128]{1,0:T(1,128)}', space=vmem, size = 0x12000, scoped, tag = 'internal scratch']
  %s0 = inlined_call_operand.vmem [shape: f32[1152,128], index: 0, kind: input, shape index: {}]
  %s1 = inlined_call_operand.vmem [shape: f32[128,128], index: 1, kind: input, shape index: {}]
  %s2 = inlined_call_operand.vmem [shape: f32[1,128], index: 2, kind: input, shape index: {}]
  %s3 = inlined_call_operand.vmem [shape: f32[288,128], index: 3, kind: output, shape index: {}]
  %s4 = sld [smem:[#allocation0]]
  $region22: #{net_forward.3} parent=0
    _
  %s6 = ssub.s32 1, %s4
  %s7 = scalar_select 0, %s6, %s4
  // Predicated region
  $region2: #{net_forward.3} parent=0 // pred_check
    _
  $region3: #{net_forward.3} parent=0 // pred_check_branch
    %9 = sbr.rel (0) target = $region5
  $region4: #{net_forward.3} parent=0 // pred_region
    _
  $region5: #{net_forward.3} parent=0 // pred_fallthru
    _
  // Predicated region
  $region6: #{net_forward.3} parent=0 // pred_check
    _
  $region7: #{net_forward.3} parent=0 // pred_check_branch
    %11 = sbr.rel (0) target = $region9
  $region8: #{net_forward.3} parent=0 // pred_region
    _
  $region9: #{net_forward.3} parent=0 // pred_fallthru
    _
  // Predicated region
  $region10: #{net_forward.3} parent=0 // pred_check
    _
  $region11: #{net_forward.3} parent=0 // pred_check_branch
    %13 = sbr.rel (0) target = $region13
  $region12: #{net_forward.3} parent=0 // pred_region
    _
  $region13: #{net_forward.3} parent=0 // pred_fallthru
    _
  %v14 = vld [vmem:[%s0] sm:$0xff]
  %v15 = vld [vmem:[%s0 + $0x8] sm:$0xff]
  %v16 = vld [vmem:[%s0 + $0x10] sm:$0xff]
  %v17 = vld [vmem:[%s0 + $0x18] sm:$0xff]
  %v18 = vld [vmem:[%s0 + $0x20] sm:$0xff]
  %v19 = vld [vmem:[%s0 + $0x28] sm:$0xff]
  %v20 = vld [vmem:[%s0 + $0x30] sm:$0xff]
  %v21 = vld [vmem:[%s0 + $0x38] sm:$0xff]
  %v22 = vld [vmem:[%s0 + $0x40] sm:$0xff]
  %v23 = vld [vmem:[%s0 + $0x48] sm:$0xff]
  %v24 = vld [vmem:[%s0 + $0x50] sm:$0xff]
  %v25 = vld [vmem:[%s0 + $0x58] sm:$0xff]
  %v26 = vld [vmem:[%s0 + $0x60] sm:$0xff]
  %v27 = vld [vmem:[%s0 + $0x68] sm:$0xff]
  %v28 = vld [vmem:[%s0 + $0x70] sm:$0xff]
  %v29 = vld [vmem:[%s0 + $0x78] sm:$0xff]
  %v30 = vld [vmem:[%s0 + $0x80] sm:$0xff]
  %v31 = vld [vmem:[%s0 + $0x88] sm:$0xff]
  %v32 = vld [vmem:[%s0 + $0x90] sm:$0xff]
  %v33 = vld [vmem:[%s0 + $0x98] sm:$0xff]
  %v34 = vld [vmem:[%s0 + $0xa0] sm:$0xff]
  %v35 = vld [vmem:[%s0 + $0xa8] sm:$0xff]
  %v36 = vld [vmem:[%s0 + $0xb0] sm:$0xff]
  %v37 = vld [vmem:[%s0 + $0xb8] sm:$0xff]
  %v38 = vld [vmem:[%s0 + $0xc0] sm:$0xff]
  %v39 = vld [vmem:[%s0 + $0xc8] sm:$0xff]
  %v40 = vld [vmem:[%s0 + $0xd0] sm:$0xff]
  %v41 = vld [vmem:[%s0 + $0xd8] sm:$0xff]
  %v42 = vld [vmem:[%s0 + $0xe0] sm:$0xff]
  %v43 = vld [vmem:[%s0 + $0xe8] sm:$0xff]
  %v44 = vld [vmem:[%s0 + $0xf0] sm:$0xff]
  %v45 = vld [vmem:[%s0 + $0xf8] sm:$0xff]
  %v46 = vld [vmem:[%s0 + $0x100] sm:$0xff]
  %v47 = vld [vmem:[%s0 + $0x108] sm:$0xff]
  %v48 = vld [vmem:[%s0 + $0x110] sm:$0xff]
  %v49 = vld [vmem:[%s0 + $0x118] sm:$0xff]
  %v50 = vld [vmem:[%s0 + $0x120] sm:$0xff]
  %v51 = vld [vmem:[%s0 + $0x128] sm:$0xff]
  %v52 = vld [vmem:[%s0 + $0x130] sm:$0xff]
  %v53 = vld [vmem:[%s0 + $0x138] sm:$0xff]
  %v54 = vld [vmem:[%s0 + $0x140] sm:$0xff]
  %v55 = vld [vmem:[%s0 + $0x148] sm:$0xff]
  %v56 = vld [vmem:[%s0 + $0x150] sm:$0xff]
  %v57 = vld [vmem:[%s0 + $0x158] sm:$0xff]
  %v58 = vld [vmem:[%s0 + $0x160] sm:$0xff]
  %v59 = vld [vmem:[%s0 + $0x168] sm:$0xff]
  %v60 = vld [vmem:[%s0 + $0x170] sm:$0xff]
  %v61 = vld [vmem:[%s0 + $0x178] sm:$0xff]
  %v62 = vld [vmem:[%s0 + $0x180] sm:$0xff]
  %v63 = vld [vmem:[%s0 + $0x188] sm:$0xff]
  %v64 = vld [vmem:[%s0 + $0x190] sm:$0xff]
  %v65 = vld [vmem:[%s0 + $0x198] sm:$0xff]
  %v66 = vld [vmem:[%s0 + $0x1a0] sm:$0xff]
  %v67 = vld [vmem:[%s0 + $0x1a8] sm:$0xff]
  %v68 = vld [vmem:[%s0 + $0x1b0] sm:$0xff]
  %v69 = vld [vmem:[%s0 + $0x1b8] sm:$0xff]
  %v70 = vld [vmem:[%s0 + $0x1c0] sm:$0xff]
  %v71 = vld [vmem:[%s0 + $0x1c8] sm:$0xff]
  %v72 = vld [vmem:[%s0 + $0x1d0] sm:$0xff]
  %v73 = vld [vmem:[%s0 + $0x1d8] sm:$0xff]
  %v74 = vld [vmem:[%s0 + $0x1e0] sm:$0xff]
  %v75 = vld [vmem:[%s0 + $0x1e8] sm:$0xff]
  %v76 = vld [vmem:[%s0 + $0x1f0] sm:$0xff]
  %v77 = vld [vmem:[%s0 + $0x1f8] sm:$0xff]
  %v78 = vld [vmem:[%s0 + $0x200] sm:$0xff]
  %v79 = vld [vmem:[%s0 + $0x208] sm:$0xff]
  %v80 = vld [vmem:[%s0 + $0x210] sm:$0xff]
  %v81 = vld [vmem:[%s0 + $0x218] sm:$0xff]
  %v82 = vld [vmem:[%s0 + $0x220] sm:$0xff]
  %v83 = vld [vmem:[%s0 + $0x228] sm:$0xff]
  %v84 = vld [vmem:[%s0 + $0x230] sm:$0xff]
  %v85 = vld [vmem:[%s0 + $0x238] sm:$0xff]
  %v86 = vld [vmem:[%s0 + $0x240] sm:$0xff]
  %v87 = vld [vmem:[%s0 + $0x248] sm:$0xff]
  %v88 = vld [vmem:[%s0 + $0x250] sm:$0xff]
  %v89 = vld [vmem:[%s0 + $0x258] sm:$0xff]
  %v90 = vld [vmem:[%s0 + $0x260] sm:$0xff]
  %v91 = vld [vmem:[%s0 + $0x268] sm:$0xff]
  %v92 = vld [vmem:[%s0 + $0x270] sm:$0xff]
  %v93 = vld [vmem:[%s0 + $0x278] sm:$0xff]
  %v94 = vld [vmem:[%s0 + $0x280] sm:$0xff]
  %v95 = vld [vmem:[%s0 + $0x288] sm:$0xff]
  %v96 = vld [vmem:[%s0 + $0x290] sm:$0xff]
  %v97 = vld [vmem:[%s0 + $0x298] sm:$0xff]
  %v98 = vld [vmem:[%s0 + $0x2a0] sm:$0xff]
  %v99 = vld [vmem:[%s0 + $0x2a8] sm:$0xff]
  %v100 = vld [vmem:[%s0 + $0x2b0] sm:$0xff]
  %v101 = vld [vmem:[%s0 + $0x2b8] sm:$0xff]
  %v102 = vld [vmem:[%s0 + $0x2c0] sm:$0xff]
  %v103 = vld [vmem:[%s0 + $0x2c8] sm:$0xff]
  %v104 = vld [vmem:[%s0 + $0x2d0] sm:$0xff]
  %v105 = vld [vmem:[%s0 + $0x2d8] sm:$0xff]
  %v106 = vld [vmem:[%s0 + $0x2e0] sm:$0xff]
  %v107 = vld [vmem:[%s0 + $0x2e8] sm:$0xff]
  %v108 = vld [vmem:[%s0 + $0x2f0] sm:$0xff]
  %v109 = vld [vmem:[%s0 + $0x2f8] sm:$0xff]
  %v110 = vld [vmem:[%s0 + $0x300] sm:$0xff]
  %v111 = vld [vmem:[%s0 + $0x308] sm:$0xff]
  %v112 = vld [vmem:[%s0 + $0x310] sm:$0xff]
  %v113 = vld [vmem:[%s0 + $0x318] sm:$0xff]
  %v114 = vld [vmem:[%s0 + $0x320] sm:$0xff]
  %v115 = vld [vmem:[%s0 + $0x328] sm:$0xff]
  %v116 = vld [vmem:[%s0 + $0x330] sm:$0xff]
  %v117 = vld [vmem:[%s0 + $0x338] sm:$0xff]
  %v118 = vld [vmem:[%s0 + $0x340] sm:$0xff]
  %v119 = vld [vmem:[%s0 + $0x348] sm:$0xff]
  %v120 = vld [vmem:[%s0 + $0x350] sm:$0xff]
  %v121 = vld [vmem:[%s0 + $0x358] sm:$0xff]
  %v122 = vld [vmem:[%s0 + $0x360] sm:$0xff]
  %v123 = vld [vmem:[%s0 + $0x368] sm:$0xff]
  %v124 = vld [vmem:[%s0 + $0x370] sm:$0xff]
  %v125 = vld [vmem:[%s0 + $0x378] sm:$0xff]
  %v126 = vld [vmem:[%s0 + $0x380] sm:$0xff]
  %v127 = vld [vmem:[%s0 + $0x388] sm:$0xff]
  %v128 = vld [vmem:[%s0 + $0x390] sm:$0xff]
  %v129 = vld [vmem:[%s0 + $0x398] sm:$0xff]
  %v130 = vld [vmem:[%s0 + $0x3a0] sm:$0xff]
  %v131 = vld [vmem:[%s0 + $0x3a8] sm:$0xff]
  %v132 = vld [vmem:[%s0 + $0x3b0] sm:$0xff]
  %v133 = vld [vmem:[%s0 + $0x3b8] sm:$0xff]
  %v134 = vld [vmem:[%s0 + $0x3c0] sm:$0xff]
  %v135 = vld [vmem:[%s0 + $0x3c8] sm:$0xff]
  %v136 = vld [vmem:[%s0 + $0x3d0] sm:$0xff]
  %v137 = vld [vmem:[%s0 + $0x3d8] sm:$0xff]
  %v138 = vld [vmem:[%s0 + $0x3e0] sm:$0xff]
  %v139 = vld [vmem:[%s0 + $0x3e8] sm:$0xff]
  %v140 = vld [vmem:[%s0 + $0x3f0] sm:$0xff]
  %v141 = vld [vmem:[%s0 + $0x3f8] sm:$0xff]
  %v142 = vld [vmem:[%s0 + $0x400] sm:$0xff]
  %v143 = vld [vmem:[%s0 + $0x408] sm:$0xff]
  %v144 = vld [vmem:[%s0 + $0x410] sm:$0xff]
  %v145 = vld [vmem:[%s0 + $0x418] sm:$0xff]
  %v146 = vld [vmem:[%s0 + $0x420] sm:$0xff]
  %v147 = vld [vmem:[%s0 + $0x428] sm:$0xff]
  %v148 = vld [vmem:[%s0 + $0x430] sm:$0xff]
  %v149 = vld [vmem:[%s0 + $0x438] sm:$0xff]
  %v150 = vld [vmem:[%s0 + $0x440] sm:$0xff]
  %v151 = vld [vmem:[%s0 + $0x448] sm:$0xff]
  %v152 = vld [vmem:[%s0 + $0x450] sm:$0xff]
  %v153 = vld [vmem:[%s0 + $0x458] sm:$0xff]
  %v154 = vld [vmem:[%s0 + $0x460] sm:$0xff]
  %v155 = vld [vmem:[%s0 + $0x468] sm:$0xff]
  %v156 = vld [vmem:[%s0 + $0x470] sm:$0xff]
  %v157 = vld [vmem:[%s0 + $0x478] sm:$0xff]
  %v158 = vld [vmem:[%s1] sm:$0xff]
  %v159 = vld [vmem:[%s1 + $0x8] sm:$0xff]
  %v160 = vld [vmem:[%s1 + $0x10] sm:$0xff]
  %v161 = vld [vmem:[%s1 + $0x18] sm:$0xff]
  %v162 = vld [vmem:[%s1 + $0x20] sm:$0xff]
  %v163 = vld [vmem:[%s1 + $0x28] sm:$0xff]
  %v164 = vld [vmem:[%s1 + $0x30] sm:$0xff]
  %v165 = vld [vmem:[%s1 + $0x38] sm:$0xff]
  %v166 = vld [vmem:[%s1 + $0x40] sm:$0xff]
  %v167 = vld [vmem:[%s1 + $0x48] sm:$0xff]
  %v168 = vld [vmem:[%s1 + $0x50] sm:$0xff]
  %v169 = vld [vmem:[%s1 + $0x58] sm:$0xff]
  %v170 = vld [vmem:[%s1 + $0x60] sm:$0xff]
  %v171 = vld [vmem:[%s1 + $0x68] sm:$0xff]
  %v172 = vld [vmem:[%s1 + $0x70] sm:$0xff]
  %v173 = vld [vmem:[%s1 + $0x78] sm:$0xff]
  %v174 = vld [vmem:[%s2] sm:$0x1]
  %v176 = vlaneseq
  %v177 = vshrl.u32 %v176, 7
  %v178 = vsub.s32 0, %v177
  %v179 = vrot.slane %v174, %v178
  %181 = vmatprep.subr.mxu0 0.0
  %182 = vmatpush1.msra.mxu0 %v158
  %183 = vmatprep.subr.mxu0 0.0
  %184 = vmatpush1.msra.mxu0 %v159
  %185 = vmatprep.subr.mxu0 0.0
  %186 = vmatpush1.msra.mxu0 %v160
  %187 = vmatprep.subr.mxu0 0.0
  %188 = vmatpush1.msra.mxu0 %v161
  %189 = vmatprep.subr.mxu0 0.0
  %190 = vmatpush1.msra.mxu0 %v162
  %191 = vmatprep.subr.mxu0 0.0
  %192 = vmatpush1.msra.mxu0 %v163
  %193 = vmatprep.subr.mxu0 0.0
  %194 = vmatpush1.msra.mxu0 %v164
  %195 = vmatprep.subr.mxu0 0.0
  %196 = vmatpush1.msra.mxu0 %v165
  %197 = vmatprep.subr.mxu0 0.0
  %198 = vmatpush1.msra.mxu0 %v166
  %199 = vmatprep.subr.mxu0 0.0
  %200 = vmatpush1.msra.mxu0 %v167
  %201 = vmatprep.subr.mxu0 0.0
  %202 = vmatpush1.msra.mxu0 %v168
  %203 = vmatprep.subr.mxu0 0.0
  %204 = vmatpush1.msra.mxu0 %v169
  %205 = vmatprep.subr.mxu0 0.0
  %206 = vmatpush1.msra.mxu0 %v170
  %207 = vmatprep.subr.mxu0 0.0
  %208 = vmatpush1.msra.mxu0 %v171
  %209 = vmatprep.subr.mxu0 0.0
  %210 = vmatpush1.msra.mxu0 %v172
  %211 = vmatprep.subr.mxu0 0.0
  %212 = vmatpush1.msra.mxu0 %v173
  %213 = vmatprep.subr.mxu0 0.0
  %214 = vmatpush1.msra.mxu0 0.0
  %215 = vmatprep.subr.mxu0 0.0
  %216 = vmatpush1.msra.mxu0 0.0
  %217 = vmatprep.subr.mxu0 0.0
  %218 = vmatpush1.msra.mxu0 0.0
  %219 = vmatprep.subr.mxu0 0.0
  %220 = vmatpush1.msra.mxu0 0.0
  %221 = vmatprep.subr.mxu0 0.0
  %222 = vmatpush1.msra.mxu0 0.0
  %223 = vmatprep.subr.mxu0 0.0
  %224 = vmatpush1.msra.mxu0 0.0
  %225 = vmatprep.subr.mxu0 0.0
  %226 = vmatpush1.msra.mxu0 0.0
  %227 = vmatprep.subr.mxu0 0.0
  %228 = vmatpush1.msra.mxu0 0.0
  %229 = vmatprep.subr.mxu0 0.0
  %230 = vmatpush1.msra.mxu0 0.0
  %231 = vmatprep.subr.mxu0 0.0
  %232 = vmatpush1.msra.mxu0 0.0
  %233 = vmatprep.subr.mxu0 0.0
  %234 = vmatpush1.msra.mxu0 0.0
  %235 = vmatprep.subr.mxu0 0.0
  %236 = vmatpush1.msra.mxu0 0.0
  %237 = vmatprep.subr.mxu0 0.0
  %238 = vmatpush1.msra.mxu0 0.0
  %239 = vmatprep.subr.mxu0 0.0
  %240 = vmatpush1.msra.mxu0 0.0
  %241 = vmatprep.subr.mxu0 0.0
  %242 = vmatpush1.msra.mxu0 0.0
  %243 = vmatprep.subr.mxu0 0.0
  %244 = vmatpush1.msra.mxu0 0.0
  %245 = vmatprep.mubr.f32.mxu0 0.0
  %246 = vmatmul.mubr.f32.gmra.mrb[0].mxu0 %v14
  %v247 = vpop.f32.mrb[0].mxu0
  %v248 = vadd.f32 %v179, %v247
  %v249 = vpop.f32.mrb[0].mxu0
  %250 = vmatprep.mubr.f32.mxu0 0.0
  %251 = vmatmul.mubr.f32.gmra.mrb[0].mxu0 %v15
  %v252 = vpop.f32.mrb[0].mxu0
  %v253 = vadd.f32 %v179, %v252
  %v254 = vpop.f32.mrb[0].mxu0
  %255 = vmatprep.mubr.f32.mxu0 0.0
  %256 = vmatmul.mubr.f32.gmra.mrb[0].mxu0 %v16
  %v257 = vpop.f32.mrb[0].mxu0
  %v258 = vadd.f32 %v179, %v257
  %v259 = vpop.f32.mrb[0].mxu0
  %260 = vmatprep.mubr.f32.mxu0 0.0
  %261 = vmatmul.mubr.f32.gmra.mrb[0].mxu0 %v17
  %v262 = vpop.f32.mrb[0].mxu0
  %v263 = vadd.f32 %v179, %v262
  %v264 = vpop.f32.mrb[0].mxu0
  %265 = vmatprep.mubr.f32.mxu0 0.0
  %266 = vmatmul.mubr.f32.gmra.mrb[0].mxu0 %v18
  %v267 = vpop.f32.mrb[0].mxu0
  %v268 = vadd.f32 %v179, %v267
  %v269 = vpop.f32.mrb[0].mxu0
  %270 = vmatprep.mubr.f32.mxu0 0.0
  %271 = vmatmul.mubr.f32.gmra.mrb[0].mxu0 %v19
  %v272 = vpop.f32.mrb[0].mxu0
  %v273 = vadd.f32 %v179, %v272
  %v274 = vpop.f32.mrb[0].mxu0
  %275 = vmatprep.mubr.f32.mxu0 0.0
  %276 = vmatmul.mubr.f32.gmra.mrb[0].mxu0 %v20
  %v277 = vpop.f32.mrb[0].mxu0
  %v278 = vadd.f32 %v179, %v277
  %v279 = vpop.f32.mrb[0].mxu0
  %280 = vmatprep.mubr.f32.mxu0 0.0
  %281 = vmatmul.mubr.f32.gmra.mrb[0].mxu0 %v21
  %v282 = vpop.f32.mrb[0].mxu0
  %v283 = vadd.f32 %v179, %v282
  %v284 = vpop.f32.mrb[0].mxu0
  %285 = vmatprep.mubr.f32.mxu0 0.0
  %286 = vmatmul.mubr.f32.gmra.mrb[0].mxu0 %v22
  %v287 = vpop.f32.mrb[0].mxu0
  %v288 = vadd.f32 %v179, %v287
  %v289 = vpop.f32.mrb[0].mxu0
  %290 = vmatprep.mubr.f32.mxu0 0.0
  %291 = vmatmul.mubr.f32.gmra.mrb[0].mxu0 %v23
  %v292 = vpop.f32.mrb[0].mxu0
  %v293 = vadd.f32 %v179, %v292
  %v294 = vpop.f32.mrb[0].mxu0
  %295 = vmatprep.mubr.f32.mxu0 0.0
  %296 = vmatmul.mubr.f32.gmra.mrb[0].mxu0 %v24
  %v297 = vpop.f32.mrb[0].mxu0
  %v298 = vadd.f32 %v179, %v297
  %v299 = vpop.f32.mrb[0].mxu0
  %300 = vmatprep.mubr.f32.mxu0 0.0
  %301 = vmatmul.mubr.f32.gmra.mrb[0].mxu0 %v25
  %v302 = vpop.f32.mrb[0].mxu0
  %v303 = vadd.f32 %v179, %v302
  %v304 = vpop.f32.mrb[0].mxu0
  %305 = vmatprep.mubr.f32.mxu0 0.0
  %306 = vmatmul.mubr.f32.gmra.mrb[0].mxu0 %v26
  %v307 = vpop.f32.mrb[0].mxu0
  %v308 = vadd.f32 %v179, %v307
  %v309 = vpop.f32.mrb[0].mxu0
  %310 = vmatprep.mubr.f32.mxu0 0.0
  %311 = vmatmul.mubr.f32.gmra.mrb[0].mxu0 %v27
  %v312 = vpop.f32.mrb[0].mxu0
  %v313 = vadd.f32 %v179, %v312
  %v314 = vpop.f32.mrb[0].mxu0
  %315 = vmatprep.mubr.f32.mxu0 0.0
  %316 = vmatmul.mubr.f32.gmra.mrb[0].mxu0 %v28
  %v317 = vpop.f32.mrb[0].mxu0
  %v318 = vadd.f32 %v179, %v317
  %v319 = vpop.f32.mrb[0].mxu0
  %320 = vmatprep.mubr.f32.mxu0 0.0
  %321 = vmatmul.mubr.f32.gmra.mrb[0].mxu0 %v29
  %v322 = vpop.f32.mrb[0].mxu0
  %v323 = vadd.f32 %v179, %v322
  %v324 = vpop.f32.mrb[0].mxu0
  %325 = vmatprep.mubr.f32.mxu0 0.0
  %326 = vmatmul.mubr.f32.gmra.mrb[0].mxu0 %v30
  %v327 = vpop.f32.mrb[0].mxu0
  %v328 = vadd.f32 %v179, %v327
  %v329 = vpop.f32.mrb[0].mxu0
  %330 = vmatprep.mubr.f32.mxu0 0.0
  %331 = vmatmul.mubr.f32.gmra.mrb[0].mxu0 %v31
  %v332 = vpop.f32.mrb[0].mxu0
  %v333 = vadd.f32 %v179, %v332
  %v334 = vpop.f32.mrb[0].mxu0
  %335 = vmatprep.mubr.f32.mxu0 0.0
  %336 = vmatmul.mubr.f32.gmra.mrb[0].mxu0 %v32
  %v337 = vpop.f32.mrb[0].mxu0
  %v338 = vadd.f32 %v179, %v337
  %v339 = vpop.f32.mrb[0].mxu0
  %340 = vmatprep.mubr.f32.mxu0 0.0
  %341 = vmatmul.mubr.f32.gmra.mrb[0].mxu0 %v33
  %v342 = vpop.f32.mrb[0].mxu0
  %v343 = vadd.f32 %v179, %v342
  %v344 = vpop.f32.mrb[0].mxu0
  %345 = vmatprep.mubr.f32.mxu0 0.0
  %346 = vmatmul.mubr.f32.gmra.mrb[0].mxu0 %v34
  %v347 = vpop.f32.mrb[0].mxu0
  %v348 = vadd.f32 %v179, %v347
  %v349 = vpop.f32.mrb[0].mxu0
  %350 = vmatprep.mubr.f32.mxu0 0.0
  %351 = vmatmul.mubr.f32.gmra.mrb[0].mxu0 %v35
  %v352 = vpop.f32.mrb[0].mxu0
  %v353 = vadd.f32 %v179, %v352
  %v354 = vpop.f32.mrb[0].mxu0
  %355 = vmatprep.mubr.f32.mxu0 0.0
  %356 = vmatmul.mubr.f32.gmra.mrb[0].mxu0 %v36
  %v357 = vpop.f32.mrb[0].mxu0
  %v358 = vadd.f32 %v179, %v357
  %v359 = vpop.f32.mrb[0].mxu0
  %360 = vmatprep.mubr.f32.mxu0 0.0
  %361 = vmatmul.mubr.f32.gmra.mrb[0].mxu0 %v37
  %v362 = vpop.f32.mrb[0].mxu0
  %v363 = vadd.f32 %v179, %v362
  %v364 = vpop.f32.mrb[0].mxu0
  %365 = vmatprep.mubr.f32.mxu0 0.0
  %366 = vmatmul.mubr.f32.gmra.mrb[0].mxu0 %v38
  %v367 = vpop.f32.mrb[0].mxu0
  %v368 = vadd.f32 %v179, %v367
  %v369 = vpop.f32.mrb[0].mxu0
  %370 = vmatprep.mubr.f32.mxu0 0.0
  %371 = vmatmul.mubr.f32.gmra.mrb[0].mxu0 %v39
  %v372 = vpop.f32.mrb[0].mxu0
  %v373 = vadd.f32 %v179, %v372
  %v374 = vpop.f32.mrb[0].mxu0
  %375 = vmatprep.mubr.f32.mxu0 0.0
  %376 = vmatmul.mubr.f32.gmra.mrb[0].mxu0 %v40
  %v377 = vpop.f32.mrb[0].mxu0
  %v378 = vadd.f32 %v179, %v377
  %v379 = vpop.f32.mrb[0].mxu0
  %380 = vmatprep.mubr.f32.mxu0 0.0
  %381 = vmatmul.mubr.f32.gmra.mrb[0].mxu0 %v41
  %v382 = vpop.f32.mrb[0].mxu0
  %v383 = vadd.f32 %v179, %v382
  %v384 = vpop.f32.mrb[0].mxu0
  %385 = vmatprep.mubr.f32.mxu0 0.0
  %386 = vmatmul.mubr.f32.gmra.mrb[0].mxu0 %v42
  %v387 = vpop.f32.mrb[0].mxu0
  %v388 = vadd.f32 %v179, %v387
  %v389 = vpop.f32.mrb[0].mxu0
  %390 = vmatprep.mubr.f32.mxu0 0.0
  %391 = vmatmul.mubr.f32.gmra.mrb[0].mxu0 %v43
  %v392 = vpop.f32.mrb[0].mxu0
  %v393 = vadd.f32 %v179, %v392
  %v394 = vpop.f32.mrb[0].mxu0
  %395 = vmatprep.mubr.f32.mxu0 0.0
  %396 = vmatmul.mubr.f32.gmra.mrb[0].mxu0 %v44
  %v397 = vpop.f32.mrb[0].mxu0
  %v398 = vadd.f32 %v179, %v397
  %v399 = vpop.f32.mrb[0].mxu0
  %400 = vmatprep.mubr.f32.mxu0 0.0
  %401 = vmatmul.mubr.f32.gmra.mrb[0].mxu0 %v45
  %v402 = vpop.f32.mrb[0].mxu0
  %v403 = vadd.f32 %v179, %v402
  %v404 = vpop.f32.mrb[0].mxu0
  %405 = vmatprep.mubr.f32.mxu0 0.0
  %406 = vmatmul.mubr.f32.gmra.mrb[0].mxu0 %v46
  %v407 = vpop.f32.mrb[0].mxu0
  %v408 = vadd.f32 %v179, %v407
  %v409 = vpop.f32.mrb[0].mxu0
  %410 = vmatprep.mubr.f32.mxu0 0.0
  %411 = vmatmul.mubr.f32.gmra.mrb[0].mxu0 %v47
  %v412 = vpop.f32.mrb[0].mxu0
  %v413 = vadd.f32 %v179, %v412
  %v414 = vpop.f32.mrb[0].mxu0
  %415 = vmatprep.mubr.f32.mxu0 0.0
  %416 = vmatmul.mubr.f32.gmra.mrb[0].mxu0 %v48
  %v417 = vpop.f32.mrb[0].mxu0
  %v418 = vadd.f32 %v179, %v417
  %v419 = vpop.f32.mrb[0].mxu0
  %420 = vmatprep.mubr.f32.mxu0 0.0
  %421 = vmatmul.mubr.f32.gmra.mrb[0].mxu0 %v49
  %v422 = vpop.f32.mrb[0].mxu0
  %v423 = vadd.f32 %v179, %v422
  %v424 = vpop.f32.mrb[0].mxu0
  %425 = vmatprep.mubr.f32.mxu0 0.0
  %426 = vmatmul.mubr.f32.gmra.mrb[0].mxu0 %v50
  %v427 = vpop.f32.mrb[0].mxu0
  %v428 = vadd.f32 %v179, %v427
  %v429 = vpop.f32.mrb[0].mxu0
  %430 = vmatprep.mubr.f32.mxu0 0.0
  %431 = vmatmul.mubr.f32.gmra.mrb[0].mxu0 %v51
  %v432 = vpop.f32.mrb[0].mxu0
  %v433 = vadd.f32 %v179, %v432
  %v434 = vpop.f32.mrb[0].mxu0
  %435 = vmatprep.mubr.f32.mxu0 0.0
  %436 = vmatmul.mubr.f32.gmra.mrb[0].mxu0 %v52
  %v437 = vpop.f32.mrb[0].mxu0
  %v438 = vadd.f32 %v179, %v437
  %v439 = vpop.f32.mrb[0].mxu0
  %440 = vmatprep.mubr.f32.mxu0 0.0
  %441 = vmatmul.mubr.f32.gmra.mrb[0].mxu0 %v53
  %v442 = vpop.f32.mrb[0].mxu0
  %v443 = vadd.f32 %v179, %v442
  %v444 = vpop.f32.mrb[0].mxu0
  %445 = vmatprep.mubr.f32.mxu0 0.0
  %446 = vmatmul.mubr.f32.gmra.mrb[0].mxu0 %v54
  %v447 = vpop.f32.mrb[0].mxu0
  %v448 = vadd.f32 %v179, %v447
  %v449 = vpop.f32.mrb[0].mxu0
  %450 = vmatprep.mubr.f32.mxu0 0.0
  %451 = vmatmul.mubr.f32.gmra.mrb[0].mxu0 %v55
  %v452 = vpop.f32.mrb[0].mxu0
  %v453 = vadd.f32 %v179, %v452
  %v454 = vpop.f32.mrb[0].mxu0
  %455 = vmatprep.mubr.f32.mxu0 0.0
  %456 = vmatmul.mubr.f32.gmra.mrb[0].mxu0 %v56
  %v457 = vpop.f32.mrb[0].mxu0
  %v458 = vadd.f32 %v179, %v457
  %v459 = vpop.f32.mrb[0].mxu0
  %460 = vmatprep.mubr.f32.mxu0 0.0
  %461 = vmatmul.mubr.f32.gmra.mrb[0].mxu0 %v57
  %v462 = vpop.f32.mrb[0].mxu0
  %v463 = vadd.f32 %v179, %v462
  %v464 = vpop.f32.mrb[0].mxu0
  %465 = vmatprep.mubr.f32.mxu0 0.0
  %466 = vmatmul.mubr.f32.gmra.mrb[0].mxu0 %v58
  %v467 = vpop.f32.mrb[0].mxu0
  %v468 = vadd.f32 %v179, %v467
  %v469 = vpop.f32.mrb[0].mxu0
  %470 = vmatprep.mubr.f32.mxu0 0.0
  %471 = vmatmul.mubr.f32.gmra.mrb[0].mxu0 %v59
  %v472 = vpop.f32.mrb[0].mxu0
  %v473 = vadd.f32 %v179, %v472
  %v474 = vpop.f32.mrb[0].mxu0
  %475 = vmatprep.mubr.f32.mxu0 0.0
  %476 = vmatmul.mubr.f32.gmra.mrb[0].mxu0 %v60
  %v477 = vpop.f32.mrb[0].mxu0
  %v478 = vadd.f32 %v179, %v477
  %v479 = vpop.f32.mrb[0].mxu0
  %480 = vmatprep.mubr.f32.mxu0 0.0
  %481 = vmatmul.mubr.f32.gmra.mrb[0].mxu0 %v61
  %v482 = vpop.f32.mrb[0].mxu0
  %v483 = vadd.f32 %v179, %v482
  %v484 = vpop.f32.mrb[0].mxu0
  %485 = vmatprep.mubr.f32.mxu0 0.0
  %486 = vmatmul.mubr.f32.gmra.mrb[0].mxu0 %v62
  %v487 = vpop.f32.mrb[0].mxu0
  %v488 = vadd.f32 %v179, %v487
  %v489 = vpop.f32.mrb[0].mxu0
  %490 = vmatprep.mubr.f32.mxu0 0.0
  %491 = vmatmul.mubr.f32.gmra.mrb[0].mxu0 %v63
  %v492 = vpop.f32.mrb[0].mxu0
  %v493 = vadd.f32 %v179, %v492
  %v494 = vpop.f32.mrb[0].mxu0
  %495 = vmatprep.mubr.f32.mxu0 0.0
  %496 = vmatmul.mubr.f32.gmra.mrb[0].mxu0 %v64
  %v497 = vpop.f32.mrb[0].mxu0
  %v498 = vadd.f32 %v179, %v497
  %v499 = vpop.f32.mrb[0].mxu0
  %500 = vmatprep.mubr.f32.mxu0 0.0
  %501 = vmatmul.mubr.f32.gmra.mrb[0].mxu0 %v65
  %v502 = vpop.f32.mrb[0].mxu0
  %v503 = vadd.f32 %v179, %v502
  %v504 = vpop.f32.mrb[0].mxu0
  %505 = vmatprep.mubr.f32.mxu0 0.0
  %506 = vmatmul.mubr.f32.gmra.mrb[0].mxu0 %v66
  %v507 = vpop.f32.mrb[0].mxu0
  %v508 = vadd.f32 %v179, %v507
  %v509 = vpop.f32.mrb[0].mxu0
  %510 = vmatprep.mubr.f32.mxu0 0.0
  %511 = vmatmul.mubr.f32.gmra.mrb[0].mxu0 %v67
  %v512 = vpop.f32.mrb[0].mxu0
  %v513 = vadd.f32 %v179, %v512
  %v514 = vpop.f32.mrb[0].mxu0
  %515 = vmatprep.mubr.f32.mxu0 0.0
  %516 = vmatmul.mubr.f32.gmra.mrb[0].mxu0 %v68
  %v517 = vpop.f32.mrb[0].mxu0
  %v518 = vadd.f32 %v179, %v517
  %v519 = vpop.f32.mrb[0].mxu0
  %520 = vmatprep.mubr.f32.mxu0 0.0
  %521 = vmatmul.mubr.f32.gmra.mrb[0].mxu0 %v69
  %v522 = vpop.f32.mrb[0].mxu0
  %v523 = vadd.f32 %v179, %v522
  %v524 = vpop.f32.mrb[0].mxu0
  %525 = vmatprep.mubr.f32.mxu0 0.0
  %526 = vmatmul.mubr.f32.gmra.mrb[0].mxu0 %v70
  %v527 = vpop.f32.mrb[0].mxu0
  %v528 = vadd.f32 %v179, %v527
  %v529 = vpop.f32.mrb[0].mxu0
  %530 = vmatprep.mubr.f32.mxu0 0.0
  %531 = vmatmul.mubr.f32.gmra.mrb[0].mxu0 %v71
  %v532 = vpop.f32.mrb[0].mxu0
  %v533 = vadd.f32 %v179, %v532
  %v534 = vpop.f32.mrb[0].mxu0
  %535 = vmatprep.mubr.f32.mxu0 0.0
  %536 = vmatmul.mubr.f32.gmra.mrb[0].mxu0 %v72
  %v537 = vpop.f32.mrb[0].mxu0
  %v538 = vadd.f32 %v179, %v537
  %v539 = vpop.f32.mrb[0].mxu0
  %540 = vmatprep.mubr.f32.mxu0 0.0
  %541 = vmatmul.mubr.f32.gmra.mrb[0].mxu0 %v73
  %v542 = vpop.f32.mrb[0].mxu0
  %v543 = vadd.f32 %v179, %v542
  %v544 = vpop.f32.mrb[0].mxu0
  %545 = vmatprep.mubr.f32.mxu0 0.0
  %546 = vmatmul.mubr.f32.gmra.mrb[0].mxu0 %v74
  %v547 = vpop.f32.mrb[0].mxu0
  %v548 = vadd.f32 %v179, %v547
  %v549 = vpop.f32.mrb[0].mxu0
  %550 = vmatprep.mubr.f32.mxu0 0.0
  %551 = vmatmul.mubr.f32.gmra.mrb[0].mxu0 %v75
  %v552 = vpop.f32.mrb[0].mxu0
  %v553 = vadd.f32 %v179, %v552
  %v554 = vpop.f32.mrb[0].mxu0
  %555 = vmatprep.mubr.f32.mxu0 0.0
  %556 = vmatmul.mubr.f32.gmra.mrb[0].mxu0 %v76
  %v557 = vpop.f32.mrb[0].mxu0
  %v558 = vadd.f32 %v179, %v557
  %v559 = vpop.f32.mrb[0].mxu0
  %560 = vmatprep.mubr.f32.mxu0 0.0
  %561 = vmatmul.mubr.f32.gmra.mrb[0].mxu0 %v77
  %v562 = vpop.f32.mrb[0].mxu0
  %v563 = vadd.f32 %v179, %v562
  %v564 = vpop.f32.mrb[0].mxu0
  %565 = vmatprep.mubr.f32.mxu0 0.0
  %566 = vmatmul.mubr.f32.gmra.mrb[0].mxu0 %v78
  %v567 = vpop.f32.mrb[0].mxu0
  %v568 = vadd.f32 %v179, %v567
  %v569 = vpop.f32.mrb[0].mxu0
  %570 = vmatprep.mubr.f32.mxu0 0.0
  %571 = vmatmul.mubr.f32.gmra.mrb[0].mxu0 %v79
  %v572 = vpop.f32.mrb[0].mxu0
  %v573 = vadd.f32 %v179, %v572
  %v574 = vpop.f32.mrb[0].mxu0
  %575 = vmatprep.mubr.f32.mxu0 0.0
  %576 = vmatmul.mubr.f32.gmra.mrb[0].mxu0 %v80
  %v577 = vpop.f32.mrb[0].mxu0
  %v578 = vadd.f32 %v179, %v577
  %v579 = vpop.f32.mrb[0].mxu0
  %580 = vmatprep.mubr.f32.mxu0 0.0
  %581 = vmatmul.mubr.f32.gmra.mrb[0].mxu0 %v81
  %v582 = vpop.f32.mrb[0].mxu0
  %v583 = vadd.f32 %v179, %v582
  %v584 = vpop.f32.mrb[0].mxu0
  %585 = vmatprep.mubr.f32.mxu0 0.0
  %586 = vmatmul.mubr.f32.gmra.mrb[0].mxu0 %v82
  %v587 = vpop.f32.mrb[0].mxu0
  %v588 = vadd.f32 %v179, %v587
  %v589 = vpop.f32.mrb[0].mxu0
  %590 = vmatprep.mubr.f32.mxu0 0.0
  %591 = vmatmul.mubr.f32.gmra.mrb[0].mxu0 %v83
  %v592 = vpop.f32.mrb[0].mxu0
  %v593 = vadd.f32 %v179, %v592
  %v594 = vpop.f32.mrb[0].mxu0
  %595 = vmatprep.mubr.f32.mxu0 0.0
  %596 = vmatmul.mubr.f32.gmra.mrb[0].mxu0 %v84
  %v597 = vpop.f32.mrb[0].mxu0
  %v598 = vadd.f32 %v179, %v597
  %v599 = vpop.f32.mrb[0].mxu0
  %600 = vmatprep.mubr.f32.mxu0 0.0
  %601 = vmatmul.mubr.f32.gmra.mrb[0].mxu0 %v85
  %v602 = vpop.f32.mrb[0].mxu0
  %v603 = vadd.f32 %v179, %v602
  %v604 = vpop.f32.mrb[0].mxu0
  %605 = vmatprep.mubr.f32.mxu0 0.0
  %606 = vmatmul.mubr.f32.gmra.mrb[0].mxu0 %v86
  %v607 = vpop.f32.mrb[0].mxu0
  %v608 = vadd.f32 %v179, %v607
  %v609 = vpop.f32.mrb[0].mxu0
  %610 = vmatprep.mubr.f32.mxu0 0.0
  %611 = vmatmul.mubr.f32.gmra.mrb[0].mxu0 %v87
  %v612 = vpop.f32.mrb[0].mxu0
  %v613 = vadd.f32 %v179, %v612
  %v614 = vpop.f32.mrb[0].mxu0
  %615 = vmatprep.mubr.f32.mxu0 0.0
  %616 = vmatmul.mubr.f32.gmra.mrb[0].mxu0 %v88
  %v617 = vpop.f32.mrb[0].mxu0
  %v618 = vadd.f32 %v179, %v617
  %v619 = vpop.f32.mrb[0].mxu0
  %620 = vmatprep.mubr.f32.mxu0 0.0
  %621 = vmatmul.mubr.f32.gmra.mrb[0].mxu0 %v89
  %v622 = vpop.f32.mrb[0].mxu0
  %v623 = vadd.f32 %v179, %v622
  %v624 = vpop.f32.mrb[0].mxu0
  %625 = vmatprep.mubr.f32.mxu0 0.0
  %626 = vmatmul.mubr.f32.gmra.mrb[0].mxu0 %v90
  %v627 = vpop.f32.mrb[0].mxu0
  %v628 = vadd.f32 %v179, %v627
  %v629 = vpop.f32.mrb[0].mxu0
  %630 = vmatprep.mubr.f32.mxu0 0.0
  %631 = vmatmul.mubr.f32.gmra.mrb[0].mxu0 %v91
  %v632 = vpop.f32.mrb[0].mxu0
  %v633 = vadd.f32 %v179, %v632
  %v634 = vpop.f32.mrb[0].mxu0
  %635 = vmatprep.mubr.f32.mxu0 0.0
  %636 = vmatmul.mubr.f32.gmra.mrb[0].mxu0 %v92
  %v637 = vpop.f32.mrb[0].mxu0
  %v638 = vadd.f32 %v179, %v637
  %v639 = vpop.f32.mrb[0].mxu0
  %640 = vmatprep.mubr.f32.mxu0 0.0
  %641 = vmatmul.mubr.f32.gmra.mrb[0].mxu0 %v93
  %v642 = vpop.f32.mrb[0].mxu0
  %v643 = vadd.f32 %v179, %v642
  %v644 = vpop.f32.mrb[0].mxu0
  %645 = vmatprep.mubr.f32.mxu0 0.0
  %646 = vmatmul.mubr.f32.gmra.mrb[0].mxu0 %v94
  %v647 = vpop.f32.mrb[0].mxu0
  %v648 = vadd.f32 %v179, %v647
  %v649 = vpop.f32.mrb[0].mxu0
  %650 = vmatprep.mubr.f32.mxu0 0.0
  %651 = vmatmul.mubr.f32.gmra.mrb[0].mxu0 %v95
  %v652 = vpop.f32.mrb[0].mxu0
  %v653 = vadd.f32 %v179, %v652
  %v654 = vpop.f32.mrb[0].mxu0
  %655 = vmatprep.mubr.f32.mxu0 0.0
  %656 = vmatmul.mubr.f32.gmra.mrb[0].mxu0 %v96
  %v657 = vpop.f32.mrb[0].mxu0
  %v658 = vadd.f32 %v179, %v657
  %v659 = vpop.f32.mrb[0].mxu0
  %660 = vmatprep.mubr.f32.mxu0 0.0
  %661 = vmatmul.mubr.f32.gmra.mrb[0].mxu0 %v97
  %v662 = vpop.f32.mrb[0].mxu0
  %v663 = vadd.f32 %v179, %v662
  %v664 = vpop.f32.mrb[0].mxu0
  %665 = vmatprep.mubr.f32.mxu0 0.0
  %666 = vmatmul.mubr.f32.gmra.mrb[0].mxu0 %v98
  %v667 = vpop.f32.mrb[0].mxu0
  %v668 = vadd.f32 %v179, %v667
  %v669 = vpop.f32.mrb[0].mxu0
  %670 = vmatprep.mubr.f32.mxu0 0.0
  %671 = vmatmul.mubr.f32.gmra.mrb[0].mxu0 %v99
  %v672 = vpop.f32.mrb[0].mxu0
  %v673 = vadd.f32 %v179, %v672
  %v674 = vpop.f32.mrb[0].mxu0
  %675 = vmatprep.mubr.f32.mxu0 0.0
  %676 = vmatmul.mubr.f32.gmra.mrb[0].mxu0 %v100
  %v677 = vpop.f32.mrb[0].mxu0
  %v678 = vadd.f32 %v179, %v677
  %v679 = vpop.f32.mrb[0].mxu0
  %680 = vmatprep.mubr.f32.mxu0 0.0
  %681 = vmatmul.mubr.f32.gmra.mrb[0].mxu0 %v101
  %v682 = vpop.f32.mrb[0].mxu0
  %v683 = vadd.f32 %v179, %v682
  %v684 = vpop.f32.mrb[0].mxu0
  %685 = vmatprep.mubr.f32.mxu0 0.0
  %686 = vmatmul.mubr.f32.gmra.mrb[0].mxu0 %v102
  %v687 = vpop.f32.mrb[0].mxu0
  %v688 = vadd.f32 %v179, %v687
  %v689 = vpop.f32.mrb[0].mxu0
  %690 = vmatprep.mubr.f32.mxu0 0.0
  %691 = vmatmul.mubr.f32.gmra.mrb[0].mxu0 %v103
  %v692 = vpop.f32.mrb[0].mxu0
  %v693 = vadd.f32 %v179, %v692
  %v694 = vpop.f32.mrb[0].mxu0
  %695 = vmatprep.mubr.f32.mxu0 0.0
  %696 = vmatmul.mubr.f32.gmra.mrb[0].mxu0 %v104
  %v697 = vpop.f32.mrb[0].mxu0
  %v698 = vadd.f32 %v179, %v697
  %v699 = vpop.f32.mrb[0].mxu0
  %700 = vmatprep.mubr.f32.mxu0 0.0
  %701 = vmatmul.mubr.f32.gmra.mrb[0].mxu0 %v105
  %v702 = vpop.f32.mrb[0].mxu0
  %v703 = vadd.f32 %v179, %v702
  %v704 = vpop.f32.mrb[0].mxu0
  %705 = vmatprep.mubr.f32.mxu0 0.0
  %706 = vmatmul.mubr.f32.gmra.mrb[0].mxu0 %v106
  %v707 = vpop.f32.mrb[0].mxu0
  %v708 = vadd.f32 %v179, %v707
  %v709 = vpop.f32.mrb[0].mxu0
  %710 = vmatprep.mubr.f32.mxu0 0.0
  %711 = vmatmul.mubr.f32.gmra.mrb[0].mxu0 %v107
  %v712 = vpop.f32.mrb[0].mxu0
  %v713 = vadd.f32 %v179, %v712
  %v714 = vpop.f32.mrb[0].mxu0
  %715 = vmatprep.mubr.f32.mxu0 0.0
  %716 = vmatmul.mubr.f32.gmra.mrb[0].mxu0 %v108
  %v717 = vpop.f32.mrb[0].mxu0
  %v718 = vadd.f32 %v179, %v717
  %v719 = vpop.f32.mrb[0].mxu0
  %720 = vmatprep.mubr.f32.mxu0 0.0
  %721 = vmatmul.mubr.f32.gmra.mrb[0].mxu0 %v109
  %v722 = vpop.f32.mrb[0].mxu0
  %v723 = vadd.f32 %v179, %v722
  %v724 = vpop.f32.mrb[0].mxu0
  %725 = vmatprep.mubr.f32.mxu0 0.0
  %726 = vmatmul.mubr.f32.gmra.mrb[0].mxu0 %v110
  %v727 = vpop.f32.mrb[0].mxu0
  %v728 = vadd.f32 %v179, %v727
  %v729 = vpop.f32.mrb[0].mxu0
  %730 = vmatprep.mubr.f32.mxu0 0.0
  %731 = vmatmul.mubr.f32.gmra.mrb[0].mxu0 %v111
  %v732 = vpop.f32.mrb[0].mxu0
  %v733 = vadd.f32 %v179, %v732
  %v734 = vpop.f32.mrb[0].mxu0
  %735 = vmatprep.mubr.f32.mxu0 0.0
  %736 = vmatmul.mubr.f32.gmra.mrb[0].mxu0 %v112
  %v737 = vpop.f32.mrb[0].mxu0
  %v738 = vadd.f32 %v179, %v737
  %v739 = vpop.f32.mrb[0].mxu0
  %740 = vmatprep.mubr.f32.mxu0 0.0
  %741 = vmatmul.mubr.f32.gmra.mrb[0].mxu0 %v113
  %v742 = vpop.f32.mrb[0].mxu0
  %v743 = vadd.f32 %v179, %v742
  %v744 = vpop.f32.mrb[0].mxu0
  %745 = vmatprep.mubr.f32.mxu0 0.0
  %746 = vmatmul.mubr.f32.gmra.mrb[0].mxu0 %v114
  %v747 = vpop.f32.mrb[0].mxu0
  %v748 = vadd.f32 %v179, %v747
  %v749 = vpop.f32.mrb[0].mxu0
  %750 = vmatprep.mubr.f32.mxu0 0.0
  %751 = vmatmul.mubr.f32.gmra.mrb[0].mxu0 %v115
  %v752 = vpop.f32.mrb[0].mxu0
  %v753 = vadd.f32 %v179, %v752
  %v754 = vpop.f32.mrb[0].mxu0
  %755 = vmatprep.mubr.f32.mxu0 0.0
  %756 = vmatmul.mubr.f32.gmra.mrb[0].mxu0 %v116
  %v757 = vpop.f32.mrb[0].mxu0
  %v758 = vadd.f32 %v179, %v757
  %v759 = vpop.f32.mrb[0].mxu0
  %760 = vmatprep.mubr.f32.mxu0 0.0
  %761 = vmatmul.mubr.f32.gmra.mrb[0].mxu0 %v117
  %v762 = vpop.f32.mrb[0].mxu0
  %v763 = vadd.f32 %v179, %v762
  %v764 = vpop.f32.mrb[0].mxu0
  %765 = vmatprep.mubr.f32.mxu0 0.0
  %766 = vmatmul.mubr.f32.gmra.mrb[0].mxu0 %v118
  %v767 = vpop.f32.mrb[0].mxu0
  %v768 = vadd.f32 %v179, %v767
  %v769 = vpop.f32.mrb[0].mxu0
  %770 = vmatprep.mubr.f32.mxu0 0.0
  %771 = vmatmul.mubr.f32.gmra.mrb[0].mxu0 %v119
  %v772 = vpop.f32.mrb[0].mxu0
  %v773 = vadd.f32 %v179, %v772
  %v774 = vpop.f32.mrb[0].mxu0
  %775 = vmatprep.mubr.f32.mxu0 0.0
  %776 = vmatmul.mubr.f32.gmra.mrb[0].mxu0 %v120
  %v777 = vpop.f32.mrb[0].mxu0
  %v778 = vadd.f32 %v179, %v777
  %v779 = vpop.f32.mrb[0].mxu0
  %780 = vmatprep.mubr.f32.mxu0 0.0
  %781 = vmatmul.mubr.f32.gmra.mrb[0].mxu0 %v121
  %v782 = vpop.f32.mrb[0].mxu0
  %v783 = vadd.f32 %v179, %v782
  %v784 = vpop.f32.mrb[0].mxu0
  %785 = vmatprep.mubr.f32.mxu0 0.0
  %786 = vmatmul.mubr.f32.gmra.mrb[0].mxu0 %v122
  %v787 = vpop.f32.mrb[0].mxu0
  %v788 = vadd.f32 %v179, %v787
  %v789 = vpop.f32.mrb[0].mxu0
  %790 = vmatprep.mubr.f32.mxu0 0.0
  %791 = vmatmul.mubr.f32.gmra.mrb[0].mxu0 %v123
  %v792 = vpop.f32.mrb[0].mxu0
  %v793 = vadd.f32 %v179, %v792
  %v794 = vpop.f32.mrb[0].mxu0
  %795 = vmatprep.mubr.f32.mxu0 0.0
  %796 = vmatmul.mubr.f32.gmra.mrb[0].mxu0 %v124
  %v797 = vpop.f32.mrb[0].mxu0
  %v798 = vadd.f32 %v179, %v797
  %v799 = vpop.f32.mrb[0].mxu0
  %800 = vmatprep.mubr.f32.mxu0 0.0
  %801 = vmatmul.mubr.f32.gmra.mrb[0].mxu0 %v125
  %v802 = vpop.f32.mrb[0].mxu0
  %v803 = vadd.f32 %v179, %v802
  %v804 = vpop.f32.mrb[0].mxu0
  %805 = vmatprep.mubr.f32.mxu0 0.0
  %806 = vmatmul.mubr.f32.gmra.mrb[0].mxu0 %v126
  %v807 = vpop.f32.mrb[0].mxu0
  %v808 = vadd.f32 %v179, %v807
  %v809 = vpop.f32.mrb[0].mxu0
  %810 = vmatprep.mubr.f32.mxu0 0.0
  %811 = vmatmul.mubr.f32.gmra.mrb[0].mxu0 %v127
  %v812 = vpop.f32.mrb[0].mxu0
  %v813 = vadd.f32 %v179, %v812
  %v814 = vpop.f32.mrb[0].mxu0
  %815 = vmatprep.mubr.f32.mxu0 0.0
  %816 = vmatmul.mubr.f32.gmra.mrb[0].mxu0 %v128
  %v817 = vpop.f32.mrb[0].mxu0
  %v818 = vadd.f32 %v179, %v817
  %v819 = vpop.f32.mrb[0].mxu0
  %820 = vmatprep.mubr.f32.mxu0 0.0
  %821 = vmatmul.mubr.f32.gmra.mrb[0].mxu0 %v129
  %v822 = vpop.f32.mrb[0].mxu0
  %v823 = vadd.f32 %v179, %v822
  %v824 = vpop.f32.mrb[0].mxu0
  %825 = vmatprep.mubr.f32.mxu0 0.0
  %826 = vmatmul.mubr.f32.gmra.mrb[0].mxu0 %v130
  %v827 = vpop.f32.mrb[0].mxu0
  %v828 = vadd.f32 %v179, %v827
  %v829 = vpop.f32.mrb[0].mxu0
  %830 = vmatprep.mubr.f32.mxu0 0.0
  %831 = vmatmul.mubr.f32.gmra.mrb[0].mxu0 %v131
  %v832 = vpop.f32.mrb[0].mxu0
  %v833 = vadd.f32 %v179, %v832
  %v834 = vpop.f32.mrb[0].mxu0
  %835 = vmatprep.mubr.f32.mxu0 0.0
  %836 = vmatmul.mubr.f32.gmra.mrb[0].mxu0 %v132
  %v837 = vpop.f32.mrb[0].mxu0
  %v838 = vadd.f32 %v179, %v837
  %v839 = vpop.f32.mrb[0].mxu0
  %840 = vmatprep.mubr.f32.mxu0 0.0
  %841 = vmatmul.mubr.f32.gmra.mrb[0].mxu0 %v133
  %v842 = vpop.f32.mrb[0].mxu0
  %v843 = vadd.f32 %v179, %v842
  %v844 = vpop.f32.mrb[0].mxu0
  %845 = vmatprep.mubr.f32.mxu0 0.0
  %846 = vmatmul.mubr.f32.gmra.mrb[0].mxu0 %v134
  %v847 = vpop.f32.mrb[0].mxu0
  %v848 = vadd.f32 %v179, %v847
  %v849 = vpop.f32.mrb[0].mxu0
  %850 = vmatprep.mubr.f32.mxu0 0.0
  %851 = vmatmul.mubr.f32.gmra.mrb[0].mxu0 %v135
  %v852 = vpop.f32.mrb[0].mxu0
  %v853 = vadd.f32 %v179, %v852
  %v854 = vpop.f32.mrb[0].mxu0
  %855 = vmatprep.mubr.f32.mxu0 0.0
  %856 = vmatmul.mubr.f32.gmra.mrb[0].mxu0 %v136
  %v857 = vpop.f32.mrb[0].mxu0
  %v858 = vadd.f32 %v179, %v857
  %v859 = vpop.f32.mrb[0].mxu0
  %860 = vmatprep.mubr.f32.mxu0 0.0
  %861 = vmatmul.mubr.f32.gmra.mrb[0].mxu0 %v137
  %v862 = vpop.f32.mrb[0].mxu0
  %v863 = vadd.f32 %v179, %v862
  %v864 = vpop.f32.mrb[0].mxu0
  %865 = vmatprep.mubr.f32.mxu0 0.0
  %866 = vmatmul.mubr.f32.gmra.mrb[0].mxu0 %v138
  %v867 = vpop.f32.mrb[0].mxu0
  %v868 = vadd.f32 %v179, %v867
  %v869 = vpop.f32.mrb[0].mxu0
  %870 = vmatprep.mubr.f32.mxu0 0.0
  %871 = vmatmul.mubr.f32.gmra.mrb[0].mxu0 %v139
  %v872 = vpop.f32.mrb[0].mxu0
  %v873 = vadd.f32 %v179, %v872
  %v874 = vpop.f32.mrb[0].mxu0
  %875 = vmatprep.mubr.f32.mxu0 0.0
  %876 = vmatmul.mubr.f32.gmra.mrb[0].mxu0 %v140
  %v877 = vpop.f32.mrb[0].mxu0
  %v878 = vadd.f32 %v179, %v877
  %v879 = vpop.f32.mrb[0].mxu0
  %880 = vmatprep.mubr.f32.mxu0 0.0
  %881 = vmatmul.mubr.f32.gmra.mrb[0].mxu0 %v141
  %v882 = vpop.f32.mrb[0].mxu0
  %v883 = vadd.f32 %v179, %v882
  %v884 = vpop.f32.mrb[0].mxu0
  %885 = vmatprep.mubr.f32.mxu0 0.0
  %886 = vmatmul.mubr.f32.gmra.mrb[0].mxu0 %v142
  %v887 = vpop.f32.mrb[0].mxu0
  %v888 = vadd.f32 %v179, %v887
  %v889 = vpop.f32.mrb[0].mxu0
  %890 = vmatprep.mubr.f32.mxu0 0.0
  %891 = vmatmul.mubr.f32.gmra.mrb[0].mxu0 %v143
  %v892 = vpop.f32.mrb[0].mxu0
  %v893 = vadd.f32 %v179, %v892
  %v894 = vpop.f32.mrb[0].mxu0
  %895 = vmatprep.mubr.f32.mxu0 0.0
  %896 = vmatmul.mubr.f32.gmra.mrb[0].mxu0 %v144
  %v897 = vpop.f32.mrb[0].mxu0
  %v898 = vadd.f32 %v179, %v897
  %v899 = vpop.f32.mrb[0].mxu0
  %900 = vmatprep.mubr.f32.mxu0 0.0
  %901 = vmatmul.mubr.f32.gmra.mrb[0].mxu0 %v145
  %v902 = vpop.f32.mrb[0].mxu0
  %v903 = vadd.f32 %v179, %v902
  %v904 = vpop.f32.mrb[0].mxu0
  %905 = vmatprep.mubr.f32.mxu0 0.0
  %906 = vmatmul.mubr.f32.gmra.mrb[0].mxu0 %v146
  %v907 = vpop.f32.mrb[0].mxu0
  %v908 = vadd.f32 %v179, %v907
  %v909 = vpop.f32.mrb[0].mxu0
  %910 = vmatprep.mubr.f32.mxu0 0.0
  %911 = vmatmul.mubr.f32.gmra.mrb[0].mxu0 %v147
  %v912 = vpop.f32.mrb[0].mxu0
  %v913 = vadd.f32 %v179, %v912
  %v914 = vpop.f32.mrb[0].mxu0
  %915 = vmatprep.mubr.f32.mxu0 0.0
  %916 = vmatmul.mubr.f32.gmra.mrb[0].mxu0 %v148
  %v917 = vpop.f32.mrb[0].mxu0
  %v918 = vadd.f32 %v179, %v917
  %v919 = vpop.f32.mrb[0].mxu0
  %920 = vmatprep.mubr.f32.mxu0 0.0
  %921 = vmatmul.mubr.f32.gmra.mrb[0].mxu0 %v149
  %v922 = vpop.f32.mrb[0].mxu0
  %v923 = vadd.f32 %v179, %v922
  %v924 = vpop.f32.mrb[0].mxu0
  %925 = vmatprep.mubr.f32.mxu0 0.0
  %926 = vmatmul.mubr.f32.gmra.mrb[0].mxu0 %v150
  %v927 = vpop.f32.mrb[0].mxu0
  %v928 = vadd.f32 %v179, %v927
  %v929 = vpop.f32.mrb[0].mxu0
  %930 = vmatprep.mubr.f32.mxu0 0.0
  %931 = vmatmul.mubr.f32.gmra.mrb[0].mxu0 %v151
  %v932 = vpop.f32.mrb[0].mxu0
  %v933 = vadd.f32 %v179, %v932
  %v934 = vpop.f32.mrb[0].mxu0
  %935 = vmatprep.mubr.f32.mxu0 0.0
  %936 = vmatmul.mubr.f32.gmra.mrb[0].mxu0 %v152
  %v937 = vpop.f32.mrb[0].mxu0
  %v938 = vadd.f32 %v179, %v937
  %v939 = vpop.f32.mrb[0].mxu0
  %940 = vmatprep.mubr.f32.mxu0 0.0
  %941 = vmatmul.mubr.f32.gmra.mrb[0].mxu0 %v153
  %v942 = vpop.f32.mrb[0].mxu0
  %v943 = vadd.f32 %v179, %v942
  %v944 = vpop.f32.mrb[0].mxu0
  %945 = vmatprep.mubr.f32.mxu0 0.0
  %946 = vmatmul.mubr.f32.gmra.mrb[0].mxu0 %v154
  %v947 = vpop.f32.mrb[0].mxu0
  %v948 = vadd.f32 %v179, %v947
  %v949 = vpop.f32.mrb[0].mxu0
  %950 = vmatprep.mubr.f32.mxu0 0.0
  %951 = vmatmul.mubr.f32.gmra.mrb[0].mxu0 %v155
  %v952 = vpop.f32.mrb[0].mxu0
  %v953 = vadd.f32 %v179, %v952
  %v954 = vpop.f32.mrb[0].mxu0
  %955 = vmatprep.mubr.f32.mxu0 0.0
  %956 = vmatmul.mubr.f32.gmra.mrb[0].mxu0 %v156
  %v957 = vpop.f32.mrb[0].mxu0
  %v958 = vadd.f32 %v179, %v957
  %v959 = vpop.f32.mrb[0].mxu0
  %960 = vmatprep.mubr.f32.mxu0 0.0
  %961 = vmatmul.mubr.f32.gmra.mrb[0].mxu0 %v157
  %v962 = vpop.f32.mrb[0].mxu0
  %v963 = vadd.f32 %v179, %v962
  %v964 = vpop.f32.mrb[0].mxu0
  %965 = vdwg.mxu0
  %v966 = vmax.f32 %v248, %v428
  %v967 = vmax.f32 %v253, %v433
  %v968 = vmax.f32 %v258, %v438
  %v969 = vmax.f32 %v263, %v443
  %v970 = vmax.f32 %v268, %v448
  %v971 = vmax.f32 %v273, %v453
  %v972 = vmax.f32 %v278, %v458
  %v973 = vmax.f32 %v283, %v463
  %v974 = vmax.f32 %v288, %v468
  %v975 = vmax.f32 %v293, %v473
  %v976 = vmax.f32 %v298, %v478
  %v977 = vmax.f32 %v303, %v483
  %v978 = vmax.f32 %v308, %v488
  %v979 = vmax.f32 %v313, %v493
  %v980 = vmax.f32 %v318, %v498
  %v981 = vmax.f32 %v323, %v503
  %v982 = vmax.f32 %v328, %v508
  %v983 = vmax.f32 %v333, %v513
  %v984 = vmax.f32 %v338, %v518
  %v985 = vmax.f32 %v343, %v523
  %v986 = vmax.f32 %v348, %v528
  %v987 = vmax.f32 %v353, %v533
  %v988 = vmax.f32 %v358, %v538
  %v989 = vmax.f32 %v363, %v543
  %v990 = vmax.f32 %v368, %v548
  %v991 = vmax.f32 %v373, %v553
  %v992 = vmax.f32 %v378, %v558
  %v993 = vmax.f32 %v383, %v563
  %v994 = vmax.f32 %v388, %v568
  %v995 = vmax.f32 %v393, %v573
  %v996 = vmax.f32 %v398, %v578
  %v997 = vmax.f32 %v403, %v583
  %v998 = vmax.f32 %v408, %v588
  %v999 = vmax.f32 %v413, %v593
  %v1000 = vmax.f32 %v418, %v598
  %v1001 = vmax.f32 %v423, %v603
  %v1002 = vmax.f32 %v608, %v788
  %v1003 = vmax.f32 %v613, %v793
  %v1004 = vmax.f32 %v618, %v798
  %v1005 = vmax.f32 %v623, %v803
  %v1006 = vmax.f32 %v628, %v808
  %v1007 = vmax.f32 %v633, %v813
  %v1008 = vmax.f32 %v638, %v818
  %v1009 = vmax.f32 %v643, %v823
  %v1010 = vmax.f32 %v648, %v828
  %v1011 = vmax.f32 %v653, %v833
  %v1012 = vmax.f32 %v658, %v838
  %v1013 = vmax.f32 %v663, %v843
  %v1014 = vmax.f32 %v668, %v848
  %v1015 = vmax.f32 %v673, %v853
  %v1016 = vmax.f32 %v678, %v858
  %v1017 = vmax.f32 %v683, %v863
  %v1018 = vmax.f32 %v688, %v868
  %v1019 = vmax.f32 %v693, %v873
  %v1020 = vmax.f32 %v698, %v878
  %v1021 = vmax.f32 %v703, %v883
  %v1022 = vmax.f32 %v708, %v888
  %v1023 = vmax.f32 %v713, %v893
  %v1024 = vmax.f32 %v718, %v898
  %v1025 = vmax.f32 %v723, %v903
  %v1026 = vmax.f32 %v728, %v908
  %v1027 = vmax.f32 %v733, %v913
  %v1028 = vmax.f32 %v738, %v918
  %v1029 = vmax.f32 %v743, %v923
  %v1030 = vmax.f32 %v748, %v928
  %v1031 = vmax.f32 %v753, %v933
  %v1032 = vmax.f32 %v758, %v938
  %v1033 = vmax.f32 %v763, %v943
  %v1034 = vmax.f32 %v768, %v948
  %v1035 = vmax.f32 %v773, %v953
  %v1036 = vmax.f32 %v778, %v958
  %v1037 = vmax.f32 %v783, %v963
  %v1038 = vmax.f32 %v966, %v1002
  %v1039 = vmax.f32 %v967, %v1003
  %v1040 = vmax.f32 %v968, %v1004
  %v1041 = vmax.f32 %v969, %v1005
  %v1042 = vmax.f32 %v970, %v1006
  %v1043 = vmax.f32 %v971, %v1007
  %v1044 = vmax.f32 %v972, %v1008
  %v1045 = vmax.f32 %v973, %v1009
  %v1046 = vmax.f32 %v974, %v1010
  %v1047 = vmax.f32 %v975, %v1011
  %v1048 = vmax.f32 %v976, %v1012
  %v1049 = vmax.f32 %v977, %v1013
  %v1050 = vmax.f32 %v978, %v1014
  %v1051 = vmax.f32 %v979, %v1015
  %v1052 = vmax.f32 %v980, %v1016
  %v1053 = vmax.f32 %v981, %v1017
  %v1054 = vmax.f32 %v982, %v1018
  %v1055 = vmax.f32 %v983, %v1019
  %v1056 = vmax.f32 %v984, %v1020
  %v1057 = vmax.f32 %v985, %v1021
  %v1058 = vmax.f32 %v986, %v1022
  %v1059 = vmax.f32 %v987, %v1023
  %v1060 = vmax.f32 %v988, %v1024
  %v1061 = vmax.f32 %v989, %v1025
  %v1062 = vmax.f32 %v990, %v1026
  %v1063 = vmax.f32 %v991, %v1027
  %v1064 = vmax.f32 %v992, %v1028
  %v1065 = vmax.f32 %v993, %v1029
  %v1066 = vmax.f32 %v994, %v1030
  %v1067 = vmax.f32 %v995, %v1031
  %v1068 = vmax.f32 %v996, %v1032
  %v1069 = vmax.f32 %v997, %v1033
  %v1070 = vmax.f32 %v998, %v1034
  %v1071 = vmax.f32 %v999, %v1035
  %v1072 = vmax.f32 %v1000, %v1036
  %v1073 = vmax.f32 %v1001, %v1037
  %v1074 = vmax.f32 %v1038, 0.0
  %v1075 = vmax.f32 %v1039, 0.0
  %v1076 = vmax.f32 %v1040, 0.0
  %v1077 = vmax.f32 %v1041, 0.0
  %v1078 = vmax.f32 %v1042, 0.0
  %v1079 = vmax.f32 %v1043, 0.0
  %v1080 = vmax.f32 %v1044, 0.0
  %v1081 = vmax.f32 %v1045, 0.0
  %v1082 = vmax.f32 %v1046, 0.0
  %v1083 = vmax.f32 %v1047, 0.0
  %v1084 = vmax.f32 %v1048, 0.0
  %v1085 = vmax.f32 %v1049, 0.0
  %v1086 = vmax.f32 %v1050, 0.0
  %v1087 = vmax.f32 %v1051, 0.0
  %v1088 = vmax.f32 %v1052, 0.0
  %v1089 = vmax.f32 %v1053, 0.0
  %v1090 = vmax.f32 %v1054, 0.0
  %v1091 = vmax.f32 %v1055, 0.0
  %v1092 = vmax.f32 %v1056, 0.0
  %v1093 = vmax.f32 %v1057, 0.0
  %v1094 = vmax.f32 %v1058, 0.0
  %v1095 = vmax.f32 %v1059, 0.0
  %v1096 = vmax.f32 %v1060, 0.0
  %v1097 = vmax.f32 %v1061, 0.0
  %v1098 = vmax.f32 %v1062, 0.0
  %v1099 = vmax.f32 %v1063, 0.0
  %v1100 = vmax.f32 %v1064, 0.0
  %v1101 = vmax.f32 %v1065, 0.0
  %v1102 = vmax.f32 %v1066, 0.0
  %v1103 = vmax.f32 %v1067, 0.0
  %v1104 = vmax.f32 %v1068, 0.0
  %v1105 = vmax.f32 %v1069, 0.0
  %v1106 = vmax.f32 %v1070, 0.0
  %v1107 = vmax.f32 %v1071, 0.0
  %v1108 = vmax.f32 %v1072, 0.0
  %v1109 = vmax.f32 %v1073, 0.0
  %1110 = vst [vmem:[%s3] sm:$0xff] %v1074
  %1111 = vst [vmem:[%s3 + $0x8] sm:$0xff] %v1075
  %1112 = vst [vmem:[%s3 + $0x10] sm:$0xff] %v1076
  %1113 = vst [vmem:[%s3 + $0x18] sm:$0xff] %v1077
  %1114 = vst [vmem:[%s3 + $0x20] sm:$0xff] %v1078
  %1115 = vst [vmem:[%s3 + $0x28] sm:$0xff] %v1079
  %1116 = vst [vmem:[%s3 + $0x30] sm:$0xff] %v1080
  %1117 = vst [vmem:[%s3 + $0x38] sm:$0xff] %v1081
  %1118 = vst [vmem:[%s3 + $0x40] sm:$0xff] %v1082
  %1119 = vst [vmem:[%s3 + $0x48] sm:$0xff] %v1083
  %1120 = vst [vmem:[%s3 + $0x50] sm:$0xff] %v1084
  %1121 = vst [vmem:[%s3 + $0x58] sm:$0xff] %v1085
  %1122 = vst [vmem:[%s3 + $0x60] sm:$0xff] %v1086
  %1123 = vst [vmem:[%s3 + $0x68] sm:$0xff] %v1087
  %1124 = vst [vmem:[%s3 + $0x70] sm:$0xff] %v1088
  %1125 = vst [vmem:[%s3 + $0x78] sm:$0xff] %v1089
  %1126 = vst [vmem:[%s3 + $0x80] sm:$0xff] %v1090
  %1127 = vst [vmem:[%s3 + $0x88] sm:$0xff] %v1091
  %1128 = vst [vmem:[%s3 + $0x90] sm:$0xff] %v1092
  %1129 = vst [vmem:[%s3 + $0x98] sm:$0xff] %v1093
  %1130 = vst [vmem:[%s3 + $0xa0] sm:$0xff] %v1094
  %1131 = vst [vmem:[%s3 + $0xa8] sm:$0xff] %v1095
  %1132 = vst [vmem:[%s3 + $0xb0] sm:$0xff] %v1096
  %1133 = vst [vmem:[%s3 + $0xb8] sm:$0xff] %v1097
  %1134 = vst [vmem:[%s3 + $0xc0] sm:$0xff] %v1098
  %1135 = vst [vmem:[%s3 + $0xc8] sm:$0xff] %v1099
  %1136 = vst [vmem:[%s3 + $0xd0] sm:$0xff] %v1100
  %1137 = vst [vmem:[%s3 + $0xd8] sm:$0xff] %v1101
  %1138 = vst [vmem:[%s3 + $0xe0] sm:$0xff] %v1102
  %1139 = vst [vmem:[%s3 + $0xe8] sm:$0xff] %v1103
  %1140 = vst [vmem:[%s3 + $0xf0] sm:$0xff] %v1104
  %1141 = vst [vmem:[%s3 + $0xf8] sm:$0xff] %v1105
  %1142 = vst [vmem:[%s3 + $0x100] sm:$0xff] %v1106
  %1143 = vst [vmem:[%s3 + $0x108] sm:$0xff] %v1107
  %1144 = vst [vmem:[%s3 + $0x110] sm:$0xff] %v1108
  %1145 = vst [vmem:[%s3 + $0x118] sm:$0xff] %v1109
  // Predicated region
  $region14: #{net_forward.3} parent=0 // pred_check
    _
  $region15: #{net_forward.3} parent=0 // pred_check_branch
    %1147 = sbr.rel (0) target = $region17
  $region16: #{net_forward.3} parent=0 // pred_region
    _
  $region17: #{net_forward.3} parent=0 // pred_fallthru
    _
  // Predicated region
  $region18: #{net_forward.3} parent=0 // pred_check
    _
  $region19: #{net_forward.3} parent=0 // pred_check_branch
    %1149 = sbr.rel (0) target = $region21
  $region20: #{net_forward.3} parent=0 // pred_region
    _
  $region21: #{net_forward.3} parent=0 // pred_fallthru
    _

// kernel: net_forward.4
$region0: #{net_forward.4}
  #allocation0 [shape = 'u32[]', space=smem, size = 0x4, offset = 0x4, fixed_abs, tag = 'smem constant byte address 0x4 - core index']
  #allocation1 [shape = 'u32[144,128]{1,0:T(1,128)}', space=vmem, size = 0x12000, scoped, tag = 'internal scratch']
  %s0 = inlined_call_operand.vmem [shape: f32[128,3200], index: 0, kind: input, shape index: {}]
  %s1 = inlined_call_operand.vmem [shape: f32[3200,128], index: 1, kind: input, shape index: {}]
  %s2 = inlined_call_operand.vmem [shape: f32[1,128], index: 2, kind: input, shape index: {}]
  %s3 = inlined_call_operand.vmem [shape: f32[32,128], index: 3, kind: output, shape index: {}]
  %s4 = sld [smem:[#allocation0]]
  $region22: #{net_forward.4} parent=0
    _
  %s6 = ssub.s32 1, %s4
  %s7 = scalar_select 0, %s6, %s4
  // Predicated region
  $region2: #{net_forward.4} parent=0 // pred_check
    _
  $region3: #{net_forward.4} parent=0 // pred_check_branch
    %9 = sbr.rel (0) target = $region5
  $region4: #{net_forward.4} parent=0 // pred_region
    _
  $region5: #{net_forward.4} parent=0 // pred_fallthru
    _
  // Predicated region
  $region6: #{net_forward.4} parent=0 // pred_check
    _
  $region7: #{net_forward.4} parent=0 // pred_check_branch
    %11 = sbr.rel (0) target = $region9
  $region8: #{net_forward.4} parent=0 // pred_region
    _
  $region9: #{net_forward.4} parent=0 // pred_fallthru
    _
  // Predicated region
  $region10: #{net_forward.4} parent=0 // pred_check
    _
  $region11: #{net_forward.4} parent=0 // pred_check_branch
    %13 = sbr.rel (0) target = $region13
  $region12: #{net_forward.4} parent=0 // pred_region
    _
  $region13: #{net_forward.4} parent=0 // pred_fallthru
    _
  %v14 = vld [vmem:[%s0] sm:$0xff]
  %v15 = vld [vmem:[%s0 + $0x8] sm:$0xff]
  %v16 = vld [vmem:[%s0 + $0x10] sm:$0xff]
  %v17 = vld [vmem:[%s0 + $0x18] sm:$0xff]
  %v18 = vld [vmem:[%s0 + $0x20] sm:$0xff]
  %v19 = vld [vmem:[%s0 + $0x28] sm:$0xff]
  %v20 = vld [vmem:[%s0 + $0x30] sm:$0xff]
  %v21 = vld [vmem:[%s0 + $0x38] sm:$0xff]
  %v22 = vld [vmem:[%s0 + $0x40] sm:$0xff]
  %v23 = vld [vmem:[%s0 + $0x48] sm:$0xff]
  %v24 = vld [vmem:[%s0 + $0x50] sm:$0xff]
  %v25 = vld [vmem:[%s0 + $0x58] sm:$0xff]
  %v26 = vld [vmem:[%s0 + $0x60] sm:$0xff]
  %v27 = vld [vmem:[%s0 + $0x68] sm:$0xff]
  %v28 = vld [vmem:[%s0 + $0x70] sm:$0xff]
  %v29 = vld [vmem:[%s0 + $0x78] sm:$0xff]
  %v30 = vld [vmem:[%s0 + $0x80] sm:$0xff]
  %v31 = vld [vmem:[%s0 + $0x88] sm:$0xff]
  %v32 = vld [vmem:[%s0 + $0x90] sm:$0xff]
  %v33 = vld [vmem:[%s0 + $0x98] sm:$0xff]
  %v34 = vld [vmem:[%s0 + $0xa0] sm:$0xff]
  %v35 = vld [vmem:[%s0 + $0xa8] sm:$0xff]
  %v36 = vld [vmem:[%s0 + $0xb0] sm:$0xff]
  %v37 = vld [vmem:[%s0 + $0xb8] sm:$0xff]
  %v38 = vld [vmem:[%s0 + $0xc0] sm:$0xff]
  %v39 = vld [vmem:[%s0 + $0xc8] sm:$0xff]
  %v40 = vld [vmem:[%s0 + $0xd0] sm:$0xff]
  %v41 = vld [vmem:[%s0 + $0xd8] sm:$0xff]
  %v42 = vld [vmem:[%s0 + $0xe0] sm:$0xff]
  %v43 = vld [vmem:[%s0 + $0xe8] sm:$0xff]
  %v44 = vld [vmem:[%s0 + $0xf0] sm:$0xff]
  %v45 = vld [vmem:[%s0 + $0xf8] sm:$0xff]
  %v46 = vld [vmem:[%s0 + $0x100] sm:$0xff]
  %v47 = vld [vmem:[%s0 + $0x108] sm:$0xff]
  %v48 = vld [vmem:[%s0 + $0x110] sm:$0xff]
  %v49 = vld [vmem:[%s0 + $0x118] sm:$0xff]
  %v50 = vld [vmem:[%s0 + $0x120] sm:$0xff]
  %v51 = vld [vmem:[%s0 + $0x128] sm:$0xff]
  %v52 = vld [vmem:[%s0 + $0x130] sm:$0xff]
  %v53 = vld [vmem:[%s0 + $0x138] sm:$0xff]
  %v54 = vld [vmem:[%s0 + $0x140] sm:$0xff]
  %v55 = vld [vmem:[%s0 + $0x148] sm:$0xff]
  %v56 = vld [vmem:[%s0 + $0x150] sm:$0xff]
  %v57 = vld [vmem:[%s0 + $0x158] sm:$0xff]
  %v58 = vld [vmem:[%s0 + $0x160] sm:$0xff]
  %v59 = vld [vmem:[%s0 + $0x168] sm:$0xff]
  %v60 = vld [vmem:[%s0 + $0x170] sm:$0xff]
  %v61 = vld [vmem:[%s0 + $0x178] sm:$0xff]
  %v62 = vld [vmem:[%s0 + $0x180] sm:$0xff]
  %v63 = vld [vmem:[%s0 + $0x188] sm:$0xff]
  %v64 = vld [vmem:[%s0 + $0x190] sm:$0xff]
  %v65 = vld [vmem:[%s0 + $0x198] sm:$0xff]
  %v66 = vld [vmem:[%s0 + $0x1a0] sm:$0xff]
  %v67 = vld [vmem:[%s0 + $0x1a8] sm:$0xff]
  %v68 = vld [vmem:[%s0 + $0x1b0] sm:$0xff]
  %v69 = vld [vmem:[%s0 + $0x1b8] sm:$0xff]
  %v70 = vld [vmem:[%s0 + $0x1c0] sm:$0xff]
  %v71 = vld [vmem:[%s0 + $0x1c8] sm:$0xff]
  %v72 = vld [vmem:[%s0 + $0x1d0] sm:$0xff]
  %v73 = vld [vmem:[%s0 + $0x1d8] sm:$0xff]
  %v74 = vld [vmem:[%s0 + $0x1e0] sm:$0xff]
  %v75 = vld [vmem:[%s0 + $0x1e8] sm:$0xff]
  %v76 = vld [vmem:[%s0 + $0x1f0] sm:$0xff]
  %v77 = vld [vmem:[%s0 + $0x1f8] sm:$0xff]
  %v78 = vld [vmem:[%s0 + $0x200] sm:$0xff]
  %v79 = vld [vmem:[%s0 + $0x208] sm:$0xff]
  %v80 = vld [vmem:[%s0 + $0x210] sm:$0xff]
  %v81 = vld [vmem:[%s0 + $0x218] sm:$0xff]
  %v82 = vld [vmem:[%s0 + $0x220] sm:$0xff]
  %v83 = vld [vmem:[%s0 + $0x228] sm:$0xff]
  %v84 = vld [vmem:[%s0 + $0x230] sm:$0xff]
  %v85 = vld [vmem:[%s0 + $0x238] sm:$0xff]
  %v86 = vld [vmem:[%s0 + $0x240] sm:$0xff]
  %v87 = vld [vmem:[%s0 + $0x248] sm:$0xff]
  %v88 = vld [vmem:[%s0 + $0x250] sm:$0xff]
  %v89 = vld [vmem:[%s0 + $0x258] sm:$0xff]
  %v90 = vld [vmem:[%s0 + $0x260] sm:$0xff]
  %v91 = vld [vmem:[%s0 + $0x268] sm:$0xff]
  %v92 = vld [vmem:[%s0 + $0x270] sm:$0xff]
  %v93 = vld [vmem:[%s0 + $0x278] sm:$0xff]
  %v94 = vld [vmem:[%s0 + $0x280] sm:$0xff]
  %v95 = vld [vmem:[%s0 + $0x288] sm:$0xff]
  %v96 = vld [vmem:[%s0 + $0x290] sm:$0xff]
  %v97 = vld [vmem:[%s0 + $0x298] sm:$0xff]
  %v98 = vld [vmem:[%s0 + $0x2a0] sm:$0xff]
  %v99 = vld [vmem:[%s0 + $0x2a8] sm:$0xff]
  %v100 = vld [vmem:[%s0 + $0x2b0] sm:$0xff]
  %v101 = vld [vmem:[%s0 + $0x2b8] sm:$0xff]
  %v102 = vld [vmem:[%s0 + $0x2c0] sm:$0xff]
  %v103 = vld [vmem:[%s0 + $0x2c8] sm:$0xff]
  %v104 = vld [vmem:[%s0 + $0x2d0] sm:$0xff]
  %v105 = vld [vmem:[%s0 + $0x2d8] sm:$0xff]
  %v106 = vld [vmem:[%s0 + $0x2e0] sm:$0xff]
  %v107 = vld [vmem:[%s0 + $0x2e8] sm:$0xff]
  %v108 = vld [vmem:[%s0 + $0x2f0] sm:$0xff]
  %v109 = vld [vmem:[%s0 + $0x2f8] sm:$0xff]
  %v110 = vld [vmem:[%s0 + $0x300] sm:$0xff]
  %v111 = vld [vmem:[%s0 + $0x308] sm:$0xff]
  %v112 = vld [vmem:[%s0 + $0x310] sm:$0xff]
  %v113 = vld [vmem:[%s0 + $0x318] sm:$0xff]
  %v114 = vld [vmem:[%s0 + $0x320] sm:$0xff]
  %v115 = vld [vmem:[%s0 + $0x328] sm:$0xff]
  %v116 = vld [vmem:[%s0 + $0x330] sm:$0xff]
  %v117 = vld [vmem:[%s0 + $0x338] sm:$0xff]
  %v118 = vld [vmem:[%s0 + $0x340] sm:$0xff]
  %v119 = vld [vmem:[%s0 + $0x348] sm:$0xff]
  %v120 = vld [vmem:[%s0 + $0x350] sm:$0xff]
  %v121 = vld [vmem:[%s0 + $0x358] sm:$0xff]
  %v122 = vld [vmem:[%s0 + $0x360] sm:$0xff]
  %v123 = vld [vmem:[%s0 + $0x368] sm:$0xff]
  %v124 = vld [vmem:[%s0 + $0x370] sm:$0xff]
  %v125 = vld [vmem:[%s0 + $0x378] sm:$0xff]
  %v126 = vld [vmem:[%s0 + $0x380] sm:$0xff]
  %v127 = vld [vmem:[%s0 + $0x388] sm:$0xff]
  %v128 = vld [vmem:[%s0 + $0x390] sm:$0xff]
  %v129 = vld [vmem:[%s0 + $0x398] sm:$0xff]
  %v130 = vld [vmem:[%s0 + $0x3a0] sm:$0xff]
  %v131 = vld [vmem:[%s0 + $0x3a8] sm:$0xff]
  %v132 = vld [vmem:[%s0 + $0x3b0] sm:$0xff]
  %v133 = vld [vmem:[%s0 + $0x3b8] sm:$0xff]
  %v134 = vld [vmem:[%s0 + $0x3c0] sm:$0xff]
  %v135 = vld [vmem:[%s0 + $0x3c8] sm:$0xff]
  %v136 = vld [vmem:[%s0 + $0x3d0] sm:$0xff]
  %v137 = vld [vmem:[%s0 + $0x3d8] sm:$0xff]
  %v138 = vld [vmem:[%s0 + $0x3e0] sm:$0xff]
  %v139 = vld [vmem:[%s0 + $0x3e8] sm:$0xff]
  %v140 = vld [vmem:[%s0 + $0x3f0] sm:$0xff]
  %v141 = vld [vmem:[%s0 + $0x3f8] sm:$0xff]
  %v142 = vld [vmem:[%s0 + $0x400] sm:$0xff]
  %v143 = vld [vmem:[%s0 + $0x408] sm:$0xff]
  %v144 = vld [vmem:[%s0 + $0x410] sm:$0xff]
  %v145 = vld [vmem:[%s0 + $0x418] sm:$0xff]
  %v146 = vld [vmem:[%s0 + $0x420] sm:$0xff]
  %v147 = vld [vmem:[%s0 + $0x428] sm:$0xff]
  %v148 = vld [vmem:[%s0 + $0x430] sm:$0xff]
  %v149 = vld [vmem:[%s0 + $0x438] sm:$0xff]
  %v150 = vld [vmem:[%s0 + $0x440] sm:$0xff]
  %v151 = vld [vmem:[%s0 + $0x448] sm:$0xff]
  %v152 = vld [vmem:[%s0 + $0x450] sm:$0xff]
  %v153 = vld [vmem:[%s0 + $0x458] sm:$0xff]
  %v154 = vld [vmem:[%s0 + $0x460] sm:$0xff]
  %v155 = vld [vmem:[%s0 + $0x468] sm:$0xff]
  %v156 = vld [vmem:[%s0 + $0x470] sm:$0xff]
  %v157 = vld [vmem:[%s0 + $0x478] sm:$0xff]
  %v158 = vld [vmem:[%s0 + $0x480] sm:$0xff]
  %v159 = vld [vmem:[%s0 + $0x488] sm:$0xff]
  %v160 = vld [vmem:[%s0 + $0x490] sm:$0xff]
  %v161 = vld [vmem:[%s0 + $0x498] sm:$0xff]
  %v162 = vld [vmem:[%s0 + $0x4a0] sm:$0xff]
  %v163 = vld [vmem:[%s0 + $0x4a8] sm:$0xff]
  %v164 = vld [vmem:[%s0 + $0x4b0] sm:$0xff]
  %v165 = vld [vmem:[%s0 + $0x4b8] sm:$0xff]
  %v166 = vld [vmem:[%s0 + $0x4c0] sm:$0xff]
  %v167 = vld [vmem:[%s0 + $0x4c8] sm:$0xff]
  %v168 = vld [vmem:[%s0 + $0x4d0] sm:$0xff]
  %v169 = vld [vmem:[%s0 + $0x4d8] sm:$0xff]
  %v170 = vld [vmem:[%s0 + $0x4e0] sm:$0xff]
  %v171 = vld [vmem:[%s0 + $0x4e8] sm:$0xff]
  %v172 = vld [vmem:[%s0 + $0x4f0] sm:$0xff]
  %v173 = vld [vmem:[%s0 + $0x4f8] sm:$0xff]
  %v174 = vld [vmem:[%s0 + $0x500] sm:$0xff]
  %v175 = vld [vmem:[%s0 + $0x508] sm:$0xff]
  %v176 = vld [vmem:[%s0 + $0x510] sm:$0xff]
  %v177 = vld [vmem:[%s0 + $0x518] sm:$0xff]
  %v178 = vld [vmem:[%s0 + $0x520] sm:$0xff]
  %v179 = vld [vmem:[%s0 + $0x528] sm:$0xff]
  %v180 = vld [vmem:[%s0 + $0x530] sm:$0xff]
  %v181 = vld [vmem:[%s0 + $0x538] sm:$0xff]
  %v182 = vld [vmem:[%s0 + $0x540] sm:$0xff]
  %v183 = vld [vmem:[%s0 + $0x548] sm:$0xff]
  %v184 = vld [vmem:[%s0 + $0x550] sm:$0xff]
  %v185 = vld [vmem:[%s0 + $0x558] sm:$0xff]
  %v186 = vld [vmem:[%s0 + $0x560] sm:$0xff]
  %v187 = vld [vmem:[%s0 + $0x568] sm:$0xff]
  %v188 = vld [vmem:[%s0 + $0x570] sm:$0xff]
  %v189 = vld [vmem:[%s0 + $0x578] sm:$0xff]
  %v190 = vld [vmem:[%s0 + $0x580] sm:$0xff]
  %v191 = vld [vmem:[%s0 + $0x588] sm:$0xff]
  %v192 = vld [vmem:[%s0 + $0x590] sm:$0xff]
  %v193 = vld [vmem:[%s0 + $0x598] sm:$0xff]
  %v194 = vld [vmem:[%s0 + $0x5a0] sm:$0xff]
  %v195 = vld [vmem:[%s0 + $0x5a8] sm:$0xff]
  %v196 = vld [vmem:[%s0 + $0x5b0] sm:$0xff]
  %v197 = vld [vmem:[%s0 + $0x5b8] sm:$0xff]
  %v198 = vld [vmem:[%s0 + $0x5c0] sm:$0xff]
  %v199 = vld [vmem:[%s0 + $0x5c8] sm:$0xff]
  %v200 = vld [vmem:[%s0 + $0x5d0] sm:$0xff]
  %v201 = vld [vmem:[%s0 + $0x5d8] sm:$0xff]
  %v202 = vld [vmem:[%s0 + $0x5e0] sm:$0xff]
  %v203 = vld [vmem:[%s0 + $0x5e8] sm:$0xff]
  %v204 = vld [vmem:[%s0 + $0x5f0] sm:$0xff]
  %v205 = vld [vmem:[%s0 + $0x5f8] sm:$0xff]
  %v206 = vld [vmem:[%s0 + $0x600] sm:$0xff]
  %v207 = vld [vmem:[%s0 + $0x608] sm:$0xff]
  %v208 = vld [vmem:[%s0 + $0x610] sm:$0xff]
  %v209 = vld [vmem:[%s0 + $0x618] sm:$0xff]
  %v210 = vld [vmem:[%s0 + $0x620] sm:$0xff]
  %v211 = vld [vmem:[%s0 + $0x628] sm:$0xff]
  %v212 = vld [vmem:[%s0 + $0x630] sm:$0xff]
  %v213 = vld [vmem:[%s0 + $0x638] sm:$0xff]
  %v214 = vld [vmem:[%s0 + $0x640] sm:$0xff]
  %v215 = vld [vmem:[%s0 + $0x648] sm:$0xff]
  %v216 = vld [vmem:[%s0 + $0x650] sm:$0xff]
  %v217 = vld [vmem:[%s0 + $0x658] sm:$0xff]
  %v218 = vld [vmem:[%s0 + $0x660] sm:$0xff]
  %v219 = vld [vmem:[%s0 + $0x668] sm:$0xff]
  %v220 = vld [vmem:[%s0 + $0x670] sm:$0xff]
  %v221 = vld [vmem:[%s0 + $0x678] sm:$0xff]
  %v222 = vld [vmem:[%s0 + $0x680] sm:$0xff]
  %v223 = vld [vmem:[%s0 + $0x688] sm:$0xff]
  %v224 = vld [vmem:[%s0 + $0x690] sm:$0xff]
  %v225 = vld [vmem:[%s0 + $0x698] sm:$0xff]
  %v226 = vld [vmem:[%s0 + $0x6a0] sm:$0xff]
  %v227 = vld [vmem:[%s0 + $0x6a8] sm:$0xff]
  %v228 = vld [vmem:[%s0 + $0x6b0] sm:$0xff]
  %v229 = vld [vmem:[%s0 + $0x6b8] sm:$0xff]
  %v230 = vld [vmem:[%s0 + $0x6c0] sm:$0xff]
  %v231 = vld [vmem:[%s0 + $0x6c8] sm:$0xff]
  %v232 = vld [vmem:[%s0 + $0x6d0] sm:$0xff]
  %v233 = vld [vmem:[%s0 + $0x6d8] sm:$0xff]
  %v234 = vld [vmem:[%s0 + $0x6e0] sm:$0xff]
  %v235 = vld [vmem:[%s0 + $0x6e8] sm:$0xff]
  %v236 = vld [vmem:[%s0 + $0x6f0] sm:$0xff]
  %v237 = vld [vmem:[%s0 + $0x6f8] sm:$0xff]
  %v238 = vld [vmem:[%s0 + $0x700] sm:$0xff]
  %v239 = vld [vmem:[%s0 + $0x708] sm:$0xff]
  %v240 = vld [vmem:[%s0 + $0x710] sm:$0xff]
  %v241 = vld [vmem:[%s0 + $0x718] sm:$0xff]
  %v242 = vld [vmem:[%s0 + $0x720] sm:$0xff]
  %v243 = vld [vmem:[%s0 + $0x728] sm:$0xff]
  %v244 = vld [vmem:[%s0 + $0x730] sm:$0xff]
  %v245 = vld [vmem:[%s0 + $0x738] sm:$0xff]
  %v246 = vld [vmem:[%s0 + $0x740] sm:$0xff]
  %v247 = vld [vmem:[%s0 + $0x748] sm:$0xff]
  %v248 = vld [vmem:[%s0 + $0x750] sm:$0xff]
  %v249 = vld [vmem:[%s0 + $0x758] sm:$0xff]
  %v250 = vld [vmem:[%s0 + $0x760] sm:$0xff]
  %v251 = vld [vmem:[%s0 + $0x768] sm:$0xff]
  %v252 = vld [vmem:[%s0 + $0x770] sm:$0xff]
  %v253 = vld [vmem:[%s0 + $0x778] sm:$0xff]
  %v254 = vld [vmem:[%s0 + $0x780] sm:$0xff]
  %v255 = vld [vmem:[%s0 + $0x788] sm:$0xff]
  %v256 = vld [vmem:[%s0 + $0x790] sm:$0xff]
  %v257 = vld [vmem:[%s0 + $0x798] sm:$0xff]
  %v258 = vld [vmem:[%s0 + $0x7a0] sm:$0xff]
  %v259 = vld [vmem:[%s0 + $0x7a8] sm:$0xff]
  %v260 = vld [vmem:[%s0 + $0x7b0] sm:$0xff]
  %v261 = vld [vmem:[%s0 + $0x7b8] sm:$0xff]
  %v262 = vld [vmem:[%s0 + $0x7c0] sm:$0xff]
  %v263 = vld [vmem:[%s0 + $0x7c8] sm:$0xff]
  %v264 = vld [vmem:[%s0 + $0x7d0] sm:$0xff]
  %v265 = vld [vmem:[%s0 + $0x7d8] sm:$0xff]
  %v266 = vld [vmem:[%s0 + $0x7e0] sm:$0xff]
  %v267 = vld [vmem:[%s0 + $0x7e8] sm:$0xff]
  %v268 = vld [vmem:[%s0 + $0x7f0] sm:$0xff]
  %v269 = vld [vmem:[%s0 + $0x7f8] sm:$0xff]
  %v270 = vld [vmem:[%s0 + $0x800] sm:$0xff]
  %v271 = vld [vmem:[%s0 + $0x808] sm:$0xff]
  %v272 = vld [vmem:[%s0 + $0x810] sm:$0xff]
  %v273 = vld [vmem:[%s0 + $0x818] sm:$0xff]
  %v274 = vld [vmem:[%s0 + $0x820] sm:$0xff]
  %v275 = vld [vmem:[%s0 + $0x828] sm:$0xff]
  %v276 = vld [vmem:[%s0 + $0x830] sm:$0xff]
  %v277 = vld [vmem:[%s0 + $0x838] sm:$0xff]
  %v278 = vld [vmem:[%s0 + $0x840] sm:$0xff]
  %v279 = vld [vmem:[%s0 + $0x848] sm:$0xff]
  %v280 = vld [vmem:[%s0 + $0x850] sm:$0xff]
  %v281 = vld [vmem:[%s0 + $0x858] sm:$0xff]
  %v282 = vld [vmem:[%s0 + $0x860] sm:$0xff]
  %v283 = vld [vmem:[%s0 + $0x868] sm:$0xff]
  %v284 = vld [vmem:[%s0 + $0x870] sm:$0xff]
  %v285 = vld [vmem:[%s0 + $0x878] sm:$0xff]
  %v286 = vld [vmem:[%s0 + $0x880] sm:$0xff]
  %v287 = vld [vmem:[%s0 + $0x888] sm:$0xff]
  %v288 = vld [vmem:[%s0 + $0x890] sm:$0xff]
  %v289 = vld [vmem:[%s0 + $0x898] sm:$0xff]
  %v290 = vld [vmem:[%s0 + $0x8a0] sm:$0xff]
  %v291 = vld [vmem:[%s0 + $0x8a8] sm:$0xff]
  %v292 = vld [vmem:[%s0 + $0x8b0] sm:$0xff]
  %v293 = vld [vmem:[%s0 + $0x8b8] sm:$0xff]
  %v294 = vld [vmem:[%s0 + $0x8c0] sm:$0xff]
  %v295 = vld [vmem:[%s0 + $0x8c8] sm:$0xff]
  %v296 = vld [vmem:[%s0 + $0x8d0] sm:$0xff]
  %v297 = vld [vmem:[%s0 + $0x8d8] sm:$0xff]
  %v298 = vld [vmem:[%s0 + $0x8e0] sm:$0xff]
  %v299 = vld [vmem:[%s0 + $0x8e8] sm:$0xff]
  %v300 = vld [vmem:[%s0 + $0x8f0] sm:$0xff]
  %v301 = vld [vmem:[%s0 + $0x8f8] sm:$0xff]
  %v302 = vld [vmem:[%s0 + $0x900] sm:$0xff]
  %v303 = vld [vmem:[%s0 + $0x908] sm:$0xff]
  %v304 = vld [vmem:[%s0 + $0x910] sm:$0xff]
  %v305 = vld [vmem:[%s0 + $0x918] sm:$0xff]
  %v306 = vld [vmem:[%s0 + $0x920] sm:$0xff]
  %v307 = vld [vmem:[%s0 + $0x928] sm:$0xff]
  %v308 = vld [vmem:[%s0 + $0x930] sm:$0xff]
  %v309 = vld [vmem:[%s0 + $0x938] sm:$0xff]
  %v310 = vld [vmem:[%s0 + $0x940] sm:$0xff]
  %v311 = vld [vmem:[%s0 + $0x948] sm:$0xff]
  %v312 = vld [vmem:[%s0 + $0x950] sm:$0xff]
  %v313 = vld [vmem:[%s0 + $0x958] sm:$0xff]
  %v314 = vld [vmem:[%s0 + $0x960] sm:$0xff]
  %v315 = vld [vmem:[%s0 + $0x968] sm:$0xff]
  %v316 = vld [vmem:[%s0 + $0x970] sm:$0xff]
  %v317 = vld [vmem:[%s0 + $0x978] sm:$0xff]
  %v318 = vld [vmem:[%s0 + $0x980] sm:$0xff]
  %v319 = vld [vmem:[%s0 + $0x988] sm:$0xff]
  %v320 = vld [vmem:[%s0 + $0x990] sm:$0xff]
  %v321 = vld [vmem:[%s0 + $0x998] sm:$0xff]
  %v322 = vld [vmem:[%s0 + $0x9a0] sm:$0xff]
  %v323 = vld [vmem:[%s0 + $0x9a8] sm:$0xff]
  %v324 = vld [vmem:[%s0 + $0x9b0] sm:$0xff]
  %v325 = vld [vmem:[%s0 + $0x9b8] sm:$0xff]
  %v326 = vld [vmem:[%s0 + $0x9c0] sm:$0xff]
  %v327 = vld [vmem:[%s0 + $0x9c8] sm:$0xff]
  %v328 = vld [vmem:[%s0 + $0x9d0] sm:$0xff]
  %v329 = vld [vmem:[%s0 + $0x9d8] sm:$0xff]
  %v330 = vld [vmem:[%s0 + $0x9e0] sm:$0xff]
  %v331 = vld [vmem:[%s0 + $0x9e8] sm:$0xff]
  %v332 = vld [vmem:[%s0 + $0x9f0] sm:$0xff]
  %v333 = vld [vmem:[%s0 + $0x9f8] sm:$0xff]
  %v334 = vld [vmem:[%s0 + $0xa00] sm:$0xff]
  %v335 = vld [vmem:[%s0 + $0xa08] sm:$0xff]
  %v336 = vld [vmem:[%s0 + $0xa10] sm:$0xff]
  %v337 = vld [vmem:[%s0 + $0xa18] sm:$0xff]
  %v338 = vld [vmem:[%s0 + $0xa20] sm:$0xff]
  %v339 = vld [vmem:[%s0 + $0xa28] sm:$0xff]
  %v340 = vld [vmem:[%s0 + $0xa30] sm:$0xff]
  %v341 = vld [vmem:[%s0 + $0xa38] sm:$0xff]
  %v342 = vld [vmem:[%s0 + $0xa40] sm:$0xff]
  %v343 = vld [vmem:[%s0 + $0xa48] sm:$0xff]
  %v344 = vld [vmem:[%s0 + $0xa50] sm:$0xff]
  %v345 = vld [vmem:[%s0 + $0xa58] sm:$0xff]
  %v346 = vld [vmem:[%s0 + $0xa60] sm:$0xff]
  %v347 = vld [vmem:[%s0 + $0xa68] sm:$0xff]
  %v348 = vld [vmem:[%s0 + $0xa70] sm:$0xff]
  %v349 = vld [vmem:[%s0 + $0xa78] sm:$0xff]
  %v350 = vld [vmem:[%s0 + $0xa80] sm:$0xff]
  %v351 = vld [vmem:[%s0 + $0xa88] sm:$0xff]
  %v352 = vld [vmem:[%s0 + $0xa90] sm:$0xff]
  %v353 = vld [vmem:[%s0 + $0xa98] sm:$0xff]
  %v354 = vld [vmem:[%s0 + $0xaa0] sm:$0xff]
  %v355 = vld [vmem:[%s0 + $0xaa8] sm:$0xff]
  %v356 = vld [vmem:[%s0 + $0xab0] sm:$0xff]
  %v357 = vld [vmem:[%s0 + $0xab8] sm:$0xff]
  %v358 = vld [vmem:[%s0 + $0xac0] sm:$0xff]
  %v359 = vld [vmem:[%s0 + $0xac8] sm:$0xff]
  %v360 = vld [vmem:[%s0 + $0xad0] sm:$0xff]
  %v361 = vld [vmem:[%s0 + $0xad8] sm:$0xff]
  %v362 = vld [vmem:[%s0 + $0xae0] sm:$0xff]
  %v363 = vld [vmem:[%s0 + $0xae8] sm:$0xff]
  %v364 = vld [vmem:[%s0 + $0xaf0] sm:$0xff]
  %v365 = vld [vmem:[%s0 + $0xaf8] sm:$0xff]
  %v366 = vld [vmem:[%s0 + $0xb00] sm:$0xff]
  %v367 = vld [vmem:[%s0 + $0xb08] sm:$0xff]
  %v368 = vld [vmem:[%s0 + $0xb10] sm:$0xff]
  %v369 = vld [vmem:[%s0 + $0xb18] sm:$0xff]
  %v370 = vld [vmem:[%s0 + $0xb20] sm:$0xff]
  %v371 = vld [vmem:[%s0 + $0xb28] sm:$0xff]
  %v372 = vld [vmem:[%s0 + $0xb30] sm:$0xff]
  %v373 = vld [vmem:[%s0 + $0xb38] sm:$0xff]
  %v374 = vld [vmem:[%s0 + $0xb40] sm:$0xff]
  %v375 = vld [vmem:[%s0 + $0xb48] sm:$0xff]
  %v376 = vld [vmem:[%s0 + $0xb50] sm:$0xff]
  %v377 = vld [vmem:[%s0 + $0xb58] sm:$0xff]
  %v378 = vld [vmem:[%s0 + $0xb60] sm:$0xff]
  %v379 = vld [vmem:[%s0 + $0xb68] sm:$0xff]
  %v380 = vld [vmem:[%s0 + $0xb70] sm:$0xff]
  %v381 = vld [vmem:[%s0 + $0xb78] sm:$0xff]
  %v382 = vld [vmem:[%s0 + $0xb80] sm:$0xff]
  %v383 = vld [vmem:[%s0 + $0xb88] sm:$0xff]
  %v384 = vld [vmem:[%s0 + $0xb90] sm:$0xff]
  %v385 = vld [vmem:[%s0 + $0xb98] sm:$0xff]
  %v386 = vld [vmem:[%s0 + $0xba0] sm:$0xff]
  %v387 = vld [vmem:[%s0 + $0xba8] sm:$0xff]
  %v388 = vld [vmem:[%s0 + $0xbb0] sm:$0xff]
  %v389 = vld [vmem:[%s0 + $0xbb8] sm:$0xff]
  %v390 = vld [vmem:[%s0 + $0xbc0] sm:$0xff]
  %v391 = vld [vmem:[%s0 + $0xbc8] sm:$0xff]
  %v392 = vld [vmem:[%s0 + $0xbd0] sm:$0xff]
  %v393 = vld [vmem:[%s0 + $0xbd8] sm:$0xff]
  %v394 = vld [vmem:[%s0 + $0xbe0] sm:$0xff]
  %v395 = vld [vmem:[%s0 + $0xbe8] sm:$0xff]
  %v396 = vld [vmem:[%s0 + $0xbf0] sm:$0xff]
  %v397 = vld [vmem:[%s0 + $0xbf8] sm:$0xff]
  %v398 = vld [vmem:[%s0 + $0xc00] sm:$0xff]
  %v399 = vld [vmem:[%s0 + $0xc08] sm:$0xff]
  %v400 = vld [vmem:[%s0 + $0xc10] sm:$0xff]
  %v401 = vld [vmem:[%s0 + $0xc18] sm:$0xff]
  %v402 = vld [vmem:[%s0 + $0xc20] sm:$0xff]
  %v403 = vld [vmem:[%s0 + $0xc28] sm:$0xff]
  %v404 = vld [vmem:[%s0 + $0xc30] sm:$0xff]
  %v405 = vld [vmem:[%s0 + $0xc38] sm:$0xff]
  %v406 = vld [vmem:[%s0 + $0xc40] sm:$0xff]
  %v407 = vld [vmem:[%s0 + $0xc48] sm:$0xff]
  %v408 = vld [vmem:[%s0 + $0xc50] sm:$0xff]
  %v409 = vld [vmem:[%s0 + $0xc58] sm:$0xff]
  %v410 = vld [vmem:[%s0 + $0xc60] sm:$0xff]
  %v411 = vld [vmem:[%s0 + $0xc68] sm:$0xff]
  %v412 = vld [vmem:[%s0 + $0xc70] sm:$0xff]
  %v413 = vld [vmem:[%s0 + $0xc78] sm:$0xff]
  %v414 = vld [vmem:[%s1] sm:$0xff]
  %v415 = vld [vmem:[%s1 + $0x8] sm:$0xff]
  %v416 = vld [vmem:[%s1 + $0x10] sm:$0xff]
  %v417 = vld [vmem:[%s1 + $0x18] sm:$0xff]
  %v418 = vld [vmem:[%s1 + $0x20] sm:$0xff]
  %v419 = vld [vmem:[%s1 + $0x28] sm:$0xff]
  %v420 = vld [vmem:[%s1 + $0x30] sm:$0xff]
  %v421 = vld [vmem:[%s1 + $0x38] sm:$0xff]
  %v422 = vld [vmem:[%s1 + $0x40] sm:$0xff]
  %v423 = vld [vmem:[%s1 + $0x48] sm:$0xff]
  %v424 = vld [vmem:[%s1 + $0x50] sm:$0xff]
  %v425 = vld [vmem:[%s1 + $0x58] sm:$0xff]
  %v426 = vld [vmem:[%s1 + $0x60] sm:$0xff]
  %v427 = vld [vmem:[%s1 + $0x68] sm:$0xff]
  %v428 = vld [vmem:[%s1 + $0x70] sm:$0xff]
  %v429 = vld [vmem:[%s1 + $0x78] sm:$0xff]
  %v430 = vld [vmem:[%s1 + $0x80] sm:$0xff]
  %v431 = vld [vmem:[%s1 + $0x88] sm:$0xff]
  %v432 = vld [vmem:[%s1 + $0x90] sm:$0xff]
  %v433 = vld [vmem:[%s1 + $0x98] sm:$0xff]
  %v434 = vld [vmem:[%s1 + $0xa0] sm:$0xff]
  %v435 = vld [vmem:[%s1 + $0xa8] sm:$0xff]
  %v436 = vld [vmem:[%s1 + $0xb0] sm:$0xff]
  %v437 = vld [vmem:[%s1 + $0xb8] sm:$0xff]
  %v438 = vld [vmem:[%s1 + $0xc0] sm:$0xff]
  %v439 = vld [vmem:[%s1 + $0xc8] sm:$0xff]
  %v440 = vld [vmem:[%s1 + $0xd0] sm:$0xff]
  %v441 = vld [vmem:[%s1 + $0xd8] sm:$0xff]
  %v442 = vld [vmem:[%s1 + $0xe0] sm:$0xff]
  %v443 = vld [vmem:[%s1 + $0xe8] sm:$0xff]
  %v444 = vld [vmem:[%s1 + $0xf0] sm:$0xff]
  %v445 = vld [vmem:[%s1 + $0xf8] sm:$0xff]
  %v446 = vld [vmem:[%s1 + $0x100] sm:$0xff]
  %v447 = vld [vmem:[%s1 + $0x108] sm:$0xff]
  %v448 = vld [vmem:[%s1 + $0x110] sm:$0xff]
  %v449 = vld [vmem:[%s1 + $0x118] sm:$0xff]
  %v450 = vld [vmem:[%s1 + $0x120] sm:$0xff]
  %v451 = vld [vmem:[%s1 + $0x128] sm:$0xff]
  %v452 = vld [vmem:[%s1 + $0x130] sm:$0xff]
  %v453 = vld [vmem:[%s1 + $0x138] sm:$0xff]
  %v454 = vld [vmem:[%s1 + $0x140] sm:$0xff]
  %v455 = vld [vmem:[%s1 + $0x148] sm:$0xff]
  %v456 = vld [vmem:[%s1 + $0x150] sm:$0xff]
  %v457 = vld [vmem:[%s1 + $0x158] sm:$0xff]
  %v458 = vld [vmem:[%s1 + $0x160] sm:$0xff]
  %v459 = vld [vmem:[%s1 + $0x168] sm:$0xff]
  %v460 = vld [vmem:[%s1 + $0x170] sm:$0xff]
  %v461 = vld [vmem:[%s1 + $0x178] sm:$0xff]
  %v462 = vld [vmem:[%s1 + $0x180] sm:$0xff]
  %v463 = vld [vmem:[%s1 + $0x188] sm:$0xff]
  %v464 = vld [vmem:[%s1 + $0x190] sm:$0xff]
  %v465 = vld [vmem:[%s1 + $0x198] sm:$0xff]
  %v466 = vld [vmem:[%s1 + $0x1a0] sm:$0xff]
  %v467 = vld [vmem:[%s1 + $0x1a8] sm:$0xff]
  %v468 = vld [vmem:[%s1 + $0x1b0] sm:$0xff]
  %v469 = vld [vmem:[%s1 + $0x1b8] sm:$0xff]
  %v470 = vld [vmem:[%s1 + $0x1c0] sm:$0xff]
  %v471 = vld [vmem:[%s1 + $0x1c8] sm:$0xff]
  %v472 = vld [vmem:[%s1 + $0x1d0] sm:$0xff]
  %v473 = vld [vmem:[%s1 + $0x1d8] sm:$0xff]
  %v474 = vld [vmem:[%s1 + $0x1e0] sm:$0xff]
  %v475 = vld [vmem:[%s1 + $0x1e8] sm:$0xff]
  %v476 = vld [vmem:[%s1 + $0x1f0] sm:$0xff]
  %v477 = vld [vmem:[%s1 + $0x1f8] sm:$0xff]
  %v478 = vld [vmem:[%s1 + $0x200] sm:$0xff]
  %v479 = vld [vmem:[%s1 + $0x208] sm:$0xff]
  %v480 = vld [vmem:[%s1 + $0x210] sm:$0xff]
  %v481 = vld [vmem:[%s1 + $0x218] sm:$0xff]
  %v482 = vld [vmem:[%s1 + $0x220] sm:$0xff]
  %v483 = vld [vmem:[%s1 + $0x228] sm:$0xff]
  %v484 = vld [vmem:[%s1 + $0x230] sm:$0xff]
  %v485 = vld [vmem:[%s1 + $0x238] sm:$0xff]
  %v486 = vld [vmem:[%s1 + $0x240] sm:$0xff]
  %v487 = vld [vmem:[%s1 + $0x248] sm:$0xff]
  %v488 = vld [vmem:[%s1 + $0x250] sm:$0xff]
  %v489 = vld [vmem:[%s1 + $0x258] sm:$0xff]
  %v490 = vld [vmem:[%s1 + $0x260] sm:$0xff]
  %v491 = vld [vmem:[%s1 + $0x268] sm:$0xff]
  %v492 = vld [vmem:[%s1 + $0x270] sm:$0xff]
  %v493 = vld [vmem:[%s1 + $0x278] sm:$0xff]
  %v494 = vld [vmem:[%s1 + $0x280] sm:$0xff]
  %v495 = vld [vmem:[%s1 + $0x288] sm:$0xff]
  %v496 = vld [vmem:[%s1 + $0x290] sm:$0xff]
  %v497 = vld [vmem:[%s1 + $0x298] sm:$0xff]
  %v498 = vld [vmem:[%s1 + $0x2a0] sm:$0xff]
  %v499 = vld [vmem:[%s1 + $0x2a8] sm:$0xff]
  %v500 = vld [vmem:[%s1 + $0x2b0] sm:$0xff]
  %v501 = vld [vmem:[%s1 + $0x2b8] sm:$0xff]
  %v502 = vld [vmem:[%s1 + $0x2c0] sm:$0xff]
  %v503 = vld [vmem:[%s1 + $0x2c8] sm:$0xff]
  %v504 = vld [vmem:[%s1 + $0x2d0] sm:$0xff]
  %v505 = vld [vmem:[%s1 + $0x2d8] sm:$0xff]
  %v506 = vld [vmem:[%s1 + $0x2e0] sm:$0xff]
  %v507 = vld [vmem:[%s1 + $0x2e8] sm:$0xff]
  %v508 = vld [vmem:[%s1 + $0x2f0] sm:$0xff]
  %v509 = vld [vmem:[%s1 + $0x2f8] sm:$0xff]
  %v510 = vld [vmem:[%s1 + $0x300] sm:$0xff]
  %v511 = vld [vmem:[%s1 + $0x308] sm:$0xff]
  %v512 = vld [vmem:[%s1 + $0x310] sm:$0xff]
  %v513 = vld [vmem:[%s1 + $0x318] sm:$0xff]
  %v514 = vld [vmem:[%s1 + $0x320] sm:$0xff]
  %v515 = vld [vmem:[%s1 + $0x328] sm:$0xff]
  %v516 = vld [vmem:[%s1 + $0x330] sm:$0xff]
  %v517 = vld [vmem:[%s1 + $0x338] sm:$0xff]
  %v518 = vld [vmem:[%s1 + $0x340] sm:$0xff]
  %v519 = vld [vmem:[%s1 + $0x348] sm:$0xff]
  %v520 = vld [vmem:[%s1 + $0x350] sm:$0xff]
  %v521 = vld [vmem:[%s1 + $0x358] sm:$0xff]
  %v522 = vld [vmem:[%s1 + $0x360] sm:$0xff]
  %v523 = vld [vmem:[%s1 + $0x368] sm:$0xff]
  %v524 = vld [vmem:[%s1 + $0x370] sm:$0xff]
  %v525 = vld [vmem:[%s1 + $0x378] sm:$0xff]
  %v526 = vld [vmem:[%s1 + $0x380] sm:$0xff]
  %v527 = vld [vmem:[%s1 + $0x388] sm:$0xff]
  %v528 = vld [vmem:[%s1 + $0x390] sm:$0xff]
  %v529 = vld [vmem:[%s1 + $0x398] sm:$0xff]
  %v530 = vld [vmem:[%s1 + $0x3a0] sm:$0xff]
  %v531 = vld [vmem:[%s1 + $0x3a8] sm:$0xff]
  %v532 = vld [vmem:[%s1 + $0x3b0] sm:$0xff]
  %v533 = vld [vmem:[%s1 + $0x3b8] sm:$0xff]
  %v534 = vld [vmem:[%s1 + $0x3c0] sm:$0xff]
  %v535 = vld [vmem:[%s1 + $0x3c8] sm:$0xff]
  %v536 = vld [vmem:[%s1 + $0x3d0] sm:$0xff]
  %v537 = vld [vmem:[%s1 + $0x3d8] sm:$0xff]
  %v538 = vld [vmem:[%s1 + $0x3e0] sm:$0xff]
  %v539 = vld [vmem:[%s1 + $0x3e8] sm:$0xff]
  %v540 = vld [vmem:[%s1 + $0x3f0] sm:$0xff]
  %v541 = vld [vmem:[%s1 + $0x3f8] sm:$0xff]
  %v542 = vld [vmem:[%s1 + $0x400] sm:$0xff]
  %v543 = vld [vmem:[%s1 + $0x408] sm:$0xff]
  %v544 = vld [vmem:[%s1 + $0x410] sm:$0xff]
  %v545 = vld [vmem:[%s1 + $0x418] sm:$0xff]
  %v546 = vld [vmem:[%s1 + $0x420] sm:$0xff]
  %v547 = vld [vmem:[%s1 + $0x428] sm:$0xff]
  %v548 = vld [vmem:[%s1 + $0x430] sm:$0xff]
  %v549 = vld [vmem:[%s1 + $0x438] sm:$0xff]
  %v550 = vld [vmem:[%s1 + $0x440] sm:$0xff]
  %v551 = vld [vmem:[%s1 + $0x448] sm:$0xff]
  %v552 = vld [vmem:[%s1 + $0x450] sm:$0xff]
  %v553 = vld [vmem:[%s1 + $0x458] sm:$0xff]
  %v554 = vld [vmem:[%s1 + $0x460] sm:$0xff]
  %v555 = vld [vmem:[%s1 + $0x468] sm:$0xff]
  %v556 = vld [vmem:[%s1 + $0x470] sm:$0xff]
  %v557 = vld [vmem:[%s1 + $0x478] sm:$0xff]
  %v558 = vld [vmem:[%s1 + $0x480] sm:$0xff]
  %v559 = vld [vmem:[%s1 + $0x488] sm:$0xff]
  %v560 = vld [vmem:[%s1 + $0x490] sm:$0xff]
  %v561 = vld [vmem:[%s1 + $0x498] sm:$0xff]
  %v562 = vld [vmem:[%s1 + $0x4a0] sm:$0xff]
  %v563 = vld [vmem:[%s1 + $0x4a8] sm:$0xff]
  %v564 = vld [vmem:[%s1 + $0x4b0] sm:$0xff]
  %v565 = vld [vmem:[%s1 + $0x4b8] sm:$0xff]
  %v566 = vld [vmem:[%s1 + $0x4c0] sm:$0xff]
  %v567 = vld [vmem:[%s1 + $0x4c8] sm:$0xff]
  %v568 = vld [vmem:[%s1 + $0x4d0] sm:$0xff]
  %v569 = vld [vmem:[%s1 + $0x4d8] sm:$0xff]
  %v570 = vld [vmem:[%s1 + $0x4e0] sm:$0xff]
  %v571 = vld [vmem:[%s1 + $0x4e8] sm:$0xff]
  %v572 = vld [vmem:[%s1 + $0x4f0] sm:$0xff]
  %v573 = vld [vmem:[%s1 + $0x4f8] sm:$0xff]
  %v574 = vld [vmem:[%s1 + $0x500] sm:$0xff]
  %v575 = vld [vmem:[%s1 + $0x508] sm:$0xff]
  %v576 = vld [vmem:[%s1 + $0x510] sm:$0xff]
  %v577 = vld [vmem:[%s1 + $0x518] sm:$0xff]
  %v578 = vld [vmem:[%s1 + $0x520] sm:$0xff]
  %v579 = vld [vmem:[%s1 + $0x528] sm:$0xff]
  %v580 = vld [vmem:[%s1 + $0x530] sm:$0xff]
  %v581 = vld [vmem:[%s1 + $0x538] sm:$0xff]
  %v582 = vld [vmem:[%s1 + $0x540] sm:$0xff]
  %v583 = vld [vmem:[%s1 + $0x548] sm:$0xff]
  %v584 = vld [vmem:[%s1 + $0x550] sm:$0xff]
  %v585 = vld [vmem:[%s1 + $0x558] sm:$0xff]
  %v586 = vld [vmem:[%s1 + $0x560] sm:$0xff]
  %v587 = vld [vmem:[%s1 + $0x568] sm:$0xff]
  %v588 = vld [vmem:[%s1 + $0x570] sm:$0xff]
  %v589 = vld [vmem:[%s1 + $0x578] sm:$0xff]
  %v590 = vld [vmem:[%s1 + $0x580] sm:$0xff]
  %v591 = vld [vmem:[%s1 + $0x588] sm:$0xff]
  %v592 = vld [vmem:[%s1 + $0x590] sm:$0xff]
  %v593 = vld [vmem:[%s1 + $0x598] sm:$0xff]
  %v594 = vld [vmem:[%s1 + $0x5a0] sm:$0xff]
  %v595 = vld [vmem:[%s1 + $0x5a8] sm:$0xff]
  %v596 = vld [vmem:[%s1 + $0x5b0] sm:$0xff]
  %v597 = vld [vmem:[%s1 + $0x5b8] sm:$0xff]
  %v598 = vld [vmem:[%s1 + $0x5c0] sm:$0xff]
  %v599 = vld [vmem:[%s1 + $0x5c8] sm:$0xff]
  %v600 = vld [vmem:[%s1 + $0x5d0] sm:$0xff]
  %v601 = vld [vmem:[%s1 + $0x5d8] sm:$0xff]
  %v602 = vld [vmem:[%s1 + $0x5e0] sm:$0xff]
  %v603 = vld [vmem:[%s1 + $0x5e8] sm:$0xff]
  %v604 = vld [vmem:[%s1 + $0x5f0] sm:$0xff]
  %v605 = vld [vmem:[%s1 + $0x5f8] sm:$0xff]
  %v606 = vld [vmem:[%s1 + $0x600] sm:$0xff]
  %v607 = vld [vmem:[%s1 + $0x608] sm:$0xff]
  %v608 = vld [vmem:[%s1 + $0x610] sm:$0xff]
  %v609 = vld [vmem:[%s1 + $0x618] sm:$0xff]
  %v610 = vld [vmem:[%s1 + $0x620] sm:$0xff]
  %v611 = vld [vmem:[%s1 + $0x628] sm:$0xff]
  %v612 = vld [vmem:[%s1 + $0x630] sm:$0xff]
  %v613 = vld [vmem:[%s1 + $0x638] sm:$0xff]
  %v614 = vld [vmem:[%s1 + $0x640] sm:$0xff]
  %v615 = vld [vmem:[%s1 + $0x648] sm:$0xff]
  %v616 = vld [vmem:[%s1 + $0x650] sm:$0xff]
  %v617 = vld [vmem:[%s1 + $0x658] sm:$0xff]
  %v618 = vld [vmem:[%s1 + $0x660] sm:$0xff]
  %v619 = vld [vmem:[%s1 + $0x668] sm:$0xff]
  %v620 = vld [vmem:[%s1 + $0x670] sm:$0xff]
  %v621 = vld [vmem:[%s1 + $0x678] sm:$0xff]
  %v622 = vld [vmem:[%s1 + $0x680] sm:$0xff]
  %v623 = vld [vmem:[%s1 + $0x688] sm:$0xff]
  %v624 = vld [vmem:[%s1 + $0x690] sm:$0xff]
  %v625 = vld [vmem:[%s1 + $0x698] sm:$0xff]
  %v626 = vld [vmem:[%s1 + $0x6a0] sm:$0xff]
  %v627 = vld [vmem:[%s1 + $0x6a8] sm:$0xff]
  %v628 = vld [vmem:[%s1 + $0x6b0] sm:$0xff]
  %v629 = vld [vmem:[%s1 + $0x6b8] sm:$0xff]
  %v630 = vld [vmem:[%s1 + $0x6c0] sm:$0xff]
  %v631 = vld [vmem:[%s1 + $0x6c8] sm:$0xff]
  %v632 = vld [vmem:[%s1 + $0x6d0] sm:$0xff]
  %v633 = vld [vmem:[%s1 + $0x6d8] sm:$0xff]
  %v634 = vld [vmem:[%s1 + $0x6e0] sm:$0xff]
  %v635 = vld [vmem:[%s1 + $0x6e8] sm:$0xff]
  %v636 = vld [vmem:[%s1 + $0x6f0] sm:$0xff]
  %v637 = vld [vmem:[%s1 + $0x6f8] sm:$0xff]
  %v638 = vld [vmem:[%s1 + $0x700] sm:$0xff]
  %v639 = vld [vmem:[%s1 + $0x708] sm:$0xff]
  %v640 = vld [vmem:[%s1 + $0x710] sm:$0xff]
  %v641 = vld [vmem:[%s1 + $0x718] sm:$0xff]
  %v642 = vld [vmem:[%s1 + $0x720] sm:$0xff]
  %v643 = vld [vmem:[%s1 + $0x728] sm:$0xff]
  %v644 = vld [vmem:[%s1 + $0x730] sm:$0xff]
  %v645 = vld [vmem:[%s1 + $0x738] sm:$0xff]
  %v646 = vld [vmem:[%s1 + $0x740] sm:$0xff]
  %v647 = vld [vmem:[%s1 + $0x748] sm:$0xff]
  %v648 = vld [vmem:[%s1 + $0x750] sm:$0xff]
  %v649 = vld [vmem:[%s1 + $0x758] sm:$0xff]
  %v650 = vld [vmem:[%s1 + $0x760] sm:$0xff]
  %v651 = vld [vmem:[%s1 + $0x768] sm:$0xff]
  %v652 = vld [vmem:[%s1 + $0x770] sm:$0xff]
  %v653 = vld [vmem:[%s1 + $0x778] sm:$0xff]
  %v654 = vld [vmem:[%s1 + $0x780] sm:$0xff]
  %v655 = vld [vmem:[%s1 + $0x788] sm:$0xff]
  %v656 = vld [vmem:[%s1 + $0x790] sm:$0xff]
  %v657 = vld [vmem:[%s1 + $0x798] sm:$0xff]
  %v658 = vld [vmem:[%s1 + $0x7a0] sm:$0xff]
  %v659 = vld [vmem:[%s1 + $0x7a8] sm:$0xff]
  %v660 = vld [vmem:[%s1 + $0x7b0] sm:$0xff]
  %v661 = vld [vmem:[%s1 + $0x7b8] sm:$0xff]
  %v662 = vld [vmem:[%s1 + $0x7c0] sm:$0xff]
  %v663 = vld [vmem:[%s1 + $0x7c8] sm:$0xff]
  %v664 = vld [vmem:[%s1 + $0x7d0] sm:$0xff]
  %v665 = vld [vmem:[%s1 + $0x7d8] sm:$0xff]
  %v666 = vld [vmem:[%s1 + $0x7e0] sm:$0xff]
  %v667 = vld [vmem:[%s1 + $0x7e8] sm:$0xff]
  %v668 = vld [vmem:[%s1 + $0x7f0] sm:$0xff]
  %v669 = vld [vmem:[%s1 + $0x7f8] sm:$0xff]
  %v670 = vld [vmem:[%s1 + $0x800] sm:$0xff]
  %v671 = vld [vmem:[%s1 + $0x808] sm:$0xff]
  %v672 = vld [vmem:[%s1 + $0x810] sm:$0xff]
  %v673 = vld [vmem:[%s1 + $0x818] sm:$0xff]
  %v674 = vld [vmem:[%s1 + $0x820] sm:$0xff]
  %v675 = vld [vmem:[%s1 + $0x828] sm:$0xff]
  %v676 = vld [vmem:[%s1 + $0x830] sm:$0xff]
  %v677 = vld [vmem:[%s1 + $0x838] sm:$0xff]
  %v678 = vld [vmem:[%s1 + $0x840] sm:$0xff]
  %v679 = vld [vmem:[%s1 + $0x848] sm:$0xff]
  %v680 = vld [vmem:[%s1 + $0x850] sm:$0xff]
  %v681 = vld [vmem:[%s1 + $0x858] sm:$0xff]
  %v682 = vld [vmem:[%s1 + $0x860] sm:$0xff]
  %v683 = vld [vmem:[%s1 + $0x868] sm:$0xff]
  %v684 = vld [vmem:[%s1 + $0x870] sm:$0xff]
  %v685 = vld [vmem:[%s1 + $0x878] sm:$0xff]
  %v686 = vld [vmem:[%s1 + $0x880] sm:$0xff]
  %v687 = vld [vmem:[%s1 + $0x888] sm:$0xff]
  %v688 = vld [vmem:[%s1 + $0x890] sm:$0xff]
  %v689 = vld [vmem:[%s1 + $0x898] sm:$0xff]
  %v690 = vld [vmem:[%s1 + $0x8a0] sm:$0xff]
  %v691 = vld [vmem:[%s1 + $0x8a8] sm:$0xff]
  %v692 = vld [vmem:[%s1 + $0x8b0] sm:$0xff]
  %v693 = vld [vmem:[%s1 + $0x8b8] sm:$0xff]
  %v694 = vld [vmem:[%s1 + $0x8c0] sm:$0xff]
  %v695 = vld [vmem:[%s1 + $0x8c8] sm:$0xff]
  %v696 = vld [vmem:[%s1 + $0x8d0] sm:$0xff]
  %v697 = vld [vmem:[%s1 + $0x8d8] sm:$0xff]
  %v698 = vld [vmem:[%s1 + $0x8e0] sm:$0xff]
  %v699 = vld [vmem:[%s1 + $0x8e8] sm:$0xff]
  %v700 = vld [vmem:[%s1 + $0x8f0] sm:$0xff]
  %v701 = vld [vmem:[%s1 + $0x8f8] sm:$0xff]
  %v702 = vld [vmem:[%s1 + $0x900] sm:$0xff]
  %v703 = vld [vmem:[%s1 + $0x908] sm:$0xff]
  %v704 = vld [vmem:[%s1 + $0x910] sm:$0xff]
  %v705 = vld [vmem:[%s1 + $0x918] sm:$0xff]
  %v706 = vld [vmem:[%s1 + $0x920] sm:$0xff]
  %v707 = vld [vmem:[%s1 + $0x928] sm:$0xff]
  %v708 = vld [vmem:[%s1 + $0x930] sm:$0xff]
  %v709 = vld [vmem:[%s1 + $0x938] sm:$0xff]
  %v710 = vld [vmem:[%s1 + $0x940] sm:$0xff]
  %v711 = vld [vmem:[%s1 + $0x948] sm:$0xff]
  %v712 = vld [vmem:[%s1 + $0x950] sm:$0xff]
  %v713 = vld [vmem:[%s1 + $0x958] sm:$0xff]
  %v714 = vld [vmem:[%s1 + $0x960] sm:$0xff]
  %v715 = vld [vmem:[%s1 + $0x968] sm:$0xff]
  %v716 = vld [vmem:[%s1 + $0x970] sm:$0xff]
  %v717 = vld [vmem:[%s1 + $0x978] sm:$0xff]
  %v718 = vld [vmem:[%s1 + $0x980] sm:$0xff]
  %v719 = vld [vmem:[%s1 + $0x988] sm:$0xff]
  %v720 = vld [vmem:[%s1 + $0x990] sm:$0xff]
  %v721 = vld [vmem:[%s1 + $0x998] sm:$0xff]
  %v722 = vld [vmem:[%s1 + $0x9a0] sm:$0xff]
  %v723 = vld [vmem:[%s1 + $0x9a8] sm:$0xff]
  %v724 = vld [vmem:[%s1 + $0x9b0] sm:$0xff]
  %v725 = vld [vmem:[%s1 + $0x9b8] sm:$0xff]
  %v726 = vld [vmem:[%s1 + $0x9c0] sm:$0xff]
  %v727 = vld [vmem:[%s1 + $0x9c8] sm:$0xff]
  %v728 = vld [vmem:[%s1 + $0x9d0] sm:$0xff]
  %v729 = vld [vmem:[%s1 + $0x9d8] sm:$0xff]
  %v730 = vld [vmem:[%s1 + $0x9e0] sm:$0xff]
  %v731 = vld [vmem:[%s1 + $0x9e8] sm:$0xff]
  %v732 = vld [vmem:[%s1 + $0x9f0] sm:$0xff]
  %v733 = vld [vmem:[%s1 + $0x9f8] sm:$0xff]
  %v734 = vld [vmem:[%s1 + $0xa00] sm:$0xff]
  %v735 = vld [vmem:[%s1 + $0xa08] sm:$0xff]
  %v736 = vld [vmem:[%s1 + $0xa10] sm:$0xff]
  %v737 = vld [vmem:[%s1 + $0xa18] sm:$0xff]
  %v738 = vld [vmem:[%s1 + $0xa20] sm:$0xff]
  %v739 = vld [vmem:[%s1 + $0xa28] sm:$0xff]
  %v740 = vld [vmem:[%s1 + $0xa30] sm:$0xff]
  %v741 = vld [vmem:[%s1 + $0xa38] sm:$0xff]
  %v742 = vld [vmem:[%s1 + $0xa40] sm:$0xff]
  %v743 = vld [vmem:[%s1 + $0xa48] sm:$0xff]
  %v744 = vld [vmem:[%s1 + $0xa50] sm:$0xff]
  %v745 = vld [vmem:[%s1 + $0xa58] sm:$0xff]
  %v746 = vld [vmem:[%s1 + $0xa60] sm:$0xff]
  %v747 = vld [vmem:[%s1 + $0xa68] sm:$0xff]
  %v748 = vld [vmem:[%s1 + $0xa70] sm:$0xff]
  %v749 = vld [vmem:[%s1 + $0xa78] sm:$0xff]
  %v750 = vld [vmem:[%s1 + $0xa80] sm:$0xff]
  %v751 = vld [vmem:[%s1 + $0xa88] sm:$0xff]
  %v752 = vld [vmem:[%s1 + $0xa90] sm:$0xff]
  %v753 = vld [vmem:[%s1 + $0xa98] sm:$0xff]
  %v754 = vld [vmem:[%s1 + $0xaa0] sm:$0xff]
  %v755 = vld [vmem:[%s1 + $0xaa8] sm:$0xff]
  %v756 = vld [vmem:[%s1 + $0xab0] sm:$0xff]
  %v757 = vld [vmem:[%s1 + $0xab8] sm:$0xff]
  %v758 = vld [vmem:[%s1 + $0xac0] sm:$0xff]
  %v759 = vld [vmem:[%s1 + $0xac8] sm:$0xff]
  %v760 = vld [vmem:[%s1 + $0xad0] sm:$0xff]
  %v761 = vld [vmem:[%s1 + $0xad8] sm:$0xff]
  %v762 = vld [vmem:[%s1 + $0xae0] sm:$0xff]
  %v763 = vld [vmem:[%s1 + $0xae8] sm:$0xff]
  %v764 = vld [vmem:[%s1 + $0xaf0] sm:$0xff]
  %v765 = vld [vmem:[%s1 + $0xaf8] sm:$0xff]
  %v766 = vld [vmem:[%s1 + $0xb00] sm:$0xff]
  %v767 = vld [vmem:[%s1 + $0xb08] sm:$0xff]
  %v768 = vld [vmem:[%s1 + $0xb10] sm:$0xff]
  %v769 = vld [vmem:[%s1 + $0xb18] sm:$0xff]
  %v770 = vld [vmem:[%s1 + $0xb20] sm:$0xff]
  %v771 = vld [vmem:[%s1 + $0xb28] sm:$0xff]
  %v772 = vld [vmem:[%s1 + $0xb30] sm:$0xff]
  %v773 = vld [vmem:[%s1 + $0xb38] sm:$0xff]
  %v774 = vld [vmem:[%s1 + $0xb40] sm:$0xff]
  %v775 = vld [vmem:[%s1 + $0xb48] sm:$0xff]
  %v776 = vld [vmem:[%s1 + $0xb50] sm:$0xff]
  %v777 = vld [vmem:[%s1 + $0xb58] sm:$0xff]
  %v778 = vld [vmem:[%s1 + $0xb60] sm:$0xff]
  %v779 = vld [vmem:[%s1 + $0xb68] sm:$0xff]
  %v780 = vld [vmem:[%s1 + $0xb70] sm:$0xff]
  %v781 = vld [vmem:[%s1 + $0xb78] sm:$0xff]
  %v782 = vld [vmem:[%s1 + $0xb80] sm:$0xff]
  %v783 = vld [vmem:[%s1 + $0xb88] sm:$0xff]
  %v784 = vld [vmem:[%s1 + $0xb90] sm:$0xff]
  %v785 = vld [vmem:[%s1 + $0xb98] sm:$0xff]
  %v786 = vld [vmem:[%s1 + $0xba0] sm:$0xff]
  %v787 = vld [vmem:[%s1 + $0xba8] sm:$0xff]
  %v788 = vld [vmem:[%s1 + $0xbb0] sm:$0xff]
  %v789 = vld [vmem:[%s1 + $0xbb8] sm:$0xff]
  %v790 = vld [vmem:[%s1 + $0xbc0] sm:$0xff]
  %v791 = vld [vmem:[%s1 + $0xbc8] sm:$0xff]
  %v792 = vld [vmem:[%s1 + $0xbd0] sm:$0xff]
  %v793 = vld [vmem:[%s1 + $0xbd8] sm:$0xff]
  %v794 = vld [vmem:[%s1 + $0xbe0] sm:$0xff]
  %v795 = vld [vmem:[%s1 + $0xbe8] sm:$0xff]
  %v796 = vld [vmem:[%s1 + $0xbf0] sm:$0xff]
  %v797 = vld [vmem:[%s1 + $0xbf8] sm:$0xff]
  %v798 = vld [vmem:[%s1 + $0xc00] sm:$0xff]
  %v799 = vld [vmem:[%s1 + $0xc08] sm:$0xff]
  %v800 = vld [vmem:[%s1 + $0xc10] sm:$0xff]
  %v801 = vld [vmem:[%s1 + $0xc18] sm:$0xff]
  %v802 = vld [vmem:[%s1 + $0xc20] sm:$0xff]
  %v803 = vld [vmem:[%s1 + $0xc28] sm:$0xff]
  %v804 = vld [vmem:[%s1 + $0xc30] sm:$0xff]
  %v805 = vld [vmem:[%s1 + $0xc38] sm:$0xff]
  %v806 = vld [vmem:[%s1 + $0xc40] sm:$0xff]
  %v807 = vld [vmem:[%s1 + $0xc48] sm:$0xff]
  %v808 = vld [vmem:[%s1 + $0xc50] sm:$0xff]
  %v809 = vld [vmem:[%s1 + $0xc58] sm:$0xff]
  %v810 = vld [vmem:[%s1 + $0xc60] sm:$0xff]
  %v811 = vld [vmem:[%s1 + $0xc68] sm:$0xff]
  %v812 = vld [vmem:[%s1 + $0xc70] sm:$0xff]
  %v813 = vld [vmem:[%s1 + $0xc78] sm:$0xff]
  %v814 = vld [vmem:[%s2] sm:$0x1]
  %v816 = vlaneseq
  %v817 = vshrl.u32 %v816, 7
  %v818 = vsub.s32 0, %v817
  %v819 = vrot.slane %v814, %v818
  %821 = vmatprep.subr.mxu0 0.0
  %822 = vmatpush1.msra.mxu0 %v414
  %823 = vmatprep.subr.mxu0 0.0
  %824 = vmatpush1.msra.mxu0 %v415
  %825 = vmatprep.subr.mxu0 0.0
  %826 = vmatpush1.msra.mxu0 %v416
  %827 = vmatprep.subr.mxu0 0.0
  %828 = vmatpush1.msra.mxu0 %v417
  %829 = vmatprep.subr.mxu0 0.0
  %830 = vmatpush1.msra.mxu0 %v418
  %831 = vmatprep.subr.mxu0 0.0
  %832 = vmatpush1.msra.mxu0 %v419
  %833 = vmatprep.subr.mxu0 0.0
  %834 = vmatpush1.msra.mxu0 %v420
  %835 = vmatprep.subr.mxu0 0.0
  %836 = vmatpush1.msra.mxu0 %v421
  %837 = vmatprep.subr.mxu0 0.0
  %838 = vmatpush1.msra.mxu0 %v422
  %839 = vmatprep.subr.mxu0 0.0
  %840 = vmatpush1.msra.mxu0 %v423
  %841 = vmatprep.subr.mxu0 0.0
  %842 = vmatpush1.msra.mxu0 %v424
  %843 = vmatprep.subr.mxu0 0.0
  %844 = vmatpush1.msra.mxu0 %v425
  %845 = vmatprep.subr.mxu0 0.0
  %846 = vmatpush1.msra.mxu0 %v426
  %847 = vmatprep.subr.mxu0 0.0
  %848 = vmatpush1.msra.mxu0 %v427
  %849 = vmatprep.subr.mxu0 0.0
  %850 = vmatpush1.msra.mxu0 %v428
  %851 = vmatprep.subr.mxu0 0.0
  %852 = vmatpush1.msra.mxu0 %v429
  %853 = vmatprep.subr.mxu0 0.0
  %854 = vmatpush1.msra.mxu0 %v430
  %855 = vmatprep.subr.mxu0 0.0
  %856 = vmatpush1.msra.mxu0 %v431
  %857 = vmatprep.subr.mxu0 0.0
  %858 = vmatpush1.msra.mxu0 %v432
  %859 = vmatprep.subr.mxu0 0.0
  %860 = vmatpush1.msra.mxu0 %v433
  %861 = vmatprep.subr.mxu0 0.0
  %862 = vmatpush1.msra.mxu0 %v434
  %863 = vmatprep.subr.mxu0 0.0
  %864 = vmatpush1.msra.mxu0 %v435
  %865 = vmatprep.subr.mxu0 0.0
  %866 = vmatpush1.msra.mxu0 %v436
  %867 = vmatprep.subr.mxu0 0.0
  %868 = vmatpush1.msra.mxu0 %v437
  %869 = vmatprep.subr.mxu0 0.0
  %870 = vmatpush1.msra.mxu0 %v438
  %871 = vmatprep.subr.mxu0 0.0
  %872 = vmatpush1.msra.mxu0 %v439
  %873 = vmatprep.subr.mxu0 0.0
  %874 = vmatpush1.msra.mxu0 %v440
  %875 = vmatprep.subr.mxu0 0.0
  %876 = vmatpush1.msra.mxu0 %v441
  %877 = vmatprep.subr.mxu0 0.0
  %878 = vmatpush1.msra.mxu0 %v442
  %879 = vmatprep.subr.mxu0 0.0
  %880 = vmatpush1.msra.mxu0 %v443
  %881 = vmatprep.subr.mxu0 0.0
  %882 = vmatpush1.msra.mxu0 %v444
  %883 = vmatprep.subr.mxu0 0.0
  %884 = vmatpush1.msra.mxu0 %v445
  %885 = vmatprep.mubr.f32.mxu0 %v15
  %886 = vmatmul.mubr.f32.gmra.mrb[0].mxu0 %v14
  %v887 = vpop.f32.mrb[0].mxu0
  %v888 = vadd.f32 %v819, %v887
  %v889 = vpop.f32.mrb[0].mxu0
  %890 = vmatprep.mubr.f32.mxu0 %v40
  %891 = vmatmul.mubr.f32.gmra.mrb[0].mxu0 %v39
  %v892 = vpop.f32.mrb[0].mxu0
  %v893 = vadd.f32 %v819, %v892
  %v894 = vpop.f32.mrb[0].mxu0
  %895 = vmatprep.mubr.f32.mxu0 %v65
  %896 = vmatmul.mubr.f32.gmra.mrb[0].mxu0 %v64
  %v897 = vpop.f32.mrb[0].mxu0
  %v898 = vadd.f32 %v819, %v897
  %v899 = vpop.f32.mrb[0].mxu0
  %900 = vmatprep.mubr.f32.mxu0 %v90
  %901 = vmatmul.mubr.f32.gmra.mrb[0].mxu0 %v89
  %v902 = vpop.f32.mrb[0].mxu0
  %v903 = vadd.f32 %v819, %v902
  %v904 = vpop.f32.mrb[0].mxu0
  %905 = vmatprep.mubr.f32.mxu0 %v115
  %906 = vmatmul.mubr.f32.gmra.mrb[0].mxu0 %v114
  %v907 = vpop.f32.mrb[0].mxu0
  %v908 = vadd.f32 %v819, %v907
  %v909 = vpop.f32.mrb[0].mxu0
  %910 = vmatprep.mubr.f32.mxu0 %v140
  %911 = vmatmul.mubr.f32.gmra.mrb[0].mxu0 %v139
  %v912 = vpop.f32.mrb[0].mxu0
  %v913 = vadd.f32 %v819, %v912
  %v914 = vpop.f32.mrb[0].mxu0
  %915 = vmatprep.mubr.f32.mxu0 %v165
  %916 = vmatmul.mubr.f32.gmra.mrb[0].mxu0 %v164
  %v917 = vpop.f32.mrb[0].mxu0
  %v918 = vadd.f32 %v819, %v917
  %v919 = vpop.f32.mrb[0].mxu0
  %920 = vmatprep.mubr.f32.mxu0 %v190
  %921 = vmatmul.mubr.f32.gmra.mrb[0].mxu0 %v189
  %v922 = vpop.f32.mrb[0].mxu0
  %v923 = vadd.f32 %v819, %v922
  %v924 = vpop.f32.mrb[0].mxu0
  %925 = vmatprep.mubr.f32.mxu0 %v215
  %926 = vmatmul.mubr.f32.gmra.mrb[0].mxu0 %v214
  %v927 = vpop.f32.mrb[0].mxu0
  %v928 = vadd.f32 %v819, %v927
  %v929 = vpop.f32.mrb[0].mxu0
  %930 = vmatprep.mubr.f32.mxu0 %v240
  %931 = vmatmul.mubr.f32.gmra.mrb[0].mxu0 %v239
  %v932 = vpop.f32.mrb[0].mxu0
  %v933 = vadd.f32 %v819, %v932
  %v934 = vpop.f32.mrb[0].mxu0
  %935 = vmatprep.mubr.f32.mxu0 %v265
  %936 = vmatmul.mubr.f32.gmra.mrb[0].mxu0 %v264
  %v937 = vpop.f32.mrb[0].mxu0
  %v938 = vadd.f32 %v819, %v937
  %v939 = vpop.f32.mrb[0].mxu0
  %940 = vmatprep.mubr.f32.mxu0 %v290
  %941 = vmatmul.mubr.f32.gmra.mrb[0].mxu0 %v289
  %v942 = vpop.f32.mrb[0].mxu0
  %v943 = vadd.f32 %v819, %v942
  %v944 = vpop.f32.mrb[0].mxu0
  %945 = vmatprep.mubr.f32.mxu0 %v315
  %946 = vmatmul.mubr.f32.gmra.mrb[0].mxu0 %v314
  %v947 = vpop.f32.mrb[0].mxu0
  %v948 = vadd.f32 %v819, %v947
  %v949 = vpop.f32.mrb[0].mxu0
  %950 = vmatprep.mubr.f32.mxu0 %v340
  %951 = vmatmul.mubr.f32.gmra.mrb[0].mxu0 %v339
  %v952 = vpop.f32.mrb[0].mxu0
  %v953 = vadd.f32 %v819, %v952
  %v954 = vpop.f32.mrb[0].mxu0
  %955 = vmatprep.mubr.f32.mxu0 %v365
  %956 = vmatmul.mubr.f32.gmra.mrb[0].mxu0 %v364
  %v957 = vpop.f32.mrb[0].mxu0
  %v958 = vadd.f32 %v819, %v957
  %v959 = vpop.f32.mrb[0].mxu0
  %960 = vmatprep.mubr.f32.mxu0 %v390
  %961 = vmatmul.mubr.f32.gmra.mrb[0].mxu0 %v389
  %v962 = vpop.f32.mrb[0].mxu0
  %v963 = vadd.f32 %v819, %v962
  %v964 = vpop.f32.mrb[0].mxu0
  %965 = vdwg.mxu0
  %966 = vmatprep.subr.mxu0 0.0
  %967 = vmatpush1.msra.mxu0 %v446
  %968 = vmatprep.subr.mxu0 0.0
  %969 = vmatpush1.msra.mxu0 %v447
  %970 = vmatprep.subr.mxu0 0.0
  %971 = vmatpush1.msra.mxu0 %v448
  %972 = vmatprep.subr.mxu0 0.0
  %973 = vmatpush1.msra.mxu0 %v449
  %974 = vmatprep.subr.mxu0 0.0
  %975 = vmatpush1.msra.mxu0 %v450
  %976 = vmatprep.subr.mxu0 0.0
  %977 = vmatpush1.msra.mxu0 %v451
  %978 = vmatprep.subr.mxu0 0.0
  %979 = vmatpush1.msra.mxu0 %v452
  %980 = vmatprep.subr.mxu0 0.0
  %981 = vmatpush1.msra.mxu0 %v453
  %982 = vmatprep.subr.mxu0 0.0
  %983 = vmatpush1.msra.mxu0 %v454
  %984 = vmatprep.subr.mxu0 0.0
  %985 = vmatpush1.msra.mxu0 %v455
  %986 = vmatprep.subr.mxu0 0.0
  %987 = vmatpush1.msra.mxu0 %v456
  %988 = vmatprep.subr.mxu0 0.0
  %989 = vmatpush1.msra.mxu0 %v457
  %990 = vmatprep.subr.mxu0 0.0
  %991 = vmatpush1.msra.mxu0 %v458
  %992 = vmatprep.subr.mxu0 0.0
  %993 = vmatpush1.msra.mxu0 %v459
  %994 = vmatprep.subr.mxu0 0.0
  %995 = vmatpush1.msra.mxu0 %v460
  %996 = vmatprep.subr.mxu0 0.0
  %997 = vmatpush1.msra.mxu0 %v461
  %998 = vmatprep.subr.mxu0 0.0
  %999 = vmatpush1.msra.mxu0 %v462
  %1000 = vmatprep.subr.mxu0 0.0
  %1001 = vmatpush1.msra.mxu0 %v463
  %1002 = vmatprep.subr.mxu0 0.0
  %1003 = vmatpush1.msra.mxu0 %v464
  %1004 = vmatprep.subr.mxu0 0.0
  %1005 = vmatpush1.msra.mxu0 %v465
  %1006 = vmatprep.subr.mxu0 0.0
  %1007 = vmatpush1.msra.mxu0 %v466
  %1008 = vmatprep.subr.mxu0 0.0
  %1009 = vmatpush1.msra.mxu0 %v467
  %1010 = vmatprep.subr.mxu0 0.0
  %1011 = vmatpush1.msra.mxu0 %v468
  %1012 = vmatprep.subr.mxu0 0.0
  %1013 = vmatpush1.msra.mxu0 %v469
  %1014 = vmatprep.subr.mxu0 0.0
  %1015 = vmatpush1.msra.mxu0 %v470
  %1016 = vmatprep.subr.mxu0 0.0
  %1017 = vmatpush1.msra.mxu0 %v471
  %1018 = vmatprep.subr.mxu0 0.0
  %1019 = vmatpush1.msra.mxu0 %v472
  %1020 = vmatprep.subr.mxu0 0.0
  %1021 = vmatpush1.msra.mxu0 %v473
  %1022 = vmatprep.subr.mxu0 0.0
  %1023 = vmatpush1.msra.mxu0 %v474
  %1024 = vmatprep.subr.mxu0 0.0
  %1025 = vmatpush1.msra.mxu0 %v475
  %1026 = vmatprep.subr.mxu0 0.0
  %1027 = vmatpush1.msra.mxu0 %v476
  %1028 = vmatprep.subr.mxu0 0.0
  %1029 = vmatpush1.msra.mxu0 %v477
  %1030 = vmatprep.mubr.f32.mxu0 %v17
  %1031 = vmatmul.mubr.f32.gmra.mrb[0].mxu0 %v16
  %v1032 = vpop.f32.mrb[0].mxu0
  %v1033 = vadd.f32 %v888, %v1032
  %v1034 = vpop.f32.mrb[0].mxu0
  %1035 = vmatprep.mubr.f32.mxu0 %v42
  %1036 = vmatmul.mubr.f32.gmra.mrb[0].mxu0 %v41
  %v1037 = vpop.f32.mrb[0].mxu0
  %v1038 = vadd.f32 %v893, %v1037
  %v1039 = vpop.f32.mrb[0].mxu0
  %1040 = vmatprep.mubr.f32.mxu0 %v67
  %1041 = vmatmul.mubr.f32.gmra.mrb[0].mxu0 %v66
  %v1042 = vpop.f32.mrb[0].mxu0
  %v1043 = vadd.f32 %v898, %v1042
  %v1044 = vpop.f32.mrb[0].mxu0
  %1045 = vmatprep.mubr.f32.mxu0 %v92
  %1046 = vmatmul.mubr.f32.gmra.mrb[0].mxu0 %v91
  %v1047 = vpop.f32.mrb[0].mxu0
  %v1048 = vadd.f32 %v903, %v1047
  %v1049 = vpop.f32.mrb[0].mxu0
  %1050 = vmatprep.mubr.f32.mxu0 %v117
  %1051 = vmatmul.mubr.f32.gmra.mrb[0].mxu0 %v116
  %v1052 = vpop.f32.mrb[0].mxu0
  %v1053 = vadd.f32 %v908, %v1052
  %v1054 = vpop.f32.mrb[0].mxu0
  %1055 = vmatprep.mubr.f32.mxu0 %v142
  %1056 = vmatmul.mubr.f32.gmra.mrb[0].mxu0 %v141
  %v1057 = vpop.f32.mrb[0].mxu0
  %v1058 = vadd.f32 %v913, %v1057
  %v1059 = vpop.f32.mrb[0].mxu0
  %1060 = vmatprep.mubr.f32.mxu0 %v167
  %1061 = vmatmul.mubr.f32.gmra.mrb[0].mxu0 %v166
  %v1062 = vpop.f32.mrb[0].mxu0
  %v1063 = vadd.f32 %v918, %v1062
  %v1064 = vpop.f32.mrb[0].mxu0
  %1065 = vmatprep.mubr.f32.mxu0 %v192
  %1066 = vmatmul.mubr.f32.gmra.mrb[0].mxu0 %v191
  %v1067 = vpop.f32.mrb[0].mxu0
  %v1068 = vadd.f32 %v923, %v1067
  %v1069 = vpop.f32.mrb[0].mxu0
  %1070 = vmatprep.mubr.f32.mxu0 %v217
  %1071 = vmatmul.mubr.f32.gmra.mrb[0].mxu0 %v216
  %v1072 = vpop.f32.mrb[0].mxu0
  %v1073 = vadd.f32 %v928, %v1072
  %v1074 = vpop.f32.mrb[0].mxu0
  %1075 = vmatprep.mubr.f32.mxu0 %v242
  %1076 = vmatmul.mubr.f32.gmra.mrb[0].mxu0 %v241
  %v1077 = vpop.f32.mrb[0].mxu0
  %v1078 = vadd.f32 %v933, %v1077
  %v1079 = vpop.f32.mrb[0].mxu0
  %1080 = vmatprep.mubr.f32.mxu0 %v267
  %1081 = vmatmul.mubr.f32.gmra.mrb[0].mxu0 %v266
  %v1082 = vpop.f32.mrb[0].mxu0
  %v1083 = vadd.f32 %v938, %v1082
  %v1084 = vpop.f32.mrb[0].mxu0
  %1085 = vmatprep.mubr.f32.mxu0 %v292
  %1086 = vmatmul.mubr.f32.gmra.mrb[0].mxu0 %v291
  %v1087 = vpop.f32.mrb[0].mxu0
  %v1088 = vadd.f32 %v943, %v1087
  %v1089 = vpop.f32.mrb[0].mxu0
  %1090 = vmatprep.mubr.f32.mxu0 %v317
  %1091 = vmatmul.mubr.f32.gmra.mrb[0].mxu0 %v316
  %v1092 = vpop.f32.mrb[0].mxu0
  %v1093 = vadd.f32 %v948, %v1092
  %v1094 = vpop.f32.mrb[0].mxu0
  %1095 = vmatprep.mubr.f32.mxu0 %v342
  %1096 = vmatmul.mubr.f32.gmra.mrb[0].mxu0 %v341
  %v1097 = vpop.f32.mrb[0].mxu0
  %v1098 = vadd.f32 %v953, %v1097
  %v1099 = vpop.f32.mrb[0].mxu0
  %1100 = vmatprep.mubr.f32.mxu0 %v367
  %1101 = vmatmul.mubr.f32.gmra.mrb[0].mxu0 %v366
  %v1102 = vpop.f32.mrb[0].mxu0
  %v1103 = vadd.f32 %v958, %v1102
  %v1104 = vpop.f32.mrb[0].mxu0
  %1105 = vmatprep.mubr.f32.mxu0 %v392
  %1106 = vmatmul.mubr.f32.gmra.mrb[0].mxu0 %v391
  %v1107 = vpop.f32.mrb[0].mxu0
  %v1108 = vadd.f32 %v963, %v1107
  %v1109 = vpop.f32.mrb[0].mxu0
  %1110 = vdwg.mxu0
  %1111 = vmatprep.subr.mxu0 0.0
  %1112 = vmatpush1.msra.mxu0 %v478
  %1113 = vmatprep.subr.mxu0 0.0
  %1114 = vmatpush1.msra.mxu0 %v479
  %1115 = vmatprep.subr.mxu0 0.0
  %1116 = vmatpush1.msra.mxu0 %v480
  %1117 = vmatprep.subr.mxu0 0.0
  %1118 = vmatpush1.msra.mxu0 %v481
  %1119 = vmatprep.subr.mxu0 0.0
  %1120 = vmatpush1.msra.mxu0 %v482
  %1121 = vmatprep.subr.mxu0 0.0
  %1122 = vmatpush1.msra.mxu0 %v483
  %1123 = vmatprep.subr.mxu0 0.0
  %1124 = vmatpush1.msra.mxu0 %v484
  %1125 = vmatprep.subr.mxu0 0.0
  %1126 = vmatpush1.msra.mxu0 %v485
  %1127 = vmatprep.subr.mxu0 0.0
  %1128 = vmatpush1.msra.mxu0 %v486
  %1129 = vmatprep.subr.mxu0 0.0
  %1130 = vmatpush1.msra.mxu0 %v487
  %1131 = vmatprep.subr.mxu0 0.0
  %1132 = vmatpush1.msra.mxu0 %v488
  %1133 = vmatprep.subr.mxu0 0.0
  %1134 = vmatpush1.msra.mxu0 %v489
  %1135 = vmatprep.subr.mxu0 0.0
  %1136 = vmatpush1.msra.mxu0 %v490
  %1137 = vmatprep.subr.mxu0 0.0
  %1138 = vmatpush1.msra.mxu0 %v491
  %1139 = vmatprep.subr.mxu0 0.0
  %1140 = vmatpush1.msra.mxu0 %v492
  %1141 = vmatprep.subr.mxu0 0.0
  %1142 = vmatpush1.msra.mxu0 %v493
  %1143 = vmatprep.subr.mxu0 0.0
  %1144 = vmatpush1.msra.mxu0 %v494
  %1145 = vmatprep.subr.mxu0 0.0
  %1146 = vmatpush1.msra.mxu0 %v495
  %1147 = vmatprep.subr.mxu0 0.0
  %1148 = vmatpush1.msra.mxu0 %v496
  %1149 = vmatprep.subr.mxu0 0.0
  %1150 = vmatpush1.msra.mxu0 %v497
  %1151 = vmatprep.subr.mxu0 0.0
  %1152 = vmatpush1.msra.mxu0 %v498
  %1153 = vmatprep.subr.mxu0 0.0
  %1154 = vmatpush1.msra.mxu0 %v499
  %1155 = vmatprep.subr.mxu0 0.0
  %1156 = vmatpush1.msra.mxu0 %v500
  %1157 = vmatprep.subr.mxu0 0.0
  %1158 = vmatpush1.msra.mxu0 %v501
  %1159 = vmatprep.subr.mxu0 0.0
  %1160 = vmatpush1.msra.mxu0 %v502
  %1161 = vmatprep.subr.mxu0 0.0
  %1162 = vmatpush1.msra.mxu0 %v503
  %1163 = vmatprep.subr.mxu0 0.0
  %1164 = vmatpush1.msra.mxu0 %v504
  %1165 = vmatprep.subr.mxu0 0.0
  %1166 = vmatpush1.msra.mxu0 %v505
  %1167 = vmatprep.subr.mxu0 0.0
  %1168 = vmatpush1.msra.mxu0 %v506
  %1169 = vmatprep.subr.mxu0 0.0
  %1170 = vmatpush1.msra.mxu0 %v507
  %1171 = vmatprep.subr.mxu0 0.0
  %1172 = vmatpush1.msra.mxu0 %v508
  %1173 = vmatprep.subr.mxu0 0.0
  %1174 = vmatpush1.msra.mxu0 %v509
  %1175 = vmatprep.mubr.f32.mxu0 %v19
  %1176 = vmatmul.mubr.f32.gmra.mrb[0].mxu0 %v18
  %v1177 = vpop.f32.mrb[0].mxu0
  %v1178 = vadd.f32 %v1033, %v1177
  %v1179 = vpop.f32.mrb[0].mxu0
  %1180 = vmatprep.mubr.f32.mxu0 %v44
  %1181 = vmatmul.mubr.f32.gmra.mrb[0].mxu0 %v43
  %v1182 = vpop.f32.mrb[0].mxu0
  %v1183 = vadd.f32 %v1038, %v1182
  %v1184 = vpop.f32.mrb[0].mxu0
  %1185 = vmatprep.mubr.f32.mxu0 %v69
  %1186 = vmatmul.mubr.f32.gmra.mrb[0].mxu0 %v68
  %v1187 = vpop.f32.mrb[0].mxu0
  %v1188 = vadd.f32 %v1043, %v1187
  %v1189 = vpop.f32.mrb[0].mxu0
  %1190 = vmatprep.mubr.f32.mxu0 %v94
  %1191 = vmatmul.mubr.f32.gmra.mrb[0].mxu0 %v93
  %v1192 = vpop.f32.mrb[0].mxu0
  %v1193 = vadd.f32 %v1048, %v1192
  %v1194 = vpop.f32.mrb[0].mxu0
  %1195 = vmatprep.mubr.f32.mxu0 %v119
  %1196 = vmatmul.mubr.f32.gmra.mrb[0].mxu0 %v118
  %v1197 = vpop.f32.mrb[0].mxu0
  %v1198 = vadd.f32 %v1053, %v1197
  %v1199 = vpop.f32.mrb[0].mxu0
  %1200 = vmatprep.mubr.f32.mxu0 %v144
  %1201 = vmatmul.mubr.f32.gmra.mrb[0].mxu0 %v143
  %v1202 = vpop.f32.mrb[0].mxu0
  %v1203 = vadd.f32 %v1058, %v1202
  %v1204 = vpop.f32.mrb[0].mxu0
  %1205 = vmatprep.mubr.f32.mxu0 %v169
  %1206 = vmatmul.mubr.f32.gmra.mrb[0].mxu0 %v168
  %v1207 = vpop.f32.mrb[0].mxu0
  %v1208 = vadd.f32 %v1063, %v1207
  %v1209 = vpop.f32.mrb[0].mxu0
  %1210 = vmatprep.mubr.f32.mxu0 %v194
  %1211 = vmatmul.mubr.f32.gmra.mrb[0].mxu0 %v193
  %v1212 = vpop.f32.mrb[0].mxu0
  %v1213 = vadd.f32 %v1068, %v1212
  %v1214 = vpop.f32.mrb[0].mxu0
  %1215 = vmatprep.mubr.f32.mxu0 %v219
  %1216 = vmatmul.mubr.f32.gmra.mrb[0].mxu0 %v218
  %v1217 = vpop.f32.mrb[0].mxu0
  %v1218 = vadd.f32 %v1073, %v1217
  %v1219 = vpop.f32.mrb[0].mxu0
  %1220 = vmatprep.mubr.f32.mxu0 %v244
  %1221 = vmatmul.mubr.f32.gmra.mrb[0].mxu0 %v243
  %v1222 = vpop.f32.mrb[0].mxu0
  %v1223 = vadd.f32 %v1078, %v1222
  %v1224 = vpop.f32.mrb[0].mxu0
  %1225 = vmatprep.mubr.f32.mxu0 %v269
  %1226 = vmatmul.mubr.f32.gmra.mrb[0].mxu0 %v268
  %v1227 = vpop.f32.mrb[0].mxu0
  %v1228 = vadd.f32 %v1083, %v1227
  %v1229 = vpop.f32.mrb[0].mxu0
  %1230 = vmatprep.mubr.f32.mxu0 %v294
  %1231 = vmatmul.mubr.f32.gmra.mrb[0].mxu0 %v293
  %v1232 = vpop.f32.mrb[0].mxu0
  %v1233 = vadd.f32 %v1088, %v1232
  %v1234 = vpop.f32.mrb[0].mxu0
  %1235 = vmatprep.mubr.f32.mxu0 %v319
  %1236 = vmatmul.mubr.f32.gmra.mrb[0].mxu0 %v318
  %v1237 = vpop.f32.mrb[0].mxu0
  %v1238 = vadd.f32 %v1093, %v1237
  %v1239 = vpop.f32.mrb[0].mxu0
  %1240 = vmatprep.mubr.f32.mxu0 %v344
  %1241 = vmatmul.mubr.f32.gmra.mrb[0].mxu0 %v343
  %v1242 = vpop.f32.mrb[0].mxu0
  %v1243 = vadd.f32 %v1098, %v1242
  %v1244 = vpop.f32.mrb[0].mxu0
  %1245 = vmatprep.mubr.f32.mxu0 %v369
  %1246 = vmatmul.mubr.f32.gmra.mrb[0].mxu0 %v368
  %v1247 = vpop.f32.mrb[0].mxu0
  %v1248 = vadd.f32 %v1103, %v1247
  %v1249 = vpop.f32.mrb[0].mxu0
  %1250 = vmatprep.mubr.f32.mxu0 %v394
  %1251 = vmatmul.mubr.f32.gmra.mrb[0].mxu0 %v393
  %v1252 = vpop.f32.mrb[0].mxu0
  %v1253 = vadd.f32 %v1108, %v1252
  %v1254 = vpop.f32.mrb[0].mxu0
  %1255 = vdwg.mxu0
  %1256 = vmatprep.subr.mxu0 0.0
  %1257 = vmatpush1.msra.mxu0 %v510
  %1258 = vmatprep.subr.mxu0 0.0
  %1259 = vmatpush1.msra.mxu0 %v511
  %1260 = vmatprep.subr.mxu0 0.0
  %1261 = vmatpush1.msra.mxu0 %v512
  %1262 = vmatprep.subr.mxu0 0.0
  %1263 = vmatpush1.msra.mxu0 %v513
  %1264 = vmatprep.subr.mxu0 0.0
  %1265 = vmatpush1.msra.mxu0 %v514
  %1266 = vmatprep.subr.mxu0 0.0
  %1267 = vmatpush1.msra.mxu0 %v515
  %1268 = vmatprep.subr.mxu0 0.0
  %1269 = vmatpush1.msra.mxu0 %v516
  %1270 = vmatprep.subr.mxu0 0.0
  %1271 = vmatpush1.msra.mxu0 %v517
  %1272 = vmatprep.subr.mxu0 0.0
  %1273 = vmatpush1.msra.mxu0 %v518
  %1274 = vmatprep.subr.mxu0 0.0
  %1275 = vmatpush1.msra.mxu0 %v519
  %1276 = vmatprep.subr.mxu0 0.0
  %1277 = vmatpush1.msra.mxu0 %v520
  %1278 = vmatprep.subr.mxu0 0.0
  %1279 = vmatpush1.msra.mxu0 %v521
  %1280 = vmatprep.subr.mxu0 0.0
  %1281 = vmatpush1.msra.mxu0 %v522
  %1282 = vmatprep.subr.mxu0 0.0
  %1283 = vmatpush1.msra.mxu0 %v523
  %1284 = vmatprep.subr.mxu0 0.0
  %1285 = vmatpush1.msra.mxu0 %v524
  %1286 = vmatprep.subr.mxu0 0.0
  %1287 = vmatpush1.msra.mxu0 %v525
  %1288 = vmatprep.subr.mxu0 0.0
  %1289 = vmatpush1.msra.mxu0 %v526
  %1290 = vmatprep.subr.mxu0 0.0
  %1291 = vmatpush1.msra.mxu0 %v527
  %1292 = vmatprep.subr.mxu0 0.0
  %1293 = vmatpush1.msra.mxu0 %v528
  %1294 = vmatprep.subr.mxu0 0.0
  %1295 = vmatpush1.msra.mxu0 %v529
  %1296 = vmatprep.subr.mxu0 0.0
  %1297 = vmatpush1.msra.mxu0 %v530
  %1298 = vmatprep.subr.mxu0 0.0
  %1299 = vmatpush1.msra.mxu0 %v531
  %1300 = vmatprep.subr.mxu0 0.0
  %1301 = vmatpush1.msra.mxu0 %v532
  %1302 = vmatprep.subr.mxu0 0.0
  %1303 = vmatpush1.msra.mxu0 %v533
  %1304 = vmatprep.subr.mxu0 0.0
  %1305 = vmatpush1.msra.mxu0 %v534
  %1306 = vmatprep.subr.mxu0 0.0
  %1307 = vmatpush1.msra.mxu0 %v535
  %1308 = vmatprep.subr.mxu0 0.0
  %1309 = vmatpush1.msra.mxu0 %v536
  %1310 = vmatprep.subr.mxu0 0.0
  %1311 = vmatpush1.msra.mxu0 %v537
  %1312 = vmatprep.subr.mxu0 0.0
  %1313 = vmatpush1.msra.mxu0 %v538
  %1314 = vmatprep.subr.mxu0 0.0
  %1315 = vmatpush1.msra.mxu0 %v539
  %1316 = vmatprep.subr.mxu0 0.0
  %1317 = vmatpush1.msra.mxu0 %v540
  %1318 = vmatprep.subr.mxu0 0.0
  %1319 = vmatpush1.msra.mxu0 %v541
  %1320 = vmatprep.mubr.f32.mxu0 %v21
  %1321 = vmatmul.mubr.f32.gmra.mrb[0].mxu0 %v20
  %v1322 = vpop.f32.mrb[0].mxu0
  %v1323 = vadd.f32 %v1178, %v1322
  %v1324 = vpop.f32.mrb[0].mxu0
  %1325 = vmatprep.mubr.f32.mxu0 %v46
  %1326 = vmatmul.mubr.f32.gmra.mrb[0].mxu0 %v45
  %v1327 = vpop.f32.mrb[0].mxu0
  %v1328 = vadd.f32 %v1183, %v1327
  %v1329 = vpop.f32.mrb[0].mxu0
  %1330 = vmatprep.mubr.f32.mxu0 %v71
  %1331 = vmatmul.mubr.f32.gmra.mrb[0].mxu0 %v70
  %v1332 = vpop.f32.mrb[0].mxu0
  %v1333 = vadd.f32 %v1188, %v1332
  %v1334 = vpop.f32.mrb[0].mxu0
  %1335 = vmatprep.mubr.f32.mxu0 %v96
  %1336 = vmatmul.mubr.f32.gmra.mrb[0].mxu0 %v95
  %v1337 = vpop.f32.mrb[0].mxu0
  %v1338 = vadd.f32 %v1193, %v1337
  %v1339 = vpop.f32.mrb[0].mxu0
  %1340 = vmatprep.mubr.f32.mxu0 %v121
  %1341 = vmatmul.mubr.f32.gmra.mrb[0].mxu0 %v120
  %v1342 = vpop.f32.mrb[0].mxu0
  %v1343 = vadd.f32 %v1198, %v1342
  %v1344 = vpop.f32.mrb[0].mxu0
  %1345 = vmatprep.mubr.f32.mxu0 %v146
  %1346 = vmatmul.mubr.f32.gmra.mrb[0].mxu0 %v145
  %v1347 = vpop.f32.mrb[0].mxu0
  %v1348 = vadd.f32 %v1203, %v1347
  %v1349 = vpop.f32.mrb[0].mxu0
  %1350 = vmatprep.mubr.f32.mxu0 %v171
  %1351 = vmatmul.mubr.f32.gmra.mrb[0].mxu0 %v170
  %v1352 = vpop.f32.mrb[0].mxu0
  %v1353 = vadd.f32 %v1208, %v1352
  %v1354 = vpop.f32.mrb[0].mxu0
  %1355 = vmatprep.mubr.f32.mxu0 %v196
  %1356 = vmatmul.mubr.f32.gmra.mrb[0].mxu0 %v195
  %v1357 = vpop.f32.mrb[0].mxu0
  %v1358 = vadd.f32 %v1213, %v1357
  %v1359 = vpop.f32.mrb[0].mxu0
  %1360 = vmatprep.mubr.f32.mxu0 %v221
  %1361 = vmatmul.mubr.f32.gmra.mrb[0].mxu0 %v220
  %v1362 = vpop.f32.mrb[0].mxu0
  %v1363 = vadd.f32 %v1218, %v1362
  %v1364 = vpop.f32.mrb[0].mxu0
  %1365 = vmatprep.mubr.f32.mxu0 %v246
  %1366 = vmatmul.mubr.f32.gmra.mrb[0].mxu0 %v245
  %v1367 = vpop.f32.mrb[0].mxu0
  %v1368 = vadd.f32 %v1223, %v1367
  %v1369 = vpop.f32.mrb[0].mxu0
  %1370 = vmatprep.mubr.f32.mxu0 %v271
  %1371 = vmatmul.mubr.f32.gmra.mrb[0].mxu0 %v270
  %v1372 = vpop.f32.mrb[0].mxu0
  %v1373 = vadd.f32 %v1228, %v1372
  %v1374 = vpop.f32.mrb[0].mxu0
  %1375 = vmatprep.mubr.f32.mxu0 %v296
  %1376 = vmatmul.mubr.f32.gmra.mrb[0].mxu0 %v295
  %v1377 = vpop.f32.mrb[0].mxu0
  %v1378 = vadd.f32 %v1233, %v1377
  %v1379 = vpop.f32.mrb[0].mxu0
  %1380 = vmatprep.mubr.f32.mxu0 %v321
  %1381 = vmatmul.mubr.f32.gmra.mrb[0].mxu0 %v320
  %v1382 = vpop.f32.mrb[0].mxu0
  %v1383 = vadd.f32 %v1238, %v1382
  %v1384 = vpop.f32.mrb[0].mxu0
  %1385 = vmatprep.mubr.f32.mxu0 %v346
  %1386 = vmatmul.mubr.f32.gmra.mrb[0].mxu0 %v345
  %v1387 = vpop.f32.mrb[0].mxu0
  %v1388 = vadd.f32 %v1243, %v1387
  %v1389 = vpop.f32.mrb[0].mxu0
  %1390 = vmatprep.mubr.f32.mxu0 %v371
  %1391 = vmatmul.mubr.f32.gmra.mrb[0].mxu0 %v370
  %v1392 = vpop.f32.mrb[0].mxu0
  %v1393 = vadd.f32 %v1248, %v1392
  %v1394 = vpop.f32.mrb[0].mxu0
  %1395 = vmatprep.mubr.f32.mxu0 %v396
  %1396 = vmatmul.mubr.f32.gmra.mrb[0].mxu0 %v395
  %v1397 = vpop.f32.mrb[0].mxu0
  %v1398 = vadd.f32 %v1253, %v1397
  %v1399 = vpop.f32.mrb[0].mxu0
  %1400 = vdwg.mxu0
  %1401 = vmatprep.subr.mxu0 0.0
  %1402 = vmatpush1.msra.mxu0 %v542
  %1403 = vmatprep.subr.mxu0 0.0
  %1404 = vmatpush1.msra.mxu0 %v543
  %1405 = vmatprep.subr.mxu0 0.0
  %1406 = vmatpush1.msra.mxu0 %v544
  %1407 = vmatprep.subr.mxu0 0.0
  %1408 = vmatpush1.msra.mxu0 %v545
  %1409 = vmatprep.subr.mxu0 0.0
  %1410 = vmatpush1.msra.mxu0 %v546
  %1411 = vmatprep.subr.mxu0 0.0
  %1412 = vmatpush1.msra.mxu0 %v547
  %1413 = vmatprep.subr.mxu0 0.0
  %1414 = vmatpush1.msra.mxu0 %v548
  %1415 = vmatprep.subr.mxu0 0.0
  %1416 = vmatpush1.msra.mxu0 %v549
  %1417 = vmatprep.subr.mxu0 0.0
  %1418 = vmatpush1.msra.mxu0 %v550
  %1419 = vmatprep.subr.mxu0 0.0
  %1420 = vmatpush1.msra.mxu0 %v551
  %1421 = vmatprep.subr.mxu0 0.0
  %1422 = vmatpush1.msra.mxu0 %v552
  %1423 = vmatprep.subr.mxu0 0.0
  %1424 = vmatpush1.msra.mxu0 %v553
  %1425 = vmatprep.subr.mxu0 0.0
  %1426 = vmatpush1.msra.mxu0 %v554
  %1427 = vmatprep.subr.mxu0 0.0
  %1428 = vmatpush1.msra.mxu0 %v555
  %1429 = vmatprep.subr.mxu0 0.0
  %1430 = vmatpush1.msra.mxu0 %v556
  %1431 = vmatprep.subr.mxu0 0.0
  %1432 = vmatpush1.msra.mxu0 %v557
  %1433 = vmatprep.subr.mxu0 0.0
  %1434 = vmatpush1.msra.mxu0 %v558
  %1435 = vmatprep.subr.mxu0 0.0
  %1436 = vmatpush1.msra.mxu0 %v559
  %1437 = vmatprep.subr.mxu0 0.0
  %1438 = vmatpush1.msra.mxu0 %v560
  %1439 = vmatprep.subr.mxu0 0.0
  %1440 = vmatpush1.msra.mxu0 %v561
  %1441 = vmatprep.subr.mxu0 0.0
  %1442 = vmatpush1.msra.mxu0 %v562
  %1443 = vmatprep.subr.mxu0 0.0
  %1444 = vmatpush1.msra.mxu0 %v563
  %1445 = vmatprep.subr.mxu0 0.0
  %1446 = vmatpush1.msra.mxu0 %v564
  %1447 = vmatprep.subr.mxu0 0.0
  %1448 = vmatpush1.msra.mxu0 %v565
  %1449 = vmatprep.subr.mxu0 0.0
  %1450 = vmatpush1.msra.mxu0 %v566
  %1451 = vmatprep.subr.mxu0 0.0
  %1452 = vmatpush1.msra.mxu0 %v567
  %1453 = vmatprep.subr.mxu0 0.0
  %1454 = vmatpush1.msra.mxu0 %v568
  %1455 = vmatprep.subr.mxu0 0.0
  %1456 = vmatpush1.msra.mxu0 %v569
  %1457 = vmatprep.subr.mxu0 0.0
  %1458 = vmatpush1.msra.mxu0 %v570
  %1459 = vmatprep.subr.mxu0 0.0
  %1460 = vmatpush1.msra.mxu0 %v571
  %1461 = vmatprep.subr.mxu0 0.0
  %1462 = vmatpush1.msra.mxu0 %v572
  %1463 = vmatprep.subr.mxu0 0.0
  %1464 = vmatpush1.msra.mxu0 %v573
  %1465 = vmatprep.mubr.f32.mxu0 %v23
  %1466 = vmatmul.mubr.f32.gmra.mrb[0].mxu0 %v22
  %v1467 = vpop.f32.mrb[0].mxu0
  %v1468 = vadd.f32 %v1323, %v1467
  %v1469 = vpop.f32.mrb[0].mxu0
  %1470 = vmatprep.mubr.f32.mxu0 %v48
  %1471 = vmatmul.mubr.f32.gmra.mrb[0].mxu0 %v47
  %v1472 = vpop.f32.mrb[0].mxu0
  %v1473 = vadd.f32 %v1328, %v1472
  %v1474 = vpop.f32.mrb[0].mxu0
  %1475 = vmatprep.mubr.f32.mxu0 %v73
  %1476 = vmatmul.mubr.f32.gmra.mrb[0].mxu0 %v72
  %v1477 = vpop.f32.mrb[0].mxu0
  %v1478 = vadd.f32 %v1333, %v1477
  %v1479 = vpop.f32.mrb[0].mxu0
  %1480 = vmatprep.mubr.f32.mxu0 %v98
  %1481 = vmatmul.mubr.f32.gmra.mrb[0].mxu0 %v97
  %v1482 = vpop.f32.mrb[0].mxu0
  %v1483 = vadd.f32 %v1338, %v1482
  %v1484 = vpop.f32.mrb[0].mxu0
  %1485 = vmatprep.mubr.f32.mxu0 %v123
  %1486 = vmatmul.mubr.f32.gmra.mrb[0].mxu0 %v122
  %v1487 = vpop.f32.mrb[0].mxu0
  %v1488 = vadd.f32 %v1343, %v1487
  %v1489 = vpop.f32.mrb[0].mxu0
  %1490 = vmatprep.mubr.f32.mxu0 %v148
  %1491 = vmatmul.mubr.f32.gmra.mrb[0].mxu0 %v147
  %v1492 = vpop.f32.mrb[0].mxu0
  %v1493 = vadd.f32 %v1348, %v1492
  %v1494 = vpop.f32.mrb[0].mxu0
  %1495 = vmatprep.mubr.f32.mxu0 %v173
  %1496 = vmatmul.mubr.f32.gmra.mrb[0].mxu0 %v172
  %v1497 = vpop.f32.mrb[0].mxu0
  %v1498 = vadd.f32 %v1353, %v1497
  %v1499 = vpop.f32.mrb[0].mxu0
  %1500 = vmatprep.mubr.f32.mxu0 %v198
  %1501 = vmatmul.mubr.f32.gmra.mrb[0].mxu0 %v197
  %v1502 = vpop.f32.mrb[0].mxu0
  %v1503 = vadd.f32 %v1358, %v1502
  %v1504 = vpop.f32.mrb[0].mxu0
  %1505 = vmatprep.mubr.f32.mxu0 %v223
  %1506 = vmatmul.mubr.f32.gmra.mrb[0].mxu0 %v222
  %v1507 = vpop.f32.mrb[0].mxu0
  %v1508 = vadd.f32 %v1363, %v1507
  %v1509 = vpop.f32.mrb[0].mxu0
  %1510 = vmatprep.mubr.f32.mxu0 %v248
  %1511 = vmatmul.mubr.f32.gmra.mrb[0].mxu0 %v247
  %v1512 = vpop.f32.mrb[0].mxu0
  %v1513 = vadd.f32 %v1368, %v1512
  %v1514 = vpop.f32.mrb[0].mxu0
  %1515 = vmatprep.mubr.f32.mxu0 %v273
  %1516 = vmatmul.mubr.f32.gmra.mrb[0].mxu0 %v272
  %v1517 = vpop.f32.mrb[0].mxu0
  %v1518 = vadd.f32 %v1373, %v1517
  %v1519 = vpop.f32.mrb[0].mxu0
  %1520 = vmatprep.mubr.f32.mxu0 %v298
  %1521 = vmatmul.mubr.f32.gmra.mrb[0].mxu0 %v297
  %v1522 = vpop.f32.mrb[0].mxu0
  %v1523 = vadd.f32 %v1378, %v1522
  %v1524 = vpop.f32.mrb[0].mxu0
  %1525 = vmatprep.mubr.f32.mxu0 %v323
  %1526 = vmatmul.mubr.f32.gmra.mrb[0].mxu0 %v322
  %v1527 = vpop.f32.mrb[0].mxu0
  %v1528 = vadd.f32 %v1383, %v1527
  %v1529 = vpop.f32.mrb[0].mxu0
  %1530 = vmatprep.mubr.f32.mxu0 %v348
  %1531 = vmatmul.mubr.f32.gmra.mrb[0].mxu0 %v347
  %v1532 = vpop.f32.mrb[0].mxu0
  %v1533 = vadd.f32 %v1388, %v1532
  %v1534 = vpop.f32.mrb[0].mxu0
  %1535 = vmatprep.mubr.f32.mxu0 %v373
  %1536 = vmatmul.mubr.f32.gmra.mrb[0].mxu0 %v372
  %v1537 = vpop.f32.mrb[0].mxu0
  %v1538 = vadd.f32 %v1393, %v1537
  %v1539 = vpop.f32.mrb[0].mxu0
  %1540 = vmatprep.mubr.f32.mxu0 %v398
  %1541 = vmatmul.mubr.f32.gmra.mrb[0].mxu0 %v397
  %v1542 = vpop.f32.mrb[0].mxu0
  %v1543 = vadd.f32 %v1398, %v1542
  %v1544 = vpop.f32.mrb[0].mxu0
  %1545 = vdwg.mxu0
  %1546 = vmatprep.subr.mxu0 0.0
  %1547 = vmatpush1.msra.mxu0 %v574
  %1548 = vmatprep.subr.mxu0 0.0
  %1549 = vmatpush1.msra.mxu0 %v575
  %1550 = vmatprep.subr.mxu0 0.0
  %1551 = vmatpush1.msra.mxu0 %v576
  %1552 = vmatprep.subr.mxu0 0.0
  %1553 = vmatpush1.msra.mxu0 %v577
  %1554 = vmatprep.subr.mxu0 0.0
  %1555 = vmatpush1.msra.mxu0 %v578
  %1556 = vmatprep.subr.mxu0 0.0
  %1557 = vmatpush1.msra.mxu0 %v579
  %1558 = vmatprep.subr.mxu0 0.0
  %1559 = vmatpush1.msra.mxu0 %v580
  %1560 = vmatprep.subr.mxu0 0.0
  %1561 = vmatpush1.msra.mxu0 %v581
  %1562 = vmatprep.subr.mxu0 0.0
  %1563 = vmatpush1.msra.mxu0 %v582
  %1564 = vmatprep.subr.mxu0 0.0
  %1565 = vmatpush1.msra.mxu0 %v583
  %1566 = vmatprep.subr.mxu0 0.0
  %1567 = vmatpush1.msra.mxu0 %v584
  %1568 = vmatprep.subr.mxu0 0.0
  %1569 = vmatpush1.msra.mxu0 %v585
  %1570 = vmatprep.subr.mxu0 0.0
  %1571 = vmatpush1.msra.mxu0 %v586
  %1572 = vmatprep.subr.mxu0 0.0
  %1573 = vmatpush1.msra.mxu0 %v587
  %1574 = vmatprep.subr.mxu0 0.0
  %1575 = vmatpush1.msra.mxu0 %v588
  %1576 = vmatprep.subr.mxu0 0.0
  %1577 = vmatpush1.msra.mxu0 %v589
  %1578 = vmatprep.subr.mxu0 0.0
  %1579 = vmatpush1.msra.mxu0 %v590
  %1580 = vmatprep.subr.mxu0 0.0
  %1581 = vmatpush1.msra.mxu0 %v591
  %1582 = vmatprep.subr.mxu0 0.0
  %1583 = vmatpush1.msra.mxu0 %v592
  %1584 = vmatprep.subr.mxu0 0.0
  %1585 = vmatpush1.msra.mxu0 %v593
  %1586 = vmatprep.subr.mxu0 0.0
  %1587 = vmatpush1.msra.mxu0 %v594
  %1588 = vmatprep.subr.mxu0 0.0
  %1589 = vmatpush1.msra.mxu0 %v595
  %1590 = vmatprep.subr.mxu0 0.0
  %1591 = vmatpush1.msra.mxu0 %v596
  %1592 = vmatprep.subr.mxu0 0.0
  %1593 = vmatpush1.msra.mxu0 %v597
  %1594 = vmatprep.subr.mxu0 0.0
  %1595 = vmatpush1.msra.mxu0 %v598
  %1596 = vmatprep.subr.mxu0 0.0
  %1597 = vmatpush1.msra.mxu0 %v599
  %1598 = vmatprep.subr.mxu0 0.0
  %1599 = vmatpush1.msra.mxu0 %v600
  %1600 = vmatprep.subr.mxu0 0.0
  %1601 = vmatpush1.msra.mxu0 %v601
  %1602 = vmatprep.subr.mxu0 0.0
  %1603 = vmatpush1.msra.mxu0 %v602
  %1604 = vmatprep.subr.mxu0 0.0
  %1605 = vmatpush1.msra.mxu0 %v603
  %1606 = vmatprep.subr.mxu0 0.0
  %1607 = vmatpush1.msra.mxu0 %v604
  %1608 = vmatprep.subr.mxu0 0.0
  %1609 = vmatpush1.msra.mxu0 %v605
  %1610 = vmatprep.mubr.f32.mxu0 %v25
  %1611 = vmatmul.mubr.f32.gmra.mrb[0].mxu0 %v24
  %v1612 = vpop.f32.mrb[0].mxu0
  %v1613 = vadd.f32 %v1468, %v1612
  %v1614 = vpop.f32.mrb[0].mxu0
  %1615 = vmatprep.mubr.f32.mxu0 %v50
  %1616 = vmatmul.mubr.f32.gmra.mrb[0].mxu0 %v49
  %v1617 = vpop.f32.mrb[0].mxu0
  %v1618 = vadd.f32 %v1473, %v1617
  %v1619 = vpop.f32.mrb[0].mxu0
  %1620 = vmatprep.mubr.f32.mxu0 %v75
  %1621 = vmatmul.mubr.f32.gmra.mrb[0].mxu0 %v74
  %v1622 = vpop.f32.mrb[0].mxu0
  %v1623 = vadd.f32 %v1478, %v1622
  %v1624 = vpop.f32.mrb[0].mxu0
  %1625 = vmatprep.mubr.f32.mxu0 %v100
  %1626 = vmatmul.mubr.f32.gmra.mrb[0].mxu0 %v99
  %v1627 = vpop.f32.mrb[0].mxu0
  %v1628 = vadd.f32 %v1483, %v1627
  %v1629 = vpop.f32.mrb[0].mxu0
  %1630 = vmatprep.mubr.f32.mxu0 %v125
  %1631 = vmatmul.mubr.f32.gmra.mrb[0].mxu0 %v124
  %v1632 = vpop.f32.mrb[0].mxu0
  %v1633 = vadd.f32 %v1488, %v1632
  %v1634 = vpop.f32.mrb[0].mxu0
  %1635 = vmatprep.mubr.f32.mxu0 %v150
  %1636 = vmatmul.mubr.f32.gmra.mrb[0].mxu0 %v149
  %v1637 = vpop.f32.mrb[0].mxu0
  %v1638 = vadd.f32 %v1493, %v1637
  %v1639 = vpop.f32.mrb[0].mxu0
  %1640 = vmatprep.mubr.f32.mxu0 %v175
  %1641 = vmatmul.mubr.f32.gmra.mrb[0].mxu0 %v174
  %v1642 = vpop.f32.mrb[0].mxu0
  %v1643 = vadd.f32 %v1498, %v1642
  %v1644 = vpop.f32.mrb[0].mxu0
  %1645 = vmatprep.mubr.f32.mxu0 %v200
  %1646 = vmatmul.mubr.f32.gmra.mrb[0].mxu0 %v199
  %v1647 = vpop.f32.mrb[0].mxu0
  %v1648 = vadd.f32 %v1503, %v1647
  %v1649 = vpop.f32.mrb[0].mxu0
  %1650 = vmatprep.mubr.f32.mxu0 %v225
  %1651 = vmatmul.mubr.f32.gmra.mrb[0].mxu0 %v224
  %v1652 = vpop.f32.mrb[0].mxu0
  %v1653 = vadd.f32 %v1508, %v1652
  %v1654 = vpop.f32.mrb[0].mxu0
  %1655 = vmatprep.mubr.f32.mxu0 %v250
  %1656 = vmatmul.mubr.f32.gmra.mrb[0].mxu0 %v249
  %v1657 = vpop.f32.mrb[0].mxu0
  %v1658 = vadd.f32 %v1513, %v1657
  %v1659 = vpop.f32.mrb[0].mxu0
  %1660 = vmatprep.mubr.f32.mxu0 %v275
  %1661 = vmatmul.mubr.f32.gmra.mrb[0].mxu0 %v274
  %v1662 = vpop.f32.mrb[0].mxu0
  %v1663 = vadd.f32 %v1518, %v1662
  %v1664 = vpop.f32.mrb[0].mxu0
  %1665 = vmatprep.mubr.f32.mxu0 %v300
  %1666 = vmatmul.mubr.f32.gmra.mrb[0].mxu0 %v299
  %v1667 = vpop.f32.mrb[0].mxu0
  %v1668 = vadd.f32 %v1523, %v1667
  %v1669 = vpop.f32.mrb[0].mxu0
  %1670 = vmatprep.mubr.f32.mxu0 %v325
  %1671 = vmatmul.mubr.f32.gmra.mrb[0].mxu0 %v324
  %v1672 = vpop.f32.mrb[0].mxu0
  %v1673 = vadd.f32 %v1528, %v1672
  %v1674 = vpop.f32.mrb[0].mxu0
  %1675 = vmatprep.mubr.f32.mxu0 %v350
  %1676 = vmatmul.mubr.f32.gmra.mrb[0].mxu0 %v349
  %v1677 = vpop.f32.mrb[0].mxu0
  %v1678 = vadd.f32 %v1533, %v1677
  %v1679 = vpop.f32.mrb[0].mxu0
  %1680 = vmatprep.mubr.f32.mxu0 %v375
  %1681 = vmatmul.mubr.f32.gmra.mrb[0].mxu0 %v374
  %v1682 = vpop.f32.mrb[0].mxu0
  %v1683 = vadd.f32 %v1538, %v1682
  %v1684 = vpop.f32.mrb[0].mxu0
  %1685 = vmatprep.mubr.f32.mxu0 %v400
  %1686 = vmatmul.mubr.f32.gmra.mrb[0].mxu0 %v399
  %v1687 = vpop.f32.mrb[0].mxu0
  %v1688 = vadd.f32 %v1543, %v1687
  %v1689 = vpop.f32.mrb[0].mxu0
  %1690 = vdwg.mxu0
  %1691 = vmatprep.subr.mxu0 0.0
  %1692 = vmatpush1.msra.mxu0 %v606
  %1693 = vmatprep.subr.mxu0 0.0
  %1694 = vmatpush1.msra.mxu0 %v607
  %1695 = vmatprep.subr.mxu0 0.0
  %1696 = vmatpush1.msra.mxu0 %v608
  %1697 = vmatprep.subr.mxu0 0.0
  %1698 = vmatpush1.msra.mxu0 %v609
  %1699 = vmatprep.subr.mxu0 0.0
  %1700 = vmatpush1.msra.mxu0 %v610
  %1701 = vmatprep.subr.mxu0 0.0
  %1702 = vmatpush1.msra.mxu0 %v611
  %1703 = vmatprep.subr.mxu0 0.0
  %1704 = vmatpush1.msra.mxu0 %v612
  %1705 = vmatprep.subr.mxu0 0.0
  %1706 = vmatpush1.msra.mxu0 %v613
  %1707 = vmatprep.subr.mxu0 0.0
  %1708 = vmatpush1.msra.mxu0 %v614
  %1709 = vmatprep.subr.mxu0 0.0
  %1710 = vmatpush1.msra.mxu0 %v615
  %1711 = vmatprep.subr.mxu0 0.0
  %1712 = vmatpush1.msra.mxu0 %v616
  %1713 = vmatprep.subr.mxu0 0.0
  %1714 = vmatpush1.msra.mxu0 %v617
  %1715 = vmatprep.subr.mxu0 0.0
  %1716 = vmatpush1.msra.mxu0 %v618
  %1717 = vmatprep.subr.mxu0 0.0
  %1718 = vmatpush1.msra.mxu0 %v619
  %1719 = vmatprep.subr.mxu0 0.0
  %1720 = vmatpush1.msra.mxu0 %v620
  %1721 = vmatprep.subr.mxu0 0.0
  %1722 = vmatpush1.msra.mxu0 %v621
  %1723 = vmatprep.subr.mxu0 0.0
  %1724 = vmatpush1.msra.mxu0 %v622
  %1725 = vmatprep.subr.mxu0 0.0
  %1726 = vmatpush1.msra.mxu0 %v623
  %1727 = vmatprep.subr.mxu0 0.0
  %1728 = vmatpush1.msra.mxu0 %v624
  %1729 = vmatprep.subr.mxu0 0.0
  %1730 = vmatpush1.msra.mxu0 %v625
  %1731 = vmatprep.subr.mxu0 0.0
  %1732 = vmatpush1.msra.mxu0 %v626
  %1733 = vmatprep.subr.mxu0 0.0
  %1734 = vmatpush1.msra.mxu0 %v627
  %1735 = vmatprep.subr.mxu0 0.0
  %1736 = vmatpush1.msra.mxu0 %v628
  %1737 = vmatprep.subr.mxu0 0.0
  %1738 = vmatpush1.msra.mxu0 %v629
  %1739 = vmatprep.subr.mxu0 0.0
  %1740 = vmatpush1.msra.mxu0 %v630
  %1741 = vmatprep.subr.mxu0 0.0
  %1742 = vmatpush1.msra.mxu0 %v631
  %1743 = vmatprep.subr.mxu0 0.0
  %1744 = vmatpush1.msra.mxu0 %v632
  %1745 = vmatprep.subr.mxu0 0.0
  %1746 = vmatpush1.msra.mxu0 %v633
  %1747 = vmatprep.subr.mxu0 0.0
  %1748 = vmatpush1.msra.mxu0 %v634
  %1749 = vmatprep.subr.mxu0 0.0
  %1750 = vmatpush1.msra.mxu0 %v635
  %1751 = vmatprep.subr.mxu0 0.0
  %1752 = vmatpush1.msra.mxu0 %v636
  %1753 = vmatprep.subr.mxu0 0.0
  %1754 = vmatpush1.msra.mxu0 %v637
  %1755 = vmatprep.mubr.f32.mxu0 %v27
  %1756 = vmatmul.mubr.f32.gmra.mrb[0].mxu0 %v26
  %v1757 = vpop.f32.mrb[0].mxu0
  %v1758 = vadd.f32 %v1613, %v1757
  %v1759 = vpop.f32.mrb[0].mxu0
  %1760 = vmatprep.mubr.f32.mxu0 %v52
  %1761 = vmatmul.mubr.f32.gmra.mrb[0].mxu0 %v51
  %v1762 = vpop.f32.mrb[0].mxu0
  %v1763 = vadd.f32 %v1618, %v1762
  %v1764 = vpop.f32.mrb[0].mxu0
  %1765 = vmatprep.mubr.f32.mxu0 %v77
  %1766 = vmatmul.mubr.f32.gmra.mrb[0].mxu0 %v76
  %v1767 = vpop.f32.mrb[0].mxu0
  %v1768 = vadd.f32 %v1623, %v1767
  %v1769 = vpop.f32.mrb[0].mxu0
  %1770 = vmatprep.mubr.f32.mxu0 %v102
  %1771 = vmatmul.mubr.f32.gmra.mrb[0].mxu0 %v101
  %v1772 = vpop.f32.mrb[0].mxu0
  %v1773 = vadd.f32 %v1628, %v1772
  %v1774 = vpop.f32.mrb[0].mxu0
  %1775 = vmatprep.mubr.f32.mxu0 %v127
  %1776 = vmatmul.mubr.f32.gmra.mrb[0].mxu0 %v126
  %v1777 = vpop.f32.mrb[0].mxu0
  %v1778 = vadd.f32 %v1633, %v1777
  %v1779 = vpop.f32.mrb[0].mxu0
  %1780 = vmatprep.mubr.f32.mxu0 %v152
  %1781 = vmatmul.mubr.f32.gmra.mrb[0].mxu0 %v151
  %v1782 = vpop.f32.mrb[0].mxu0
  %v1783 = vadd.f32 %v1638, %v1782
  %v1784 = vpop.f32.mrb[0].mxu0
  %1785 = vmatprep.mubr.f32.mxu0 %v177
  %1786 = vmatmul.mubr.f32.gmra.mrb[0].mxu0 %v176
  %v1787 = vpop.f32.mrb[0].mxu0
  %v1788 = vadd.f32 %v1643, %v1787
  %v1789 = vpop.f32.mrb[0].mxu0
  %1790 = vmatprep.mubr.f32.mxu0 %v202
  %1791 = vmatmul.mubr.f32.gmra.mrb[0].mxu0 %v201
  %v1792 = vpop.f32.mrb[0].mxu0
  %v1793 = vadd.f32 %v1648, %v1792
  %v1794 = vpop.f32.mrb[0].mxu0
  %1795 = vmatprep.mubr.f32.mxu0 %v227
  %1796 = vmatmul.mubr.f32.gmra.mrb[0].mxu0 %v226
  %v1797 = vpop.f32.mrb[0].mxu0
  %v1798 = vadd.f32 %v1653, %v1797
  %v1799 = vpop.f32.mrb[0].mxu0
  %1800 = vmatprep.mubr.f32.mxu0 %v252
  %1801 = vmatmul.mubr.f32.gmra.mrb[0].mxu0 %v251
  %v1802 = vpop.f32.mrb[0].mxu0
  %v1803 = vadd.f32 %v1658, %v1802
  %v1804 = vpop.f32.mrb[0].mxu0
  %1805 = vmatprep.mubr.f32.mxu0 %v277
  %1806 = vmatmul.mubr.f32.gmra.mrb[0].mxu0 %v276
  %v1807 = vpop.f32.mrb[0].mxu0
  %v1808 = vadd.f32 %v1663, %v1807
  %v1809 = vpop.f32.mrb[0].mxu0
  %1810 = vmatprep.mubr.f32.mxu0 %v302
  %1811 = vmatmul.mubr.f32.gmra.mrb[0].mxu0 %v301
  %v1812 = vpop.f32.mrb[0].mxu0
  %v1813 = vadd.f32 %v1668, %v1812
  %v1814 = vpop.f32.mrb[0].mxu0
  %1815 = vmatprep.mubr.f32.mxu0 %v327
  %1816 = vmatmul.mubr.f32.gmra.mrb[0].mxu0 %v326
  %v1817 = vpop.f32.mrb[0].mxu0
  %v1818 = vadd.f32 %v1673, %v1817
  %v1819 = vpop.f32.mrb[0].mxu0
  %1820 = vmatprep.mubr.f32.mxu0 %v352
  %1821 = vmatmul.mubr.f32.gmra.mrb[0].mxu0 %v351
  %v1822 = vpop.f32.mrb[0].mxu0
  %v1823 = vadd.f32 %v1678, %v1822
  %v1824 = vpop.f32.mrb[0].mxu0
  %1825 = vmatprep.mubr.f32.mxu0 %v377
  %1826 = vmatmul.mubr.f32.gmra.mrb[0].mxu0 %v376
  %v1827 = vpop.f32.mrb[0].mxu0
  %v1828 = vadd.f32 %v1683, %v1827
  %v1829 = vpop.f32.mrb[0].mxu0
  %1830 = vmatprep.mubr.f32.mxu0 %v402
  %1831 = vmatmul.mubr.f32.gmra.mrb[0].mxu0 %v401
  %v1832 = vpop.f32.mrb[0].mxu0
  %v1833 = vadd.f32 %v1688, %v1832
  %v1834 = vpop.f32.mrb[0].mxu0
  %1835 = vdwg.mxu0
  %1836 = vmatprep.subr.mxu0 0.0
  %1837 = vmatpush1.msra.mxu0 %v638
  %1838 = vmatprep.subr.mxu0 0.0
  %1839 = vmatpush1.msra.mxu0 %v639
  %1840 = vmatprep.subr.mxu0 0.0
  %1841 = vmatpush1.msra.mxu0 %v640
  %1842 = vmatprep.subr.mxu0 0.0
  %1843 = vmatpush1.msra.mxu0 %v641
  %1844 = vmatprep.subr.mxu0 0.0
  %1845 = vmatpush1.msra.mxu0 %v642
  %1846 = vmatprep.subr.mxu0 0.0
  %1847 = vmatpush1.msra.mxu0 %v643
  %1848 = vmatprep.subr.mxu0 0.0
  %1849 = vmatpush1.msra.mxu0 %v644
  %1850 = vmatprep.subr.mxu0 0.0
  %1851 = vmatpush1.msra.mxu0 %v645
  %1852 = vmatprep.subr.mxu0 0.0
  %1853 = vmatpush1.msra.mxu0 %v646
  %1854 = vmatprep.subr.mxu0 0.0
  %1855 = vmatpush1.msra.mxu0 %v647
  %1856 = vmatprep.subr.mxu0 0.0
  %1857 = vmatpush1.msra.mxu0 %v648
  %1858 = vmatprep.subr.mxu0 0.0
  %1859 = vmatpush1.msra.mxu0 %v649
  %1860 = vmatprep.subr.mxu0 0.0
  %1861 = vmatpush1.msra.mxu0 %v650
  %1862 = vmatprep.subr.mxu0 0.0
  %1863 = vmatpush1.msra.mxu0 %v651
  %1864 = vmatprep.subr.mxu0 0.0
  %1865 = vmatpush1.msra.mxu0 %v652
  %1866 = vmatprep.subr.mxu0 0.0
  %1867 = vmatpush1.msra.mxu0 %v653
  %1868 = vmatprep.subr.mxu0 0.0
  %1869 = vmatpush1.msra.mxu0 %v654
  %1870 = vmatprep.subr.mxu0 0.0
  %1871 = vmatpush1.msra.mxu0 %v655
  %1872 = vmatprep.subr.mxu0 0.0
  %1873 = vmatpush1.msra.mxu0 %v656
  %1874 = vmatprep.subr.mxu0 0.0
  %1875 = vmatpush1.msra.mxu0 %v657
  %1876 = vmatprep.subr.mxu0 0.0
  %1877 = vmatpush1.msra.mxu0 %v658
  %1878 = vmatprep.subr.mxu0 0.0
  %1879 = vmatpush1.msra.mxu0 %v659
  %1880 = vmatprep.subr.mxu0 0.0
  %1881 = vmatpush1.msra.mxu0 %v660
  %1882 = vmatprep.subr.mxu0 0.0
  %1883 = vmatpush1.msra.mxu0 %v661
  %1884 = vmatprep.subr.mxu0 0.0
  %1885 = vmatpush1.msra.mxu0 %v662
  %1886 = vmatprep.subr.mxu0 0.0
  %1887 = vmatpush1.msra.mxu0 %v663
  %1888 = vmatprep.subr.mxu0 0.0
  %1889 = vmatpush1.msra.mxu0 %v664
  %1890 = vmatprep.subr.mxu0 0.0
  %1891 = vmatpush1.msra.mxu0 %v665
  %1892 = vmatprep.subr.mxu0 0.0
  %1893 = vmatpush1.msra.mxu0 %v666
  %1894 = vmatprep.subr.mxu0 0.0
  %1895 = vmatpush1.msra.mxu0 %v667
  %1896 = vmatprep.subr.mxu0 0.0
  %1897 = vmatpush1.msra.mxu0 %v668
  %1898 = vmatprep.subr.mxu0 0.0
  %1899 = vmatpush1.msra.mxu0 %v669
  %1900 = vmatprep.mubr.f32.mxu0 %v29
  %1901 = vmatmul.mubr.f32.gmra.mrb[0].mxu0 %v28
  %v1902 = vpop.f32.mrb[0].mxu0
  %v1903 = vadd.f32 %v1758, %v1902
  %v1904 = vpop.f32.mrb[0].mxu0
  %1905 = vmatprep.mubr.f32.mxu0 %v54
  %1906 = vmatmul.mubr.f32.gmra.mrb[0].mxu0 %v53
  %v1907 = vpop.f32.mrb[0].mxu0
  %v1908 = vadd.f32 %v1763, %v1907
  %v1909 = vpop.f32.mrb[0].mxu0
  %1910 = vmatprep.mubr.f32.mxu0 %v79
  %1911 = vmatmul.mubr.f32.gmra.mrb[0].mxu0 %v78
  %v1912 = vpop.f32.mrb[0].mxu0
  %v1913 = vadd.f32 %v1768, %v1912
  %v1914 = vpop.f32.mrb[0].mxu0
  %1915 = vmatprep.mubr.f32.mxu0 %v104
  %1916 = vmatmul.mubr.f32.gmra.mrb[0].mxu0 %v103
  %v1917 = vpop.f32.mrb[0].mxu0
  %v1918 = vadd.f32 %v1773, %v1917
  %v1919 = vpop.f32.mrb[0].mxu0
  %1920 = vmatprep.mubr.f32.mxu0 %v129
  %1921 = vmatmul.mubr.f32.gmra.mrb[0].mxu0 %v128
  %v1922 = vpop.f32.mrb[0].mxu0
  %v1923 = vadd.f32 %v1778, %v1922
  %v1924 = vpop.f32.mrb[0].mxu0
  %1925 = vmatprep.mubr.f32.mxu0 %v154
  %1926 = vmatmul.mubr.f32.gmra.mrb[0].mxu0 %v153
  %v1927 = vpop.f32.mrb[0].mxu0
  %v1928 = vadd.f32 %v1783, %v1927
  %v1929 = vpop.f32.mrb[0].mxu0
  %1930 = vmatprep.mubr.f32.mxu0 %v179
  %1931 = vmatmul.mubr.f32.gmra.mrb[0].mxu0 %v178
  %v1932 = vpop.f32.mrb[0].mxu0
  %v1933 = vadd.f32 %v1788, %v1932
  %v1934 = vpop.f32.mrb[0].mxu0
  %1935 = vmatprep.mubr.f32.mxu0 %v204
  %1936 = vmatmul.mubr.f32.gmra.mrb[0].mxu0 %v203
  %v1937 = vpop.f32.mrb[0].mxu0
  %v1938 = vadd.f32 %v1793, %v1937
  %v1939 = vpop.f32.mrb[0].mxu0
  %1940 = vmatprep.mubr.f32.mxu0 %v229
  %1941 = vmatmul.mubr.f32.gmra.mrb[0].mxu0 %v228
  %v1942 = vpop.f32.mrb[0].mxu0
  %v1943 = vadd.f32 %v1798, %v1942
  %v1944 = vpop.f32.mrb[0].mxu0
  %1945 = vmatprep.mubr.f32.mxu0 %v254
  %1946 = vmatmul.mubr.f32.gmra.mrb[0].mxu0 %v253
  %v1947 = vpop.f32.mrb[0].mxu0
  %v1948 = vadd.f32 %v1803, %v1947
  %v1949 = vpop.f32.mrb[0].mxu0
  %1950 = vmatprep.mubr.f32.mxu0 %v279
  %1951 = vmatmul.mubr.f32.gmra.mrb[0].mxu0 %v278
  %v1952 = vpop.f32.mrb[0].mxu0
  %v1953 = vadd.f32 %v1808, %v1952
  %v1954 = vpop.f32.mrb[0].mxu0
  %1955 = vmatprep.mubr.f32.mxu0 %v304
  %1956 = vmatmul.mubr.f32.gmra.mrb[0].mxu0 %v303
  %v1957 = vpop.f32.mrb[0].mxu0
  %v1958 = vadd.f32 %v1813, %v1957
  %v1959 = vpop.f32.mrb[0].mxu0
  %1960 = vmatprep.mubr.f32.mxu0 %v329
  %1961 = vmatmul.mubr.f32.gmra.mrb[0].mxu0 %v328
  %v1962 = vpop.f32.mrb[0].mxu0
  %v1963 = vadd.f32 %v1818, %v1962
  %v1964 = vpop.f32.mrb[0].mxu0
  %1965 = vmatprep.mubr.f32.mxu0 %v354
  %1966 = vmatmul.mubr.f32.gmra.mrb[0].mxu0 %v353
  %v1967 = vpop.f32.mrb[0].mxu0
  %v1968 = vadd.f32 %v1823, %v1967
  %v1969 = vpop.f32.mrb[0].mxu0
  %1970 = vmatprep.mubr.f32.mxu0 %v379
  %1971 = vmatmul.mubr.f32.gmra.mrb[0].mxu0 %v378
  %v1972 = vpop.f32.mrb[0].mxu0
  %v1973 = vadd.f32 %v1828, %v1972
  %v1974 = vpop.f32.mrb[0].mxu0
  %1975 = vmatprep.mubr.f32.mxu0 %v404
  %1976 = vmatmul.mubr.f32.gmra.mrb[0].mxu0 %v403
  %v1977 = vpop.f32.mrb[0].mxu0
  %v1978 = vadd.f32 %v1833, %v1977
  %v1979 = vpop.f32.mrb[0].mxu0
  %1980 = vdwg.mxu0
  %1981 = vmatprep.subr.mxu0 0.0
  %1982 = vmatpush1.msra.mxu0 %v670
  %1983 = vmatprep.subr.mxu0 0.0
  %1984 = vmatpush1.msra.mxu0 %v671
  %1985 = vmatprep.subr.mxu0 0.0
  %1986 = vmatpush1.msra.mxu0 %v672
  %1987 = vmatprep.subr.mxu0 0.0
  %1988 = vmatpush1.msra.mxu0 %v673
  %1989 = vmatprep.subr.mxu0 0.0
  %1990 = vmatpush1.msra.mxu0 %v674
  %1991 = vmatprep.subr.mxu0 0.0
  %1992 = vmatpush1.msra.mxu0 %v675
  %1993 = vmatprep.subr.mxu0 0.0
  %1994 = vmatpush1.msra.mxu0 %v676
  %1995 = vmatprep.subr.mxu0 0.0
  %1996 = vmatpush1.msra.mxu0 %v677
  %1997 = vmatprep.subr.mxu0 0.0
  %1998 = vmatpush1.msra.mxu0 %v678
  %1999 = vmatprep.subr.mxu0 0.0
  %2000 = vmatpush1.msra.mxu0 %v679
  %2001 = vmatprep.subr.mxu0 0.0
  %2002 = vmatpush1.msra.mxu0 %v680
  %2003 = vmatprep.subr.mxu0 0.0
  %2004 = vmatpush1.msra.mxu0 %v681
  %2005 = vmatprep.subr.mxu0 0.0
  %2006 = vmatpush1.msra.mxu0 %v682
  %2007 = vmatprep.subr.mxu0 0.0
  %2008 = vmatpush1.msra.mxu0 %v683
  %2009 = vmatprep.subr.mxu0 0.0
  %2010 = vmatpush1.msra.mxu0 %v684
  %2011 = vmatprep.subr.mxu0 0.0
  %2012 = vmatpush1.msra.mxu0 %v685
  %2013 = vmatprep.subr.mxu0 0.0
  %2014 = vmatpush1.msra.mxu0 %v686
  %2015 = vmatprep.subr.mxu0 0.0
  %2016 = vmatpush1.msra.mxu0 %v687
  %2017 = vmatprep.subr.mxu0 0.0
  %2018 = vmatpush1.msra.mxu0 %v688
  %2019 = vmatprep.subr.mxu0 0.0
  %2020 = vmatpush1.msra.mxu0 %v689
  %2021 = vmatprep.subr.mxu0 0.0
  %2022 = vmatpush1.msra.mxu0 %v690
  %2023 = vmatprep.subr.mxu0 0.0
  %2024 = vmatpush1.msra.mxu0 %v691
  %2025 = vmatprep.subr.mxu0 0.0
  %2026 = vmatpush1.msra.mxu0 %v692
  %2027 = vmatprep.subr.mxu0 0.0
  %2028 = vmatpush1.msra.mxu0 %v693
  %2029 = vmatprep.subr.mxu0 0.0
  %2030 = vmatpush1.msra.mxu0 %v694
  %2031 = vmatprep.subr.mxu0 0.0
  %2032 = vmatpush1.msra.mxu0 %v695
  %2033 = vmatprep.subr.mxu0 0.0
  %2034 = vmatpush1.msra.mxu0 %v696
  %2035 = vmatprep.subr.mxu0 0.0
  %2036 = vmatpush1.msra.mxu0 %v697
  %2037 = vmatprep.subr.mxu0 0.0
  %2038 = vmatpush1.msra.mxu0 %v698
  %2039 = vmatprep.subr.mxu0 0.0
  %2040 = vmatpush1.msra.mxu0 %v699
  %2041 = vmatprep.subr.mxu0 0.0
  %2042 = vmatpush1.msra.mxu0 %v700
  %2043 = vmatprep.subr.mxu0 0.0
  %2044 = vmatpush1.msra.mxu0 %v701
  %2045 = vmatprep.mubr.f32.mxu0 %v31
  %2046 = vmatmul.mubr.f32.gmra.mrb[0].mxu0 %v30
  %v2047 = vpop.f32.mrb[0].mxu0
  %v2048 = vadd.f32 %v1903, %v2047
  %v2049 = vpop.f32.mrb[0].mxu0
  %2050 = vmatprep.mubr.f32.mxu0 %v56
  %2051 = vmatmul.mubr.f32.gmra.mrb[0].mxu0 %v55
  %v2052 = vpop.f32.mrb[0].mxu0
  %v2053 = vadd.f32 %v1908, %v2052
  %v2054 = vpop.f32.mrb[0].mxu0
  %2055 = vmatprep.mubr.f32.mxu0 %v81
  %2056 = vmatmul.mubr.f32.gmra.mrb[0].mxu0 %v80
  %v2057 = vpop.f32.mrb[0].mxu0
  %v2058 = vadd.f32 %v1913, %v2057
  %v2059 = vpop.f32.mrb[0].mxu0
  %2060 = vmatprep.mubr.f32.mxu0 %v106
  %2061 = vmatmul.mubr.f32.gmra.mrb[0].mxu0 %v105
  %v2062 = vpop.f32.mrb[0].mxu0
  %v2063 = vadd.f32 %v1918, %v2062
  %v2064 = vpop.f32.mrb[0].mxu0
  %2065 = vmatprep.mubr.f32.mxu0 %v131
  %2066 = vmatmul.mubr.f32.gmra.mrb[0].mxu0 %v130
  %v2067 = vpop.f32.mrb[0].mxu0
  %v2068 = vadd.f32 %v1923, %v2067
  %v2069 = vpop.f32.mrb[0].mxu0
  %2070 = vmatprep.mubr.f32.mxu0 %v156
  %2071 = vmatmul.mubr.f32.gmra.mrb[0].mxu0 %v155
  %v2072 = vpop.f32.mrb[0].mxu0
  %v2073 = vadd.f32 %v1928, %v2072
  %v2074 = vpop.f32.mrb[0].mxu0
  %2075 = vmatprep.mubr.f32.mxu0 %v181
  %2076 = vmatmul.mubr.f32.gmra.mrb[0].mxu0 %v180
  %v2077 = vpop.f32.mrb[0].mxu0
  %v2078 = vadd.f32 %v1933, %v2077
  %v2079 = vpop.f32.mrb[0].mxu0
  %2080 = vmatprep.mubr.f32.mxu0 %v206
  %2081 = vmatmul.mubr.f32.gmra.mrb[0].mxu0 %v205
  %v2082 = vpop.f32.mrb[0].mxu0
  %v2083 = vadd.f32 %v1938, %v2082
  %v2084 = vpop.f32.mrb[0].mxu0
  %2085 = vmatprep.mubr.f32.mxu0 %v231
  %2086 = vmatmul.mubr.f32.gmra.mrb[0].mxu0 %v230
  %v2087 = vpop.f32.mrb[0].mxu0
  %v2088 = vadd.f32 %v1943, %v2087
  %v2089 = vpop.f32.mrb[0].mxu0
  %2090 = vmatprep.mubr.f32.mxu0 %v256
  %2091 = vmatmul.mubr.f32.gmra.mrb[0].mxu0 %v255
  %v2092 = vpop.f32.mrb[0].mxu0
  %v2093 = vadd.f32 %v1948, %v2092
  %v2094 = vpop.f32.mrb[0].mxu0
  %2095 = vmatprep.mubr.f32.mxu0 %v281
  %2096 = vmatmul.mubr.f32.gmra.mrb[0].mxu0 %v280
  %v2097 = vpop.f32.mrb[0].mxu0
  %v2098 = vadd.f32 %v1953, %v2097
  %v2099 = vpop.f32.mrb[0].mxu0
  %2100 = vmatprep.mubr.f32.mxu0 %v306
  %2101 = vmatmul.mubr.f32.gmra.mrb[0].mxu0 %v305
  %v2102 = vpop.f32.mrb[0].mxu0
  %v2103 = vadd.f32 %v1958, %v2102
  %v2104 = vpop.f32.mrb[0].mxu0
  %2105 = vmatprep.mubr.f32.mxu0 %v331
  %2106 = vmatmul.mubr.f32.gmra.mrb[0].mxu0 %v330
  %v2107 = vpop.f32.mrb[0].mxu0
  %v2108 = vadd.f32 %v1963, %v2107
  %v2109 = vpop.f32.mrb[0].mxu0
  %2110 = vmatprep.mubr.f32.mxu0 %v356
  %2111 = vmatmul.mubr.f32.gmra.mrb[0].mxu0 %v355
  %v2112 = vpop.f32.mrb[0].mxu0
  %v2113 = vadd.f32 %v1968, %v2112
  %v2114 = vpop.f32.mrb[0].mxu0
  %2115 = vmatprep.mubr.f32.mxu0 %v381
  %2116 = vmatmul.mubr.f32.gmra.mrb[0].mxu0 %v380
  %v2117 = vpop.f32.mrb[0].mxu0
  %v2118 = vadd.f32 %v1973, %v2117
  %v2119 = vpop.f32.mrb[0].mxu0
  %2120 = vmatprep.mubr.f32.mxu0 %v406
  %2121 = vmatmul.mubr.f32.gmra.mrb[0].mxu0 %v405
  %v2122 = vpop.f32.mrb[0].mxu0
  %v2123 = vadd.f32 %v1978, %v2122
  %v2124 = vpop.f32.mrb[0].mxu0
  %2125 = vdwg.mxu0
  %2126 = vmatprep.subr.mxu0 0.0
  %2127 = vmatpush1.msra.mxu0 %v702
  %2128 = vmatprep.subr.mxu0 0.0
  %2129 = vmatpush1.msra.mxu0 %v703
  %2130 = vmatprep.subr.mxu0 0.0
  %2131 = vmatpush1.msra.mxu0 %v704
  %2132 = vmatprep.subr.mxu0 0.0
  %2133 = vmatpush1.msra.mxu0 %v705
  %2134 = vmatprep.subr.mxu0 0.0
  %2135 = vmatpush1.msra.mxu0 %v706
  %2136 = vmatprep.subr.mxu0 0.0
  %2137 = vmatpush1.msra.mxu0 %v707
  %2138 = vmatprep.subr.mxu0 0.0
  %2139 = vmatpush1.msra.mxu0 %v708
  %2140 = vmatprep.subr.mxu0 0.0
  %2141 = vmatpush1.msra.mxu0 %v709
  %2142 = vmatprep.subr.mxu0 0.0
  %2143 = vmatpush1.msra.mxu0 %v710
  %2144 = vmatprep.subr.mxu0 0.0
  %2145 = vmatpush1.msra.mxu0 %v711
  %2146 = vmatprep.subr.mxu0 0.0
  %2147 = vmatpush1.msra.mxu0 %v712
  %2148 = vmatprep.subr.mxu0 0.0
  %2149 = vmatpush1.msra.mxu0 %v713
  %2150 = vmatprep.subr.mxu0 0.0
  %2151 = vmatpush1.msra.mxu0 %v714
  %2152 = vmatprep.subr.mxu0 0.0
  %2153 = vmatpush1.msra.mxu0 %v715
  %2154 = vmatprep.subr.mxu0 0.0
  %2155 = vmatpush1.msra.mxu0 %v716
  %2156 = vmatprep.subr.mxu0 0.0
  %2157 = vmatpush1.msra.mxu0 %v717
  %2158 = vmatprep.subr.mxu0 0.0
  %2159 = vmatpush1.msra.mxu0 %v718
  %2160 = vmatprep.subr.mxu0 0.0
  %2161 = vmatpush1.msra.mxu0 %v719
  %2162 = vmatprep.subr.mxu0 0.0
  %2163 = vmatpush1.msra.mxu0 %v720
  %2164 = vmatprep.subr.mxu0 0.0
  %2165 = vmatpush1.msra.mxu0 %v721
  %2166 = vmatprep.subr.mxu0 0.0
  %2167 = vmatpush1.msra.mxu0 %v722
  %2168 = vmatprep.subr.mxu0 0.0
  %2169 = vmatpush1.msra.mxu0 %v723
  %2170 = vmatprep.subr.mxu0 0.0
  %2171 = vmatpush1.msra.mxu0 %v724
  %2172 = vmatprep.subr.mxu0 0.0
  %2173 = vmatpush1.msra.mxu0 %v725
  %2174 = vmatprep.subr.mxu0 0.0
  %2175 = vmatpush1.msra.mxu0 %v726
  %2176 = vmatprep.subr.mxu0 0.0
  %2177 = vmatpush1.msra.mxu0 %v727
  %2178 = vmatprep.subr.mxu0 0.0
  %2179 = vmatpush1.msra.mxu0 %v728
  %2180 = vmatprep.subr.mxu0 0.0
  %2181 = vmatpush1.msra.mxu0 %v729
  %2182 = vmatprep.subr.mxu0 0.0
  %2183 = vmatpush1.msra.mxu0 %v730
  %2184 = vmatprep.subr.mxu0 0.0
  %2185 = vmatpush1.msra.mxu0 %v731
  %2186 = vmatprep.subr.mxu0 0.0
  %2187 = vmatpush1.msra.mxu0 %v732
  %2188 = vmatprep.subr.mxu0 0.0
  %2189 = vmatpush1.msra.mxu0 %v733
  %2190 = vmatprep.mubr.f32.mxu0 %v33
  %2191 = vmatmul.mubr.f32.gmra.mrb[0].mxu0 %v32
  %v2192 = vpop.f32.mrb[0].mxu0
  %v2193 = vadd.f32 %v2048, %v2192
  %v2194 = vpop.f32.mrb[0].mxu0
  %2195 = vmatprep.mubr.f32.mxu0 %v58
  %2196 = vmatmul.mubr.f32.gmra.mrb[0].mxu0 %v57
  %v2197 = vpop.f32.mrb[0].mxu0
  %v2198 = vadd.f32 %v2053, %v2197
  %v2199 = vpop.f32.mrb[0].mxu0
  %2200 = vmatprep.mubr.f32.mxu0 %v83
  %2201 = vmatmul.mubr.f32.gmra.mrb[0].mxu0 %v82
  %v2202 = vpop.f32.mrb[0].mxu0
  %v2203 = vadd.f32 %v2058, %v2202
  %v2204 = vpop.f32.mrb[0].mxu0
  %2205 = vmatprep.mubr.f32.mxu0 %v108
  %2206 = vmatmul.mubr.f32.gmra.mrb[0].mxu0 %v107
  %v2207 = vpop.f32.mrb[0].mxu0
  %v2208 = vadd.f32 %v2063, %v2207
  %v2209 = vpop.f32.mrb[0].mxu0
  %2210 = vmatprep.mubr.f32.mxu0 %v133
  %2211 = vmatmul.mubr.f32.gmra.mrb[0].mxu0 %v132
  %v2212 = vpop.f32.mrb[0].mxu0
  %v2213 = vadd.f32 %v2068, %v2212
  %v2214 = vpop.f32.mrb[0].mxu0
  %2215 = vmatprep.mubr.f32.mxu0 %v158
  %2216 = vmatmul.mubr.f32.gmra.mrb[0].mxu0 %v157
  %v2217 = vpop.f32.mrb[0].mxu0
  %v2218 = vadd.f32 %v2073, %v2217
  %v2219 = vpop.f32.mrb[0].mxu0
  %2220 = vmatprep.mubr.f32.mxu0 %v183
  %2221 = vmatmul.mubr.f32.gmra.mrb[0].mxu0 %v182
  %v2222 = vpop.f32.mrb[0].mxu0
  %v2223 = vadd.f32 %v2078, %v2222
  %v2224 = vpop.f32.mrb[0].mxu0
  %2225 = vmatprep.mubr.f32.mxu0 %v208
  %2226 = vmatmul.mubr.f32.gmra.mrb[0].mxu0 %v207
  %v2227 = vpop.f32.mrb[0].mxu0
  %v2228 = vadd.f32 %v2083, %v2227
  %v2229 = vpop.f32.mrb[0].mxu0
  %2230 = vmatprep.mubr.f32.mxu0 %v233
  %2231 = vmatmul.mubr.f32.gmra.mrb[0].mxu0 %v232
  %v2232 = vpop.f32.mrb[0].mxu0
  %v2233 = vadd.f32 %v2088, %v2232
  %v2234 = vpop.f32.mrb[0].mxu0
  %2235 = vmatprep.mubr.f32.mxu0 %v258
  %2236 = vmatmul.mubr.f32.gmra.mrb[0].mxu0 %v257
  %v2237 = vpop.f32.mrb[0].mxu0
  %v2238 = vadd.f32 %v2093, %v2237
  %v2239 = vpop.f32.mrb[0].mxu0
  %2240 = vmatprep.mubr.f32.mxu0 %v283
  %2241 = vmatmul.mubr.f32.gmra.mrb[0].mxu0 %v282
  %v2242 = vpop.f32.mrb[0].mxu0
  %v2243 = vadd.f32 %v2098, %v2242
  %v2244 = vpop.f32.mrb[0].mxu0
  %2245 = vmatprep.mubr.f32.mxu0 %v308
  %2246 = vmatmul.mubr.f32.gmra.mrb[0].mxu0 %v307
  %v2247 = vpop.f32.mrb[0].mxu0
  %v2248 = vadd.f32 %v2103, %v2247
  %v2249 = vpop.f32.mrb[0].mxu0
  %2250 = vmatprep.mubr.f32.mxu0 %v333
  %2251 = vmatmul.mubr.f32.gmra.mrb[0].mxu0 %v332
  %v2252 = vpop.f32.mrb[0].mxu0
  %v2253 = vadd.f32 %v2108, %v2252
  %v2254 = vpop.f32.mrb[0].mxu0
  %2255 = vmatprep.mubr.f32.mxu0 %v358
  %2256 = vmatmul.mubr.f32.gmra.mrb[0].mxu0 %v357
  %v2257 = vpop.f32.mrb[0].mxu0
  %v2258 = vadd.f32 %v2113, %v2257
  %v2259 = vpop.f32.mrb[0].mxu0
  %2260 = vmatprep.mubr.f32.mxu0 %v383
  %2261 = vmatmul.mubr.f32.gmra.mrb[0].mxu0 %v382
  %v2262 = vpop.f32.mrb[0].mxu0
  %v2263 = vadd.f32 %v2118, %v2262
  %v2264 = vpop.f32.mrb[0].mxu0
  %2265 = vmatprep.mubr.f32.mxu0 %v408
  %2266 = vmatmul.mubr.f32.gmra.mrb[0].mxu0 %v407
  %v2267 = vpop.f32.mrb[0].mxu0
  %v2268 = vadd.f32 %v2123, %v2267
  %v2269 = vpop.f32.mrb[0].mxu0
  %2270 = vdwg.mxu0
  %2271 = vmatprep.subr.mxu0 0.0
  %2272 = vmatpush1.msra.mxu0 %v734
  %2273 = vmatprep.subr.mxu0 0.0
  %2274 = vmatpush1.msra.mxu0 %v735
  %2275 = vmatprep.subr.mxu0 0.0
  %2276 = vmatpush1.msra.mxu0 %v736
  %2277 = vmatprep.subr.mxu0 0.0
  %2278 = vmatpush1.msra.mxu0 %v737
  %2279 = vmatprep.subr.mxu0 0.0
  %2280 = vmatpush1.msra.mxu0 %v738
  %2281 = vmatprep.subr.mxu0 0.0
  %2282 = vmatpush1.msra.mxu0 %v739
  %2283 = vmatprep.subr.mxu0 0.0
  %2284 = vmatpush1.msra.mxu0 %v740
  %2285 = vmatprep.subr.mxu0 0.0
  %2286 = vmatpush1.msra.mxu0 %v741
  %2287 = vmatprep.subr.mxu0 0.0
  %2288 = vmatpush1.msra.mxu0 %v742
  %2289 = vmatprep.subr.mxu0 0.0
  %2290 = vmatpush1.msra.mxu0 %v743
  %2291 = vmatprep.subr.mxu0 0.0
  %2292 = vmatpush1.msra.mxu0 %v744
  %2293 = vmatprep.subr.mxu0 0.0
  %2294 = vmatpush1.msra.mxu0 %v745
  %2295 = vmatprep.subr.mxu0 0.0
  %2296 = vmatpush1.msra.mxu0 %v746
  %2297 = vmatprep.subr.mxu0 0.0
  %2298 = vmatpush1.msra.mxu0 %v747
  %2299 = vmatprep.subr.mxu0 0.0
  %2300 = vmatpush1.msra.mxu0 %v748
  %2301 = vmatprep.subr.mxu0 0.0
  %2302 = vmatpush1.msra.mxu0 %v749
  %2303 = vmatprep.subr.mxu0 0.0
  %2304 = vmatpush1.msra.mxu0 %v750
  %2305 = vmatprep.subr.mxu0 0.0
  %2306 = vmatpush1.msra.mxu0 %v751
  %2307 = vmatprep.subr.mxu0 0.0
  %2308 = vmatpush1.msra.mxu0 %v752
  %2309 = vmatprep.subr.mxu0 0.0
  %2310 = vmatpush1.msra.mxu0 %v753
  %2311 = vmatprep.subr.mxu0 0.0
  %2312 = vmatpush1.msra.mxu0 %v754
  %2313 = vmatprep.subr.mxu0 0.0
  %2314 = vmatpush1.msra.mxu0 %v755
  %2315 = vmatprep.subr.mxu0 0.0
  %2316 = vmatpush1.msra.mxu0 %v756
  %2317 = vmatprep.subr.mxu0 0.0
  %2318 = vmatpush1.msra.mxu0 %v757
  %2319 = vmatprep.subr.mxu0 0.0
  %2320 = vmatpush1.msra.mxu0 %v758
  %2321 = vmatprep.subr.mxu0 0.0
  %2322 = vmatpush1.msra.mxu0 %v759
  %2323 = vmatprep.subr.mxu0 0.0
  %2324 = vmatpush1.msra.mxu0 %v760
  %2325 = vmatprep.subr.mxu0 0.0
  %2326 = vmatpush1.msra.mxu0 %v761
  %2327 = vmatprep.subr.mxu0 0.0
  %2328 = vmatpush1.msra.mxu0 %v762
  %2329 = vmatprep.subr.mxu0 0.0
  %2330 = vmatpush1.msra.mxu0 %v763
  %2331 = vmatprep.subr.mxu0 0.0
  %2332 = vmatpush1.msra.mxu0 %v764
  %2333 = vmatprep.subr.mxu0 0.0
  %2334 = vmatpush1.msra.mxu0 %v765
  %2335 = vmatprep.mubr.f32.mxu0 %v35
  %2336 = vmatmul.mubr.f32.gmra.mrb[0].mxu0 %v34
  %v2337 = vpop.f32.mrb[0].mxu0
  %v2338 = vadd.f32 %v2193, %v2337
  %v2339 = vpop.f32.mrb[0].mxu0
  %2340 = vmatprep.mubr.f32.mxu0 %v60
  %2341 = vmatmul.mubr.f32.gmra.mrb[0].mxu0 %v59
  %v2342 = vpop.f32.mrb[0].mxu0
  %v2343 = vadd.f32 %v2198, %v2342
  %v2344 = vpop.f32.mrb[0].mxu0
  %2345 = vmatprep.mubr.f32.mxu0 %v85
  %2346 = vmatmul.mubr.f32.gmra.mrb[0].mxu0 %v84
  %v2347 = vpop.f32.mrb[0].mxu0
  %v2348 = vadd.f32 %v2203, %v2347
  %v2349 = vpop.f32.mrb[0].mxu0
  %2350 = vmatprep.mubr.f32.mxu0 %v110
  %2351 = vmatmul.mubr.f32.gmra.mrb[0].mxu0 %v109
  %v2352 = vpop.f32.mrb[0].mxu0
  %v2353 = vadd.f32 %v2208, %v2352
  %v2354 = vpop.f32.mrb[0].mxu0
  %2355 = vmatprep.mubr.f32.mxu0 %v135
  %2356 = vmatmul.mubr.f32.gmra.mrb[0].mxu0 %v134
  %v2357 = vpop.f32.mrb[0].mxu0
  %v2358 = vadd.f32 %v2213, %v2357
  %v2359 = vpop.f32.mrb[0].mxu0
  %2360 = vmatprep.mubr.f32.mxu0 %v160
  %2361 = vmatmul.mubr.f32.gmra.mrb[0].mxu0 %v159
  %v2362 = vpop.f32.mrb[0].mxu0
  %v2363 = vadd.f32 %v2218, %v2362
  %v2364 = vpop.f32.mrb[0].mxu0
  %2365 = vmatprep.mubr.f32.mxu0 %v185
  %2366 = vmatmul.mubr.f32.gmra.mrb[0].mxu0 %v184
  %v2367 = vpop.f32.mrb[0].mxu0
  %v2368 = vadd.f32 %v2223, %v2367
  %v2369 = vpop.f32.mrb[0].mxu0
  %2370 = vmatprep.mubr.f32.mxu0 %v210
  %2371 = vmatmul.mubr.f32.gmra.mrb[0].mxu0 %v209
  %v2372 = vpop.f32.mrb[0].mxu0
  %v2373 = vadd.f32 %v2228, %v2372
  %v2374 = vpop.f32.mrb[0].mxu0
  %2375 = vmatprep.mubr.f32.mxu0 %v235
  %2376 = vmatmul.mubr.f32.gmra.mrb[0].mxu0 %v234
  %v2377 = vpop.f32.mrb[0].mxu0
  %v2378 = vadd.f32 %v2233, %v2377
  %v2379 = vpop.f32.mrb[0].mxu0
  %2380 = vmatprep.mubr.f32.mxu0 %v260
  %2381 = vmatmul.mubr.f32.gmra.mrb[0].mxu0 %v259
  %v2382 = vpop.f32.mrb[0].mxu0
  %v2383 = vadd.f32 %v2238, %v2382
  %v2384 = vpop.f32.mrb[0].mxu0
  %2385 = vmatprep.mubr.f32.mxu0 %v285
  %2386 = vmatmul.mubr.f32.gmra.mrb[0].mxu0 %v284
  %v2387 = vpop.f32.mrb[0].mxu0
  %v2388 = vadd.f32 %v2243, %v2387
  %v2389 = vpop.f32.mrb[0].mxu0
  %2390 = vmatprep.mubr.f32.mxu0 %v310
  %2391 = vmatmul.mubr.f32.gmra.mrb[0].mxu0 %v309
  %v2392 = vpop.f32.mrb[0].mxu0
  %v2393 = vadd.f32 %v2248, %v2392
  %v2394 = vpop.f32.mrb[0].mxu0
  %2395 = vmatprep.mubr.f32.mxu0 %v335
  %2396 = vmatmul.mubr.f32.gmra.mrb[0].mxu0 %v334
  %v2397 = vpop.f32.mrb[0].mxu0
  %v2398 = vadd.f32 %v2253, %v2397
  %v2399 = vpop.f32.mrb[0].mxu0
  %2400 = vmatprep.mubr.f32.mxu0 %v360
  %2401 = vmatmul.mubr.f32.gmra.mrb[0].mxu0 %v359
  %v2402 = vpop.f32.mrb[0].mxu0
  %v2403 = vadd.f32 %v2258, %v2402
  %v2404 = vpop.f32.mrb[0].mxu0
  %2405 = vmatprep.mubr.f32.mxu0 %v385
  %2406 = vmatmul.mubr.f32.gmra.mrb[0].mxu0 %v384
  %v2407 = vpop.f32.mrb[0].mxu0
  %v2408 = vadd.f32 %v2263, %v2407
  %v2409 = vpop.f32.mrb[0].mxu0
  %2410 = vmatprep.mubr.f32.mxu0 %v410
  %2411 = vmatmul.mubr.f32.gmra.mrb[0].mxu0 %v409
  %v2412 = vpop.f32.mrb[0].mxu0
  %v2413 = vadd.f32 %v2268, %v2412
  %v2414 = vpop.f32.mrb[0].mxu0
  %2415 = vdwg.mxu0
  %2416 = vmatprep.subr.mxu0 0.0
  %2417 = vmatpush1.msra.mxu0 %v766
  %2418 = vmatprep.subr.mxu0 0.0
  %2419 = vmatpush1.msra.mxu0 %v767
  %2420 = vmatprep.subr.mxu0 0.0
  %2421 = vmatpush1.msra.mxu0 %v768
  %2422 = vmatprep.subr.mxu0 0.0
  %2423 = vmatpush1.msra.mxu0 %v769
  %2424 = vmatprep.subr.mxu0 0.0
  %2425 = vmatpush1.msra.mxu0 %v770
  %2426 = vmatprep.subr.mxu0 0.0
  %2427 = vmatpush1.msra.mxu0 %v771
  %2428 = vmatprep.subr.mxu0 0.0
  %2429 = vmatpush1.msra.mxu0 %v772
  %2430 = vmatprep.subr.mxu0 0.0
  %2431 = vmatpush1.msra.mxu0 %v773
  %2432 = vmatprep.subr.mxu0 0.0
  %2433 = vmatpush1.msra.mxu0 %v774
  %2434 = vmatprep.subr.mxu0 0.0
  %2435 = vmatpush1.msra.mxu0 %v775
  %2436 = vmatprep.subr.mxu0 0.0
  %2437 = vmatpush1.msra.mxu0 %v776
  %2438 = vmatprep.subr.mxu0 0.0
  %2439 = vmatpush1.msra.mxu0 %v777
  %2440 = vmatprep.subr.mxu0 0.0
  %2441 = vmatpush1.msra.mxu0 %v778
  %2442 = vmatprep.subr.mxu0 0.0
  %2443 = vmatpush1.msra.mxu0 %v779
  %2444 = vmatprep.subr.mxu0 0.0
  %2445 = vmatpush1.msra.mxu0 %v780
  %2446 = vmatprep.subr.mxu0 0.0
  %2447 = vmatpush1.msra.mxu0 %v781
  %2448 = vmatprep.subr.mxu0 0.0
  %2449 = vmatpush1.msra.mxu0 %v782
  %2450 = vmatprep.subr.mxu0 0.0
  %2451 = vmatpush1.msra.mxu0 %v783
  %2452 = vmatprep.subr.mxu0 0.0
  %2453 = vmatpush1.msra.mxu0 %v784
  %2454 = vmatprep.subr.mxu0 0.0
  %2455 = vmatpush1.msra.mxu0 %v785
  %2456 = vmatprep.subr.mxu0 0.0
  %2457 = vmatpush1.msra.mxu0 %v786
  %2458 = vmatprep.subr.mxu0 0.0
  %2459 = vmatpush1.msra.mxu0 %v787
  %2460 = vmatprep.subr.mxu0 0.0
  %2461 = vmatpush1.msra.mxu0 %v788
  %2462 = vmatprep.subr.mxu0 0.0
  %2463 = vmatpush1.msra.mxu0 %v789
  %2464 = vmatprep.subr.mxu0 0.0
  %2465 = vmatpush1.msra.mxu0 %v790
  %2466 = vmatprep.subr.mxu0 0.0
  %2467 = vmatpush1.msra.mxu0 %v791
  %2468 = vmatprep.subr.mxu0 0.0
  %2469 = vmatpush1.msra.mxu0 %v792
  %2470 = vmatprep.subr.mxu0 0.0
  %2471 = vmatpush1.msra.mxu0 %v793
  %2472 = vmatprep.subr.mxu0 0.0
  %2473 = vmatpush1.msra.mxu0 %v794
  %2474 = vmatprep.subr.mxu0 0.0
  %2475 = vmatpush1.msra.mxu0 %v795
  %2476 = vmatprep.subr.mxu0 0.0
  %2477 = vmatpush1.msra.mxu0 %v796
  %2478 = vmatprep.subr.mxu0 0.0
  %2479 = vmatpush1.msra.mxu0 %v797
  %2480 = vmatprep.mubr.f32.mxu0 %v37
  %2481 = vmatmul.mubr.f32.gmra.mrb[0].mxu0 %v36
  %v2482 = vpop.f32.mrb[0].mxu0
  %v2483 = vadd.f32 %v2338, %v2482
  %v2484 = vpop.f32.mrb[0].mxu0
  %2485 = vmatprep.mubr.f32.mxu0 %v62
  %2486 = vmatmul.mubr.f32.gmra.mrb[0].mxu0 %v61
  %v2487 = vpop.f32.mrb[0].mxu0
  %v2488 = vadd.f32 %v2343, %v2487
  %v2489 = vpop.f32.mrb[0].mxu0
  %2490 = vmatprep.mubr.f32.mxu0 %v87
  %2491 = vmatmul.mubr.f32.gmra.mrb[0].mxu0 %v86
  %v2492 = vpop.f32.mrb[0].mxu0
  %v2493 = vadd.f32 %v2348, %v2492
  %v2494 = vpop.f32.mrb[0].mxu0
  %2495 = vmatprep.mubr.f32.mxu0 %v112
  %2496 = vmatmul.mubr.f32.gmra.mrb[0].mxu0 %v111
  %v2497 = vpop.f32.mrb[0].mxu0
  %v2498 = vadd.f32 %v2353, %v2497
  %v2499 = vpop.f32.mrb[0].mxu0
  %2500 = vmatprep.mubr.f32.mxu0 %v137
  %2501 = vmatmul.mubr.f32.gmra.mrb[0].mxu0 %v136
  %v2502 = vpop.f32.mrb[0].mxu0
  %v2503 = vadd.f32 %v2358, %v2502
  %v2504 = vpop.f32.mrb[0].mxu0
  %2505 = vmatprep.mubr.f32.mxu0 %v162
  %2506 = vmatmul.mubr.f32.gmra.mrb[0].mxu0 %v161
  %v2507 = vpop.f32.mrb[0].mxu0
  %v2508 = vadd.f32 %v2363, %v2507
  %v2509 = vpop.f32.mrb[0].mxu0
  %2510 = vmatprep.mubr.f32.mxu0 %v187
  %2511 = vmatmul.mubr.f32.gmra.mrb[0].mxu0 %v186
  %v2512 = vpop.f32.mrb[0].mxu0
  %v2513 = vadd.f32 %v2368, %v2512
  %v2514 = vpop.f32.mrb[0].mxu0
  %2515 = vmatprep.mubr.f32.mxu0 %v212
  %2516 = vmatmul.mubr.f32.gmra.mrb[0].mxu0 %v211
  %v2517 = vpop.f32.mrb[0].mxu0
  %v2518 = vadd.f32 %v2373, %v2517
  %v2519 = vpop.f32.mrb[0].mxu0
  %2520 = vmatprep.mubr.f32.mxu0 %v237
  %2521 = vmatmul.mubr.f32.gmra.mrb[0].mxu0 %v236
  %v2522 = vpop.f32.mrb[0].mxu0
  %v2523 = vadd.f32 %v2378, %v2522
  %v2524 = vpop.f32.mrb[0].mxu0
  %2525 = vmatprep.mubr.f32.mxu0 %v262
  %2526 = vmatmul.mubr.f32.gmra.mrb[0].mxu0 %v261
  %v2527 = vpop.f32.mrb[0].mxu0
  %v2528 = vadd.f32 %v2383, %v2527
  %v2529 = vpop.f32.mrb[0].mxu0
  %2530 = vmatprep.mubr.f32.mxu0 %v287
  %2531 = vmatmul.mubr.f32.gmra.mrb[0].mxu0 %v286
  %v2532 = vpop.f32.mrb[0].mxu0
  %v2533 = vadd.f32 %v2388, %v2532
  %v2534 = vpop.f32.mrb[0].mxu0
  %2535 = vmatprep.mubr.f32.mxu0 %v312
  %2536 = vmatmul.mubr.f32.gmra.mrb[0].mxu0 %v311
  %v2537 = vpop.f32.mrb[0].mxu0
  %v2538 = vadd.f32 %v2393, %v2537
  %v2539 = vpop.f32.mrb[0].mxu0
  %2540 = vmatprep.mubr.f32.mxu0 %v337
  %2541 = vmatmul.mubr.f32.gmra.mrb[0].mxu0 %v336
  %v2542 = vpop.f32.mrb[0].mxu0
  %v2543 = vadd.f32 %v2398, %v2542
  %v2544 = vpop.f32.mrb[0].mxu0
  %2545 = vmatprep.mubr.f32.mxu0 %v362
  %2546 = vmatmul.mubr.f32.gmra.mrb[0].mxu0 %v361
  %v2547 = vpop.f32.mrb[0].mxu0
  %v2548 = vadd.f32 %v2403, %v2547
  %v2549 = vpop.f32.mrb[0].mxu0
  %2550 = vmatprep.mubr.f32.mxu0 %v387
  %2551 = vmatmul.mubr.f32.gmra.mrb[0].mxu0 %v386
  %v2552 = vpop.f32.mrb[0].mxu0
  %v2553 = vadd.f32 %v2408, %v2552
  %v2554 = vpop.f32.mrb[0].mxu0
  %2555 = vmatprep.mubr.f32.mxu0 %v412
  %2556 = vmatmul.mubr.f32.gmra.mrb[0].mxu0 %v411
  %v2557 = vpop.f32.mrb[0].mxu0
  %v2558 = vadd.f32 %v2413, %v2557
  %v2559 = vpop.f32.mrb[0].mxu0
  %2560 = vdwg.mxu0
  %2561 = vmatprep.subr.mxu0 0.0
  %2562 = vmatpush1.msra.mxu0 %v798
  %2563 = vmatprep.subr.mxu0 0.0
  %2564 = vmatpush1.msra.mxu0 %v799
  %2565 = vmatprep.subr.mxu0 0.0
  %2566 = vmatpush1.msra.mxu0 %v800
  %2567 = vmatprep.subr.mxu0 0.0
  %2568 = vmatpush1.msra.mxu0 %v801
  %2569 = vmatprep.subr.mxu0 0.0
  %2570 = vmatpush1.msra.mxu0 %v802
  %2571 = vmatprep.subr.mxu0 0.0
  %2572 = vmatpush1.msra.mxu0 %v803
  %2573 = vmatprep.subr.mxu0 0.0
  %2574 = vmatpush1.msra.mxu0 %v804
  %2575 = vmatprep.subr.mxu0 0.0
  %2576 = vmatpush1.msra.mxu0 %v805
  %2577 = vmatprep.subr.mxu0 0.0
  %2578 = vmatpush1.msra.mxu0 %v806
  %2579 = vmatprep.subr.mxu0 0.0
  %2580 = vmatpush1.msra.mxu0 %v807
  %2581 = vmatprep.subr.mxu0 0.0
  %2582 = vmatpush1.msra.mxu0 %v808
  %2583 = vmatprep.subr.mxu0 0.0
  %2584 = vmatpush1.msra.mxu0 %v809
  %2585 = vmatprep.subr.mxu0 0.0
  %2586 = vmatpush1.msra.mxu0 %v810
  %2587 = vmatprep.subr.mxu0 0.0
  %2588 = vmatpush1.msra.mxu0 %v811
  %2589 = vmatprep.subr.mxu0 0.0
  %2590 = vmatpush1.msra.mxu0 %v812
  %2591 = vmatprep.subr.mxu0 0.0
  %2592 = vmatpush1.msra.mxu0 %v813
  %2593 = vmatprep.subr.mxu0 0.0
  %2594 = vmatpush1.msra.mxu0 0.0
  %2595 = vmatprep.subr.mxu0 0.0
  %2596 = vmatpush1.msra.mxu0 0.0
  %2597 = vmatprep.subr.mxu0 0.0
  %2598 = vmatpush1.msra.mxu0 0.0
  %2599 = vmatprep.subr.mxu0 0.0
  %2600 = vmatpush1.msra.mxu0 0.0
  %2601 = vmatprep.subr.mxu0 0.0
  %2602 = vmatpush1.msra.mxu0 0.0
  %2603 = vmatprep.subr.mxu0 0.0
  %2604 = vmatpush1.msra.mxu0 0.0
  %2605 = vmatprep.subr.mxu0 0.0
  %2606 = vmatpush1.msra.mxu0 0.0
  %2607 = vmatprep.subr.mxu0 0.0
  %2608 = vmatpush1.msra.mxu0 0.0
  %2609 = vmatprep.subr.mxu0 0.0
  %2610 = vmatpush1.msra.mxu0 0.0
  %2611 = vmatprep.subr.mxu0 0.0
  %2612 = vmatpush1.msra.mxu0 0.0
  %2613 = vmatprep.subr.mxu0 0.0
  %2614 = vmatpush1.msra.mxu0 0.0
  %2615 = vmatprep.subr.mxu0 0.0
  %2616 = vmatpush1.msra.mxu0 0.0
  %2617 = vmatprep.subr.mxu0 0.0
  %2618 = vmatpush1.msra.mxu0 0.0
  %2619 = vmatprep.subr.mxu0 0.0
  %2620 = vmatpush1.msra.mxu0 0.0
  %2621 = vmatprep.subr.mxu0 0.0
  %2622 = vmatpush1.msra.mxu0 0.0
  %2623 = vmatprep.subr.mxu0 0.0
  %2624 = vmatpush1.msra.mxu0 0.0
  %2625 = vmatprep.mubr.f32.mxu0 0.0
  %2626 = vmatmul.mubr.f32.gmra.mrb[0].mxu0 %v38
  %v2627 = vpop.f32.mrb[0].mxu0
  %v2628 = vadd.f32 %v2483, %v2627
  %v2629 = vpop.f32.mrb[0].mxu0
  %2630 = vmatprep.mubr.f32.mxu0 0.0
  %2631 = vmatmul.mubr.f32.gmra.mrb[0].mxu0 %v63
  %v2632 = vpop.f32.mrb[0].mxu0
  %v2633 = vadd.f32 %v2488, %v2632
  %v2634 = vpop.f32.mrb[0].mxu0
  %2635 = vmatprep.mubr.f32.mxu0 0.0
  %2636 = vmatmul.mubr.f32.gmra.mrb[0].mxu0 %v88
  %v2637 = vpop.f32.mrb[0].mxu0
  %v2638 = vadd.f32 %v2493, %v2637
  %v2639 = vpop.f32.mrb[0].mxu0
  %2640 = vmatprep.mubr.f32.mxu0 0.0
  %2641 = vmatmul.mubr.f32.gmra.mrb[0].mxu0 %v113
  %v2642 = vpop.f32.mrb[0].mxu0
  %v2643 = vadd.f32 %v2498, %v2642
  %v2644 = vpop.f32.mrb[0].mxu0
  %2645 = vmatprep.mubr.f32.mxu0 0.0
  %2646 = vmatmul.mubr.f32.gmra.mrb[0].mxu0 %v138
  %v2647 = vpop.f32.mrb[0].mxu0
  %v2648 = vadd.f32 %v2503, %v2647
  %v2649 = vpop.f32.mrb[0].mxu0
  %2650 = vmatprep.mubr.f32.mxu0 0.0
  %2651 = vmatmul.mubr.f32.gmra.mrb[0].mxu0 %v163
  %v2652 = vpop.f32.mrb[0].mxu0
  %v2653 = vadd.f32 %v2508, %v2652
  %v2654 = vpop.f32.mrb[0].mxu0
  %2655 = vmatprep.mubr.f32.mxu0 0.0
  %2656 = vmatmul.mubr.f32.gmra.mrb[0].mxu0 %v188
  %v2657 = vpop.f32.mrb[0].mxu0
  %v2658 = vadd.f32 %v2513, %v2657
  %v2659 = vpop.f32.mrb[0].mxu0
  %2660 = vmatprep.mubr.f32.mxu0 0.0
  %2661 = vmatmul.mubr.f32.gmra.mrb[0].mxu0 %v213
  %v2662 = vpop.f32.mrb[0].mxu0
  %v2663 = vadd.f32 %v2518, %v2662
  %v2664 = vpop.f32.mrb[0].mxu0
  %2665 = vmatprep.mubr.f32.mxu0 0.0
  %2666 = vmatmul.mubr.f32.gmra.mrb[0].mxu0 %v238
  %v2667 = vpop.f32.mrb[0].mxu0
  %v2668 = vadd.f32 %v2523, %v2667
  %v2669 = vpop.f32.mrb[0].mxu0
  %2670 = vmatprep.mubr.f32.mxu0 0.0
  %2671 = vmatmul.mubr.f32.gmra.mrb[0].mxu0 %v263
  %v2672 = vpop.f32.mrb[0].mxu0
  %v2673 = vadd.f32 %v2528, %v2672
  %v2674 = vpop.f32.mrb[0].mxu0
  %2675 = vmatprep.mubr.f32.mxu0 0.0
  %2676 = vmatmul.mubr.f32.gmra.mrb[0].mxu0 %v288
  %v2677 = vpop.f32.mrb[0].mxu0
  %v2678 = vadd.f32 %v2533, %v2677
  %v2679 = vpop.f32.mrb[0].mxu0
  %2680 = vmatprep.mubr.f32.mxu0 0.0
  %2681 = vmatmul.mubr.f32.gmra.mrb[0].mxu0 %v313
  %v2682 = vpop.f32.mrb[0].mxu0
  %v2683 = vadd.f32 %v2538, %v2682
  %v2684 = vpop.f32.mrb[0].mxu0
  %2685 = vmatprep.mubr.f32.mxu0 0.0
  %2686 = vmatmul.mubr.f32.gmra.mrb[0].mxu0 %v338
  %v2687 = vpop.f32.mrb[0].mxu0
  %v2688 = vadd.f32 %v2543, %v2687
  %v2689 = vpop.f32.mrb[0].mxu0
  %2690 = vmatprep.mubr.f32.mxu0 0.0
  %2691 = vmatmul.mubr.f32.gmra.mrb[0].mxu0 %v363
  %v2692 = vpop.f32.mrb[0].mxu0
  %v2693 = vadd.f32 %v2548, %v2692
  %v2694 = vpop.f32.mrb[0].mxu0
  %2695 = vmatprep.mubr.f32.mxu0 0.0
  %2696 = vmatmul.mubr.f32.gmra.mrb[0].mxu0 %v388
  %v2697 = vpop.f32.mrb[0].mxu0
  %v2698 = vadd.f32 %v2553, %v2697
  %v2699 = vpop.f32.mrb[0].mxu0
  %2700 = vmatprep.mubr.f32.mxu0 0.0
  %2701 = vmatmul.mubr.f32.gmra.mrb[0].mxu0 %v413
  %v2702 = vpop.f32.mrb[0].mxu0
  %v2703 = vadd.f32 %v2558, %v2702
  %v2704 = vpop.f32.mrb[0].mxu0
  %2705 = vdwg.mxu0
  %v2706 = vmax.f32 %v2628, %v2648
  %v2707 = vmax.f32 %v2633, %v2653
  %v2708 = vmax.f32 %v2638, %v2658
  %v2709 = vmax.f32 %v2643, %v2663
  %v2710 = vmax.f32 %v2668, %v2688
  %v2711 = vmax.f32 %v2673, %v2693
  %v2712 = vmax.f32 %v2678, %v2698
  %v2713 = vmax.f32 %v2683, %v2703
  %v2714 = vmax.f32 %v2706, %v2710
  %v2715 = vmax.f32 %v2707, %v2711
  %v2716 = vmax.f32 %v2708, %v2712
  %v2717 = vmax.f32 %v2709, %v2713
  %v2718 = vmax.f32 %v2714, 0.0
  %v2719 = vmax.f32 %v2715, 0.0
  %v2720 = vmax.f32 %v2716, 0.0
  %v2721 = vmax.f32 %v2717, 0.0
  %2722 = vst [vmem:[%s3] sm:$0xff] %v2718
  %2723 = vst [vmem:[%s3 + $0x8] sm:$0xff] %v2719
  %2724 = vst [vmem:[%s3 + $0x10] sm:$0xff] %v2720
  %2725 = vst [vmem:[%s3 + $0x18] sm:$0xff] %v2721
  // Predicated region
  $region14: #{net_forward.4} parent=0 // pred_check
    _
  $region15: #{net_forward.4} parent=0 // pred_check_branch
    %2727 = sbr.rel (0) target = $region17
  $region16: #{net_forward.4} parent=0 // pred_region
    _
  $region17: #{net_forward.4} parent=0 // pred_fallthru
    _
  // Predicated region
  $region18: #{net_forward.4} parent=0 // pred_check
    _
  $region19: #{net_forward.4} parent=0 // pred_check_branch
    %2729 = sbr.rel (0) target = $region21
  $region20: #{net_forward.4} parent=0 // pred_region
    _
  $region21: #{net_forward.4} parent=0 // pred_fallthru
    _

// kernel: net_forward.5
$region0: #{net_forward.5}
  #allocation0 [shape = 'u32[]', space=smem, size = 0x4, offset = 0x4, fixed_abs, tag = 'smem constant byte address 0x4 - core index']
  #allocation1 [shape = 'u32[144,128]{1,0:T(1,128)}', space=vmem, size = 0x12000, scoped, tag = 'internal scratch']
  %s0 = inlined_call_operand.vmem [shape: f32[2,2048], index: 0, kind: input, shape index: {}]
  %s1 = inlined_call_operand.vmem [shape: f32[2048,128], index: 1, kind: input, shape index: {}]
  %s2 = inlined_call_operand.vmem [shape: f32[1,128], index: 2, kind: input, shape index: {}]
  %s3 = inlined_call_operand.vmem [shape: f32[128,128], index: 3, kind: input, shape index: {}]
  %s4 = inlined_call_operand.vmem [shape: f32[1,128], index: 4, kind: input, shape index: {}]
  %s5 = inlined_call_operand.hbm [shape: f32[2,128], index: 5, kind: output, shape index: {}]
  %s6 = sld [smem:[#allocation0]]
  $region30: #{net_forward.5} parent=0
    _
  %s8 = ssub.s32 1, %s6
  %s9 = scalar_select 0, %s8, %s6
  $region1: #{net_forward.5} parent=0
    #allocation2 [shape = 'u8[1024]{0}', space=vmem, size = 0x400, scoped, tag = 'output window, operand 0, single buffered']
    #allocation3 [shape = 's32[1]{0}', space=sflag, size = 0x4, scoped, tag = 'scoped memory for net_forward.5']
    %10 = vsyncpa [#allocation3], 0
    // Predicated region
    $region2: #{net_forward.5} parent=1 // pred_check
      _
    $region3: #{net_forward.5} parent=1 // pred_check_branch
      %12 = sbr.rel (0) target = $region5
    $region4: #{net_forward.5} parent=1 // pred_region
      _
    $region5: #{net_forward.5} parent=1 // pred_fallthru
      _
    // Predicated region
    $region6: #{net_forward.5} parent=1 // pred_check
      _
    $region7: #{net_forward.5} parent=1 // pred_check_branch
      %14 = sbr.rel (0) target = $region9
    $region8: #{net_forward.5} parent=1 // pred_region
      _
    $region9: #{net_forward.5} parent=1 // pred_fallthru
      _
    // Predicated region
    $region10: #{net_forward.5} parent=1 // pred_check
      _
    $region11: #{net_forward.5} parent=1 // pred_check_branch
      %16 = sbr.rel (0) target = $region13
    $region12: #{net_forward.5} parent=1 // pred_region
      _
    $region13: #{net_forward.5} parent=1 // pred_fallthru
      _
    // Predicated region
    $region14: #{net_forward.5} parent=1 // pred_check
      _
    $region15: #{net_forward.5} parent=1 // pred_check_branch
      %18 = sbr.rel (0) target = $region17
    $region16: #{net_forward.5} parent=1 // pred_region
      _
    $region17: #{net_forward.5} parent=1 // pred_fallthru
      _
    // Predicated region
    $region18: #{net_forward.5} parent=1 // pred_check
      _
    $region19: #{net_forward.5} parent=1 // pred_check_branch
      %20 = sbr.rel (0) target = $region21
    $region20: #{net_forward.5} parent=1 // pred_region
      _
    $region21: #{net_forward.5} parent=1 // pred_fallthru
      _
    %v21 = vld [vmem:[%s0] sm:$0xff]
    %v22 = vld [vmem:[%s0 + $0x8] sm:$0xff]
    %v23 = vld [vmem:[%s0 + $0x10] sm:$0xff]
    %v24 = vld [vmem:[%s0 + $0x18] sm:$0xff]
    %v25 = vld [vmem:[%s1] sm:$0xff]
    %v26 = vld [vmem:[%s1 + $0x8] sm:$0xff]
    %v27 = vld [vmem:[%s1 + $0x10] sm:$0xff]
    %v28 = vld [vmem:[%s1 + $0x18] sm:$0xff]
    %v29 = vld [vmem:[%s1 + $0x20] sm:$0xff]
    %v30 = vld [vmem:[%s1 + $0x28] sm:$0xff]
    %v31 = vld [vmem:[%s1 + $0x30] sm:$0xff]
    %v32 = vld [vmem:[%s1 + $0x38] sm:$0xff]
    %v33 = vld [vmem:[%s1 + $0x40] sm:$0xff]
    %v34 = vld [vmem:[%s1 + $0x48] sm:$0xff]
    %v35 = vld [vmem:[%s1 + $0x50] sm:$0xff]
    %v36 = vld [vmem:[%s1 + $0x58] sm:$0xff]
    %v37 = vld [vmem:[%s1 + $0x60] sm:$0xff]
    %v38 = vld [vmem:[%s1 + $0x68] sm:$0xff]
    %v39 = vld [vmem:[%s1 + $0x70] sm:$0xff]
    %v40 = vld [vmem:[%s1 + $0x78] sm:$0xff]
    %v41 = vld [vmem:[%s1 + $0x80] sm:$0xff]
    %v42 = vld [vmem:[%s1 + $0x88] sm:$0xff]
    %v43 = vld [vmem:[%s1 + $0x90] sm:$0xff]
    %v44 = vld [vmem:[%s1 + $0x98] sm:$0xff]
    %v45 = vld [vmem:[%s1 + $0xa0] sm:$0xff]
    %v46 = vld [vmem:[%s1 + $0xa8] sm:$0xff]
    %v47 = vld [vmem:[%s1 + $0xb0] sm:$0xff]
    %v48 = vld [vmem:[%s1 + $0xb8] sm:$0xff]
    %v49 = vld [vmem:[%s1 + $0xc0] sm:$0xff]
    %v50 = vld [vmem:[%s1 + $0xc8] sm:$0xff]
    %v51 = vld [vmem:[%s1 + $0xd0] sm:$0xff]
    %v52 = vld [vmem:[%s1 + $0xd8] sm:$0xff]
    %v53 = vld [vmem:[%s1 + $0xe0] sm:$0xff]
    %v54 = vld [vmem:[%s1 + $0xe8] sm:$0xff]
    %v55 = vld [vmem:[%s1 + $0xf0] sm:$0xff]
    %v56 = vld [vmem:[%s1 + $0xf8] sm:$0xff]
    %v57 = vld [vmem:[%s1 + $0x100] sm:$0xff]
    %v58 = vld [vmem:[%s1 + $0x108] sm:$0xff]
    %v59 = vld [vmem:[%s1 + $0x110] sm:$0xff]
    %v60 = vld [vmem:[%s1 + $0x118] sm:$0xff]
    %v61 = vld [vmem:[%s1 + $0x120] sm:$0xff]
    %v62 = vld [vmem:[%s1 + $0x128] sm:$0xff]
    %v63 = vld [vmem:[%s1 + $0x130] sm:$0xff]
    %v64 = vld [vmem:[%s1 + $0x138] sm:$0xff]
    %v65 = vld [vmem:[%s1 + $0x140] sm:$0xff]
    %v66 = vld [vmem:[%s1 + $0x148] sm:$0xff]
    %v67 = vld [vmem:[%s1 + $0x150] sm:$0xff]
    %v68 = vld [vmem:[%s1 + $0x158] sm:$0xff]
    %v69 = vld [vmem:[%s1 + $0x160] sm:$0xff]
    %v70 = vld [vmem:[%s1 + $0x168] sm:$0xff]
    %v71 = vld [vmem:[%s1 + $0x170] sm:$0xff]
    %v72 = vld [vmem:[%s1 + $0x178] sm:$0xff]
    %v73 = vld [vmem:[%s1 + $0x180] sm:$0xff]
    %v74 = vld [vmem:[%s1 + $0x188] sm:$0xff]
    %v75 = vld [vmem:[%s1 + $0x190] sm:$0xff]
    %v76 = vld [vmem:[%s1 + $0x198] sm:$0xff]
    %v77 = vld [vmem:[%s1 + $0x1a0] sm:$0xff]
    %v78 = vld [vmem:[%s1 + $0x1a8] sm:$0xff]
    %v79 = vld [vmem:[%s1 + $0x1b0] sm:$0xff]
    %v80 = vld [vmem:[%s1 + $0x1b8] sm:$0xff]
    %v81 = vld [vmem:[%s1 + $0x1c0] sm:$0xff]
    %v82 = vld [vmem:[%s1 + $0x1c8] sm:$0xff]
    %v83 = vld [vmem:[%s1 + $0x1d0] sm:$0xff]
    %v84 = vld [vmem:[%s1 + $0x1d8] sm:$0xff]
    %v85 = vld [vmem:[%s1 + $0x1e0] sm:$0xff]
    %v86 = vld [vmem:[%s1 + $0x1e8] sm:$0xff]
    %v87 = vld [vmem:[%s1 + $0x1f0] sm:$0xff]
    %v88 = vld [vmem:[%s1 + $0x1f8] sm:$0xff]
    %v89 = vld [vmem:[%s1 + $0x200] sm:$0xff]
    %v90 = vld [vmem:[%s1 + $0x208] sm:$0xff]
    %v91 = vld [vmem:[%s1 + $0x210] sm:$0xff]
    %v92 = vld [vmem:[%s1 + $0x218] sm:$0xff]
    %v93 = vld [vmem:[%s1 + $0x220] sm:$0xff]
    %v94 = vld [vmem:[%s1 + $0x228] sm:$0xff]
    %v95 = vld [vmem:[%s1 + $0x230] sm:$0xff]
    %v96 = vld [vmem:[%s1 + $0x238] sm:$0xff]
    %v97 = vld [vmem:[%s1 + $0x240] sm:$0xff]
    %v98 = vld [vmem:[%s1 + $0x248] sm:$0xff]
    %v99 = vld [vmem:[%s1 + $0x250] sm:$0xff]
    %v100 = vld [vmem:[%s1 + $0x258] sm:$0xff]
    %v101 = vld [vmem:[%s1 + $0x260] sm:$0xff]
    %v102 = vld [vmem:[%s1 + $0x268] sm:$0xff]
    %v103 = vld [vmem:[%s1 + $0x270] sm:$0xff]
    %v104 = vld [vmem:[%s1 + $0x278] sm:$0xff]
    %v105 = vld [vmem:[%s1 + $0x280] sm:$0xff]
    %v106 = vld [vmem:[%s1 + $0x288] sm:$0xff]
    %v107 = vld [vmem:[%s1 + $0x290] sm:$0xff]
    %v108 = vld [vmem:[%s1 + $0x298] sm:$0xff]
    %v109 = vld [vmem:[%s1 + $0x2a0] sm:$0xff]
    %v110 = vld [vmem:[%s1 + $0x2a8] sm:$0xff]
    %v111 = vld [vmem:[%s1 + $0x2b0] sm:$0xff]
    %v112 = vld [vmem:[%s1 + $0x2b8] sm:$0xff]
    %v113 = vld [vmem:[%s1 + $0x2c0] sm:$0xff]
    %v114 = vld [vmem:[%s1 + $0x2c8] sm:$0xff]
    %v115 = vld [vmem:[%s1 + $0x2d0] sm:$0xff]
    %v116 = vld [vmem:[%s1 + $0x2d8] sm:$0xff]
    %v117 = vld [vmem:[%s1 + $0x2e0] sm:$0xff]
    %v118 = vld [vmem:[%s1 + $0x2e8] sm:$0xff]
    %v119 = vld [vmem:[%s1 + $0x2f0] sm:$0xff]
    %v120 = vld [vmem:[%s1 + $0x2f8] sm:$0xff]
    %v121 = vld [vmem:[%s1 + $0x300] sm:$0xff]
    %v122 = vld [vmem:[%s1 + $0x308] sm:$0xff]
    %v123 = vld [vmem:[%s1 + $0x310] sm:$0xff]
    %v124 = vld [vmem:[%s1 + $0x318] sm:$0xff]
    %v125 = vld [vmem:[%s1 + $0x320] sm:$0xff]
    %v126 = vld [vmem:[%s1 + $0x328] sm:$0xff]
    %v127 = vld [vmem:[%s1 + $0x330] sm:$0xff]
    %v128 = vld [vmem:[%s1 + $0x338] sm:$0xff]
    %v129 = vld [vmem:[%s1 + $0x340] sm:$0xff]
    %v130 = vld [vmem:[%s1 + $0x348] sm:$0xff]
    %v131 = vld [vmem:[%s1 + $0x350] sm:$0xff]
    %v132 = vld [vmem:[%s1 + $0x358] sm:$0xff]
    %v133 = vld [vmem:[%s1 + $0x360] sm:$0xff]
    %v134 = vld [vmem:[%s1 + $0x368] sm:$0xff]
    %v135 = vld [vmem:[%s1 + $0x370] sm:$0xff]
    %v136 = vld [vmem:[%s1 + $0x378] sm:$0xff]
    %v137 = vld [vmem:[%s1 + $0x380] sm:$0xff]
    %v138 = vld [vmem:[%s1 + $0x388] sm:$0xff]
    %v139 = vld [vmem:[%s1 + $0x390] sm:$0xff]
    %v140 = vld [vmem:[%s1 + $0x398] sm:$0xff]
    %v141 = vld [vmem:[%s1 + $0x3a0] sm:$0xff]
    %v142 = vld [vmem:[%s1 + $0x3a8] sm:$0xff]
    %v143 = vld [vmem:[%s1 + $0x3b0] sm:$0xff]
    %v144 = vld [vmem:[%s1 + $0x3b8] sm:$0xff]
    %v145 = vld [vmem:[%s1 + $0x3c0] sm:$0xff]
    %v146 = vld [vmem:[%s1 + $0x3c8] sm:$0xff]
    %v147 = vld [vmem:[%s1 + $0x3d0] sm:$0xff]
    %v148 = vld [vmem:[%s1 + $0x3d8] sm:$0xff]
    %v149 = vld [vmem:[%s1 + $0x3e0] sm:$0xff]
    %v150 = vld [vmem:[%s1 + $0x3e8] sm:$0xff]
    %v151 = vld [vmem:[%s1 + $0x3f0] sm:$0xff]
    %v152 = vld [vmem:[%s1 + $0x3f8] sm:$0xff]
    %v153 = vld [vmem:[%s1 + $0x400] sm:$0xff]
    %v154 = vld [vmem:[%s1 + $0x408] sm:$0xff]
    %v155 = vld [vmem:[%s1 + $0x410] sm:$0xff]
    %v156 = vld [vmem:[%s1 + $0x418] sm:$0xff]
    %v157 = vld [vmem:[%s1 + $0x420] sm:$0xff]
    %v158 = vld [vmem:[%s1 + $0x428] sm:$0xff]
    %v159 = vld [vmem:[%s1 + $0x430] sm:$0xff]
    %v160 = vld [vmem:[%s1 + $0x438] sm:$0xff]
    %v161 = vld [vmem:[%s1 + $0x440] sm:$0xff]
    %v162 = vld [vmem:[%s1 + $0x448] sm:$0xff]
    %v163 = vld [vmem:[%s1 + $0x450] sm:$0xff]
    %v164 = vld [vmem:[%s1 + $0x458] sm:$0xff]
    %v165 = vld [vmem:[%s1 + $0x460] sm:$0xff]
    %v166 = vld [vmem:[%s1 + $0x468] sm:$0xff]
    %v167 = vld [vmem:[%s1 + $0x470] sm:$0xff]
    %v168 = vld [vmem:[%s1 + $0x478] sm:$0xff]
    %v169 = vld [vmem:[%s1 + $0x480] sm:$0xff]
    %v170 = vld [vmem:[%s1 + $0x488] sm:$0xff]
    %v171 = vld [vmem:[%s1 + $0x490] sm:$0xff]
    %v172 = vld [vmem:[%s1 + $0x498] sm:$0xff]
    %v173 = vld [vmem:[%s1 + $0x4a0] sm:$0xff]
    %v174 = vld [vmem:[%s1 + $0x4a8] sm:$0xff]
    %v175 = vld [vmem:[%s1 + $0x4b0] sm:$0xff]
    %v176 = vld [vmem:[%s1 + $0x4b8] sm:$0xff]
    %v177 = vld [vmem:[%s1 + $0x4c0] sm:$0xff]
    %v178 = vld [vmem:[%s1 + $0x4c8] sm:$0xff]
    %v179 = vld [vmem:[%s1 + $0x4d0] sm:$0xff]
    %v180 = vld [vmem:[%s1 + $0x4d8] sm:$0xff]
    %v181 = vld [vmem:[%s1 + $0x4e0] sm:$0xff]
    %v182 = vld [vmem:[%s1 + $0x4e8] sm:$0xff]
    %v183 = vld [vmem:[%s1 + $0x4f0] sm:$0xff]
    %v184 = vld [vmem:[%s1 + $0x4f8] sm:$0xff]
    %v185 = vld [vmem:[%s1 + $0x500] sm:$0xff]
    %v186 = vld [vmem:[%s1 + $0x508] sm:$0xff]
    %v187 = vld [vmem:[%s1 + $0x510] sm:$0xff]
    %v188 = vld [vmem:[%s1 + $0x518] sm:$0xff]
    %v189 = vld [vmem:[%s1 + $0x520] sm:$0xff]
    %v190 = vld [vmem:[%s1 + $0x528] sm:$0xff]
    %v191 = vld [vmem:[%s1 + $0x530] sm:$0xff]
    %v192 = vld [vmem:[%s1 + $0x538] sm:$0xff]
    %v193 = vld [vmem:[%s1 + $0x540] sm:$0xff]
    %v194 = vld [vmem:[%s1 + $0x548] sm:$0xff]
    %v195 = vld [vmem:[%s1 + $0x550] sm:$0xff]
    %v196 = vld [vmem:[%s1 + $0x558] sm:$0xff]
    %v197 = vld [vmem:[%s1 + $0x560] sm:$0xff]
    %v198 = vld [vmem:[%s1 + $0x568] sm:$0xff]
    %v199 = vld [vmem:[%s1 + $0x570] sm:$0xff]
    %v200 = vld [vmem:[%s1 + $0x578] sm:$0xff]
    %v201 = vld [vmem:[%s1 + $0x580] sm:$0xff]
    %v202 = vld [vmem:[%s1 + $0x588] sm:$0xff]
    %v203 = vld [vmem:[%s1 + $0x590] sm:$0xff]
    %v204 = vld [vmem:[%s1 + $0x598] sm:$0xff]
    %v205 = vld [vmem:[%s1 + $0x5a0] sm:$0xff]
    %v206 = vld [vmem:[%s1 + $0x5a8] sm:$0xff]
    %v207 = vld [vmem:[%s1 + $0x5b0] sm:$0xff]
    %v208 = vld [vmem:[%s1 + $0x5b8] sm:$0xff]
    %v209 = vld [vmem:[%s1 + $0x5c0] sm:$0xff]
    %v210 = vld [vmem:[%s1 + $0x5c8] sm:$0xff]
    %v211 = vld [vmem:[%s1 + $0x5d0] sm:$0xff]
    %v212 = vld [vmem:[%s1 + $0x5d8] sm:$0xff]
    %v213 = vld [vmem:[%s1 + $0x5e0] sm:$0xff]
    %v214 = vld [vmem:[%s1 + $0x5e8] sm:$0xff]
    %v215 = vld [vmem:[%s1 + $0x5f0] sm:$0xff]
    %v216 = vld [vmem:[%s1 + $0x5f8] sm:$0xff]
    %v217 = vld [vmem:[%s1 + $0x600] sm:$0xff]
    %v218 = vld [vmem:[%s1 + $0x608] sm:$0xff]
    %v219 = vld [vmem:[%s1 + $0x610] sm:$0xff]
    %v220 = vld [vmem:[%s1 + $0x618] sm:$0xff]
    %v221 = vld [vmem:[%s1 + $0x620] sm:$0xff]
    %v222 = vld [vmem:[%s1 + $0x628] sm:$0xff]
    %v223 = vld [vmem:[%s1 + $0x630] sm:$0xff]
    %v224 = vld [vmem:[%s1 + $0x638] sm:$0xff]
    %v225 = vld [vmem:[%s1 + $0x640] sm:$0xff]
    %v226 = vld [vmem:[%s1 + $0x648] sm:$0xff]
    %v227 = vld [vmem:[%s1 + $0x650] sm:$0xff]
    %v228 = vld [vmem:[%s1 + $0x658] sm:$0xff]
    %v229 = vld [vmem:[%s1 + $0x660] sm:$0xff]
    %v230 = vld [vmem:[%s1 + $0x668] sm:$0xff]
    %v231 = vld [vmem:[%s1 + $0x670] sm:$0xff]
    %v232 = vld [vmem:[%s1 + $0x678] sm:$0xff]
    %v233 = vld [vmem:[%s1 + $0x680] sm:$0xff]
    %v234 = vld [vmem:[%s1 + $0x688] sm:$0xff]
    %v235 = vld [vmem:[%s1 + $0x690] sm:$0xff]
    %v236 = vld [vmem:[%s1 + $0x698] sm:$0xff]
    %v237 = vld [vmem:[%s1 + $0x6a0] sm:$0xff]
    %v238 = vld [vmem:[%s1 + $0x6a8] sm:$0xff]
    %v239 = vld [vmem:[%s1 + $0x6b0] sm:$0xff]
    %v240 = vld [vmem:[%s1 + $0x6b8] sm:$0xff]
    %v241 = vld [vmem:[%s1 + $0x6c0] sm:$0xff]
    %v242 = vld [vmem:[%s1 + $0x6c8] sm:$0xff]
    %v243 = vld [vmem:[%s1 + $0x6d0] sm:$0xff]
    %v244 = vld [vmem:[%s1 + $0x6d8] sm:$0xff]
    %v245 = vld [vmem:[%s1 + $0x6e0] sm:$0xff]
    %v246 = vld [vmem:[%s1 + $0x6e8] sm:$0xff]
    %v247 = vld [vmem:[%s1 + $0x6f0] sm:$0xff]
    %v248 = vld [vmem:[%s1 + $0x6f8] sm:$0xff]
    %v249 = vld [vmem:[%s1 + $0x700] sm:$0xff]
    %v250 = vld [vmem:[%s1 + $0x708] sm:$0xff]
    %v251 = vld [vmem:[%s1 + $0x710] sm:$0xff]
    %v252 = vld [vmem:[%s1 + $0x718] sm:$0xff]
    %v253 = vld [vmem:[%s1 + $0x720] sm:$0xff]
    %v254 = vld [vmem:[%s1 + $0x728] sm:$0xff]
    %v255 = vld [vmem:[%s1 + $0x730] sm:$0xff]
    %v256 = vld [vmem:[%s1 + $0x738] sm:$0xff]
    %v257 = vld [vmem:[%s1 + $0x740] sm:$0xff]
    %v258 = vld [vmem:[%s1 + $0x748] sm:$0xff]
    %v259 = vld [vmem:[%s1 + $0x750] sm:$0xff]
    %v260 = vld [vmem:[%s1 + $0x758] sm:$0xff]
    %v261 = vld [vmem:[%s1 + $0x760] sm:$0xff]
    %v262 = vld [vmem:[%s1 + $0x768] sm:$0xff]
    %v263 = vld [vmem:[%s1 + $0x770] sm:$0xff]
    %v264 = vld [vmem:[%s1 + $0x778] sm:$0xff]
    %v265 = vld [vmem:[%s1 + $0x780] sm:$0xff]
    %v266 = vld [vmem:[%s1 + $0x788] sm:$0xff]
    %v267 = vld [vmem:[%s1 + $0x790] sm:$0xff]
    %v268 = vld [vmem:[%s1 + $0x798] sm:$0xff]
    %v269 = vld [vmem:[%s1 + $0x7a0] sm:$0xff]
    %v270 = vld [vmem:[%s1 + $0x7a8] sm:$0xff]
    %v271 = vld [vmem:[%s1 + $0x7b0] sm:$0xff]
    %v272 = vld [vmem:[%s1 + $0x7b8] sm:$0xff]
    %v273 = vld [vmem:[%s1 + $0x7c0] sm:$0xff]
    %v274 = vld [vmem:[%s1 + $0x7c8] sm:$0xff]
    %v275 = vld [vmem:[%s1 + $0x7d0] sm:$0xff]
    %v276 = vld [vmem:[%s1 + $0x7d8] sm:$0xff]
    %v277 = vld [vmem:[%s1 + $0x7e0] sm:$0xff]
    %v278 = vld [vmem:[%s1 + $0x7e8] sm:$0xff]
    %v279 = vld [vmem:[%s1 + $0x7f0] sm:$0xff]
    %v280 = vld [vmem:[%s1 + $0x7f8] sm:$0xff]
    %v281 = vld [vmem:[%s2] sm:$0x1]
    %v283 = vlaneseq
    %v284 = vshrl.u32 %v283, 7
    %v285 = vsub.s32 0, %v284
    %v286 = vrot.slane %v281, %v285
    %v292 = vcombine.high %v21, %v21
    %v294 = vunpack.c.l.s4 1983009808
    %v295 = vunpack.c.0.s8 %v294
    %v296 = vlaneseq
    %v297 = vshrl.u32 %v296, 7
    %v298 = vsub.s32 %v295, %v297
    %v299 = vrot.slane %v21, %v298
    %v301 = vunpack.c.l.s4 1983009808
    %v302 = vunpack.c.0.s8 %v301
    %v303 = vlaneseq
    %v304 = vshrl.u32 %v303, 7
    %v305 = vsub.s32 %v302, %v304
    %v306 = vrot.slane %v292, %v305
    %v307 = vcombine.high %v299, %v299
    %v308 = vcombine.high %v306, %v306
    %v309 = vcombine.high %v22, %v22
    %v311 = vunpack.c.l.s4 1983009808
    %v312 = vunpack.c.0.s8 %v311
    %v313 = vlaneseq
    %v314 = vshrl.u32 %v313, 7
    %v315 = vsub.s32 %v312, %v314
    %v316 = vrot.slane %v22, %v315
    %v318 = vunpack.c.l.s4 1983009808
    %v319 = vunpack.c.0.s8 %v318
    %v320 = vlaneseq
    %v321 = vshrl.u32 %v320, 7
    %v322 = vsub.s32 %v319, %v321
    %v323 = vrot.slane %v309, %v322
    %v324 = vcombine.high %v316, %v316
    %v325 = vcombine.high %v323, %v323
    %v326 = vcombine.high %v23, %v23
    %v328 = vunpack.c.l.s4 1983009808
    %v329 = vunpack.c.0.s8 %v328
    %v330 = vlaneseq
    %v331 = vshrl.u32 %v330, 7
    %v332 = vsub.s32 %v329, %v331
    %v333 = vrot.slane %v23, %v332
    %v335 = vunpack.c.l.s4 1983009808
    %v336 = vunpack.c.0.s8 %v335
    %v337 = vlaneseq
    %v338 = vshrl.u32 %v337, 7
    %v339 = vsub.s32 %v336, %v338
    %v340 = vrot.slane %v326, %v339
    %v341 = vcombine.high %v333, %v333
    %v342 = vcombine.high %v340, %v340
    %v343 = vcombine.high %v24, %v24
    %v345 = vunpack.c.l.s4 1983009808
    %v346 = vunpack.c.0.s8 %v345
    %v347 = vlaneseq
    %v348 = vshrl.u32 %v347, 7
    %v349 = vsub.s32 %v346, %v348
    %v350 = vrot.slane %v24, %v349
    %v352 = vunpack.c.l.s4 1983009808
    %v353 = vunpack.c.0.s8 %v352
    %v354 = vlaneseq
    %v355 = vshrl.u32 %v354, 7
    %v356 = vsub.s32 %v353, %v355
    %v357 = vrot.slane %v343, %v356
    %v358 = vcombine.high %v350, %v350
    %v359 = vcombine.high %v357, %v357
    %376 = vmatprep.subr.mxu0 0.0
    %377 = vmatpush1.msra.mxu0 %v25
    %378 = vmatprep.subr.mxu0 0.0
    %379 = vmatpush1.msra.mxu0 %v26
    %380 = vmatprep.subr.mxu0 0.0
    %381 = vmatpush1.msra.mxu0 %v27
    %382 = vmatprep.subr.mxu0 0.0
    %383 = vmatpush1.msra.mxu0 %v28
    %384 = vmatprep.subr.mxu0 0.0
    %385 = vmatpush1.msra.mxu0 %v29
    %386 = vmatprep.subr.mxu0 0.0
    %387 = vmatpush1.msra.mxu0 %v30
    %388 = vmatprep.subr.mxu0 0.0
    %389 = vmatpush1.msra.mxu0 %v31
    %390 = vmatprep.subr.mxu0 0.0
    %391 = vmatpush1.msra.mxu0 %v32
    %392 = vmatprep.subr.mxu0 0.0
    %393 = vmatpush1.msra.mxu0 %v33
    %394 = vmatprep.subr.mxu0 0.0
    %395 = vmatpush1.msra.mxu0 %v34
    %396 = vmatprep.subr.mxu0 0.0
    %397 = vmatpush1.msra.mxu0 %v35
    %398 = vmatprep.subr.mxu0 0.0
    %399 = vmatpush1.msra.mxu0 %v36
    %400 = vmatprep.subr.mxu0 0.0
    %401 = vmatpush1.msra.mxu0 %v37
    %402 = vmatprep.subr.mxu0 0.0
    %403 = vmatpush1.msra.mxu0 %v38
    %404 = vmatprep.subr.mxu0 0.0
    %405 = vmatpush1.msra.mxu0 %v39
    %406 = vmatprep.subr.mxu0 0.0
    %407 = vmatpush1.msra.mxu0 %v40
    %408 = vmatprep.subr.mxu0 0.0
    %409 = vmatpush1.msra.mxu0 %v41
    %410 = vmatprep.subr.mxu0 0.0
    %411 = vmatpush1.msra.mxu0 %v42
    %412 = vmatprep.subr.mxu0 0.0
    %413 = vmatpush1.msra.mxu0 %v43
    %414 = vmatprep.subr.mxu0 0.0
    %415 = vmatpush1.msra.mxu0 %v44
    %416 = vmatprep.subr.mxu0 0.0
    %417 = vmatpush1.msra.mxu0 %v45
    %418 = vmatprep.subr.mxu0 0.0
    %419 = vmatpush1.msra.mxu0 %v46
    %420 = vmatprep.subr.mxu0 0.0
    %421 = vmatpush1.msra.mxu0 %v47
    %422 = vmatprep.subr.mxu0 0.0
    %423 = vmatpush1.msra.mxu0 %v48
    %424 = vmatprep.subr.mxu0 0.0
    %425 = vmatpush1.msra.mxu0 %v49
    %426 = vmatprep.subr.mxu0 0.0
    %427 = vmatpush1.msra.mxu0 %v50
    %428 = vmatprep.subr.mxu0 0.0
    %429 = vmatpush1.msra.mxu0 %v51
    %430 = vmatprep.subr.mxu0 0.0
    %431 = vmatpush1.msra.mxu0 %v52
    %432 = vmatprep.subr.mxu0 0.0
    %433 = vmatpush1.msra.mxu0 %v53
    %434 = vmatprep.subr.mxu0 0.0
    %435 = vmatpush1.msra.mxu0 %v54
    %436 = vmatprep.subr.mxu0 0.0
    %437 = vmatpush1.msra.mxu0 %v55
    %438 = vmatprep.subr.mxu0 0.0
    %439 = vmatpush1.msra.mxu0 %v56
    %440 = vmatprep.mubr.f32.mxu0 %v307
    %441 = vmatmul.mubr.f32.gmra.mrb[0].mxu0 %v299
    %v442 = vpop.f32.mrb[0].mxu0
    %v443 = vadd.f32 %v286, %v442
    %v444 = vpop.f32.mrb[0].mxu0
    %445 = vdwg.mxu0
    %446 = vmatprep.subr.mxu0 0.0
    %447 = vmatpush1.msra.mxu0 %v57
    %448 = vmatprep.subr.mxu0 0.0
    %449 = vmatpush1.msra.mxu0 %v58
    %450 = vmatprep.subr.mxu0 0.0
    %451 = vmatpush1.msra.mxu0 %v59
    %452 = vmatprep.subr.mxu0 0.0
    %453 = vmatpush1.msra.mxu0 %v60
    %454 = vmatprep.subr.mxu0 0.0
    %455 = vmatpush1.msra.mxu0 %v61
    %456 = vmatprep.subr.mxu0 0.0
    %457 = vmatpush1.msra.mxu0 %v62
    %458 = vmatprep.subr.mxu0 0.0
    %459 = vmatpush1.msra.mxu0 %v63
    %460 = vmatprep.subr.mxu0 0.0
    %461 = vmatpush1.msra.mxu0 %v64
    %462 = vmatprep.subr.mxu0 0.0
    %463 = vmatpush1.msra.mxu0 %v65
    %464 = vmatprep.subr.mxu0 0.0
    %465 = vmatpush1.msra.mxu0 %v66
    %466 = vmatprep.subr.mxu0 0.0
    %467 = vmatpush1.msra.mxu0 %v67
    %468 = vmatprep.subr.mxu0 0.0
    %469 = vmatpush1.msra.mxu0 %v68
    %470 = vmatprep.subr.mxu0 0.0
    %471 = vmatpush1.msra.mxu0 %v69
    %472 = vmatprep.subr.mxu0 0.0
    %473 = vmatpush1.msra.mxu0 %v70
    %474 = vmatprep.subr.mxu0 0.0
    %475 = vmatpush1.msra.mxu0 %v71
    %476 = vmatprep.subr.mxu0 0.0
    %477 = vmatpush1.msra.mxu0 %v72
    %478 = vmatprep.subr.mxu0 0.0
    %479 = vmatpush1.msra.mxu0 %v73
    %480 = vmatprep.subr.mxu0 0.0
    %481 = vmatpush1.msra.mxu0 %v74
    %482 = vmatprep.subr.mxu0 0.0
    %483 = vmatpush1.msra.mxu0 %v75
    %484 = vmatprep.subr.mxu0 0.0
    %485 = vmatpush1.msra.mxu0 %v76
    %486 = vmatprep.subr.mxu0 0.0
    %487 = vmatpush1.msra.mxu0 %v77
    %488 = vmatprep.subr.mxu0 0.0
    %489 = vmatpush1.msra.mxu0 %v78
    %490 = vmatprep.subr.mxu0 0.0
    %491 = vmatpush1.msra.mxu0 %v79
    %492 = vmatprep.subr.mxu0 0.0
    %493 = vmatpush1.msra.mxu0 %v80
    %494 = vmatprep.subr.mxu0 0.0
    %495 = vmatpush1.msra.mxu0 %v81
    %496 = vmatprep.subr.mxu0 0.0
    %497 = vmatpush1.msra.mxu0 %v82
    %498 = vmatprep.subr.mxu0 0.0
    %499 = vmatpush1.msra.mxu0 %v83
    %500 = vmatprep.subr.mxu0 0.0
    %501 = vmatpush1.msra.mxu0 %v84
    %502 = vmatprep.subr.mxu0 0.0
    %503 = vmatpush1.msra.mxu0 %v85
    %504 = vmatprep.subr.mxu0 0.0
    %505 = vmatpush1.msra.mxu0 %v86
    %506 = vmatprep.subr.mxu0 0.0
    %507 = vmatpush1.msra.mxu0 %v87
    %508 = vmatprep.subr.mxu0 0.0
    %509 = vmatpush1.msra.mxu0 %v88
    %510 = vmatprep.mubr.f32.mxu0 %v308
    %511 = vmatmul.mubr.f32.gmra.mrb[0].mxu0 %v306
    %v512 = vpop.f32.mrb[0].mxu0
    %v513 = vadd.f32 %v443, %v512
    %v514 = vpop.f32.mrb[0].mxu0
    %515 = vdwg.mxu0
    %516 = vmatprep.subr.mxu0 0.0
    %517 = vmatpush1.msra.mxu0 %v89
    %518 = vmatprep.subr.mxu0 0.0
    %519 = vmatpush1.msra.mxu0 %v90
    %520 = vmatprep.subr.mxu0 0.0
    %521 = vmatpush1.msra.mxu0 %v91
    %522 = vmatprep.subr.mxu0 0.0
    %523 = vmatpush1.msra.mxu0 %v92
    %524 = vmatprep.subr.mxu0 0.0
    %525 = vmatpush1.msra.mxu0 %v93
    %526 = vmatprep.subr.mxu0 0.0
    %527 = vmatpush1.msra.mxu0 %v94
    %528 = vmatprep.subr.mxu0 0.0
    %529 = vmatpush1.msra.mxu0 %v95
    %530 = vmatprep.subr.mxu0 0.0
    %531 = vmatpush1.msra.mxu0 %v96
    %532 = vmatprep.subr.mxu0 0.0
    %533 = vmatpush1.msra.mxu0 %v97
    %534 = vmatprep.subr.mxu0 0.0
    %535 = vmatpush1.msra.mxu0 %v98
    %536 = vmatprep.subr.mxu0 0.0
    %537 = vmatpush1.msra.mxu0 %v99
    %538 = vmatprep.subr.mxu0 0.0
    %539 = vmatpush1.msra.mxu0 %v100
    %540 = vmatprep.subr.mxu0 0.0
    %541 = vmatpush1.msra.mxu0 %v101
    %542 = vmatprep.subr.mxu0 0.0
    %543 = vmatpush1.msra.mxu0 %v102
    %544 = vmatprep.subr.mxu0 0.0
    %545 = vmatpush1.msra.mxu0 %v103
    %546 = vmatprep.subr.mxu0 0.0
    %547 = vmatpush1.msra.mxu0 %v104
    %548 = vmatprep.subr.mxu0 0.0
    %549 = vmatpush1.msra.mxu0 %v105
    %550 = vmatprep.subr.mxu0 0.0
    %551 = vmatpush1.msra.mxu0 %v106
    %552 = vmatprep.subr.mxu0 0.0
    %553 = vmatpush1.msra.mxu0 %v107
    %554 = vmatprep.subr.mxu0 0.0
    %555 = vmatpush1.msra.mxu0 %v108
    %556 = vmatprep.subr.mxu0 0.0
    %557 = vmatpush1.msra.mxu0 %v109
    %558 = vmatprep.subr.mxu0 0.0
    %559 = vmatpush1.msra.mxu0 %v110
    %560 = vmatprep.subr.mxu0 0.0
    %561 = vmatpush1.msra.mxu0 %v111
    %562 = vmatprep.subr.mxu0 0.0
    %563 = vmatpush1.msra.mxu0 %v112
    %564 = vmatprep.subr.mxu0 0.0
    %565 = vmatpush1.msra.mxu0 %v113
    %566 = vmatprep.subr.mxu0 0.0
    %567 = vmatpush1.msra.mxu0 %v114
    %568 = vmatprep.subr.mxu0 0.0
    %569 = vmatpush1.msra.mxu0 %v115
    %570 = vmatprep.subr.mxu0 0.0
    %571 = vmatpush1.msra.mxu0 %v116
    %572 = vmatprep.subr.mxu0 0.0
    %573 = vmatpush1.msra.mxu0 %v117
    %574 = vmatprep.subr.mxu0 0.0
    %575 = vmatpush1.msra.mxu0 %v118
    %576 = vmatprep.subr.mxu0 0.0
    %577 = vmatpush1.msra.mxu0 %v119
    %578 = vmatprep.subr.mxu0 0.0
    %579 = vmatpush1.msra.mxu0 %v120
    %580 = vmatprep.mubr.f32.mxu0 %v324
    %581 = vmatmul.mubr.f32.gmra.mrb[0].mxu0 %v316
    %v582 = vpop.f32.mrb[0].mxu0
    %v583 = vadd.f32 %v513, %v582
    %v584 = vpop.f32.mrb[0].mxu0
    %585 = vdwg.mxu0
    %586 = vmatprep.subr.mxu0 0.0
    %587 = vmatpush1.msra.mxu0 %v121
    %588 = vmatprep.subr.mxu0 0.0
    %589 = vmatpush1.msra.mxu0 %v122
    %590 = vmatprep.subr.mxu0 0.0
    %591 = vmatpush1.msra.mxu0 %v123
    %592 = vmatprep.subr.mxu0 0.0
    %593 = vmatpush1.msra.mxu0 %v124
    %594 = vmatprep.subr.mxu0 0.0
    %595 = vmatpush1.msra.mxu0 %v125
    %596 = vmatprep.subr.mxu0 0.0
    %597 = vmatpush1.msra.mxu0 %v126
    %598 = vmatprep.subr.mxu0 0.0
    %599 = vmatpush1.msra.mxu0 %v127
    %600 = vmatprep.subr.mxu0 0.0
    %601 = vmatpush1.msra.mxu0 %v128
    %602 = vmatprep.subr.mxu0 0.0
    %603 = vmatpush1.msra.mxu0 %v129
    %604 = vmatprep.subr.mxu0 0.0
    %605 = vmatpush1.msra.mxu0 %v130
    %606 = vmatprep.subr.mxu0 0.0
    %607 = vmatpush1.msra.mxu0 %v131
    %608 = vmatprep.subr.mxu0 0.0
    %609 = vmatpush1.msra.mxu0 %v132
    %610 = vmatprep.subr.mxu0 0.0
    %611 = vmatpush1.msra.mxu0 %v133
    %612 = vmatprep.subr.mxu0 0.0
    %613 = vmatpush1.msra.mxu0 %v134
    %614 = vmatprep.subr.mxu0 0.0
    %615 = vmatpush1.msra.mxu0 %v135
    %616 = vmatprep.subr.mxu0 0.0
    %617 = vmatpush1.msra.mxu0 %v136
    %618 = vmatprep.subr.mxu0 0.0
    %619 = vmatpush1.msra.mxu0 %v137
    %620 = vmatprep.subr.mxu0 0.0
    %621 = vmatpush1.msra.mxu0 %v138
    %622 = vmatprep.subr.mxu0 0.0
    %623 = vmatpush1.msra.mxu0 %v139
    %624 = vmatprep.subr.mxu0 0.0
    %625 = vmatpush1.msra.mxu0 %v140
    %626 = vmatprep.subr.mxu0 0.0
    %627 = vmatpush1.msra.mxu0 %v141
    %628 = vmatprep.subr.mxu0 0.0
    %629 = vmatpush1.msra.mxu0 %v142
    %630 = vmatprep.subr.mxu0 0.0
    %631 = vmatpush1.msra.mxu0 %v143
    %632 = vmatprep.subr.mxu0 0.0
    %633 = vmatpush1.msra.mxu0 %v144
    %634 = vmatprep.subr.mxu0 0.0
    %635 = vmatpush1.msra.mxu0 %v145
    %636 = vmatprep.subr.mxu0 0.0
    %637 = vmatpush1.msra.mxu0 %v146
    %638 = vmatprep.subr.mxu0 0.0
    %639 = vmatpush1.msra.mxu0 %v147
    %640 = vmatprep.subr.mxu0 0.0
    %641 = vmatpush1.msra.mxu0 %v148
    %642 = vmatprep.subr.mxu0 0.0
    %643 = vmatpush1.msra.mxu0 %v149
    %644 = vmatprep.subr.mxu0 0.0
    %645 = vmatpush1.msra.mxu0 %v150
    %646 = vmatprep.subr.mxu0 0.0
    %647 = vmatpush1.msra.mxu0 %v151
    %648 = vmatprep.subr.mxu0 0.0
    %649 = vmatpush1.msra.mxu0 %v152
    %650 = vmatprep.mubr.f32.mxu0 %v325
    %651 = vmatmul.mubr.f32.gmra.mrb[0].mxu0 %v323
    %v652 = vpop.f32.mrb[0].mxu0
    %v653 = vadd.f32 %v583, %v652
    %v654 = vpop.f32.mrb[0].mxu0
    %655 = vdwg.mxu0
    %656 = vmatprep.subr.mxu0 0.0
    %657 = vmatpush1.msra.mxu0 %v153
    %658 = vmatprep.subr.mxu0 0.0
    %659 = vmatpush1.msra.mxu0 %v154
    %660 = vmatprep.subr.mxu0 0.0
    %661 = vmatpush1.msra.mxu0 %v155
    %662 = vmatprep.subr.mxu0 0.0
    %663 = vmatpush1.msra.mxu0 %v156
    %664 = vmatprep.subr.mxu0 0.0
    %665 = vmatpush1.msra.mxu0 %v157
    %666 = vmatprep.subr.mxu0 0.0
    %667 = vmatpush1.msra.mxu0 %v158
    %668 = vmatprep.subr.mxu0 0.0
    %669 = vmatpush1.msra.mxu0 %v159
    %670 = vmatprep.subr.mxu0 0.0
    %671 = vmatpush1.msra.mxu0 %v160
    %672 = vmatprep.subr.mxu0 0.0
    %673 = vmatpush1.msra.mxu0 %v161
    %674 = vmatprep.subr.mxu0 0.0
    %675 = vmatpush1.msra.mxu0 %v162
    %676 = vmatprep.subr.mxu0 0.0
    %677 = vmatpush1.msra.mxu0 %v163
    %678 = vmatprep.subr.mxu0 0.0
    %679 = vmatpush1.msra.mxu0 %v164
    %680 = vmatprep.subr.mxu0 0.0
    %681 = vmatpush1.msra.mxu0 %v165
    %682 = vmatprep.subr.mxu0 0.0
    %683 = vmatpush1.msra.mxu0 %v166
    %684 = vmatprep.subr.mxu0 0.0
    %685 = vmatpush1.msra.mxu0 %v167
    %686 = vmatprep.subr.mxu0 0.0
    %687 = vmatpush1.msra.mxu0 %v168
    %688 = vmatprep.subr.mxu0 0.0
    %689 = vmatpush1.msra.mxu0 %v169
    %690 = vmatprep.subr.mxu0 0.0
    %691 = vmatpush1.msra.mxu0 %v170
    %692 = vmatprep.subr.mxu0 0.0
    %693 = vmatpush1.msra.mxu0 %v171
    %694 = vmatprep.subr.mxu0 0.0
    %695 = vmatpush1.msra.mxu0 %v172
    %696 = vmatprep.subr.mxu0 0.0
    %697 = vmatpush1.msra.mxu0 %v173
    %698 = vmatprep.subr.mxu0 0.0
    %699 = vmatpush1.msra.mxu0 %v174
    %700 = vmatprep.subr.mxu0 0.0
    %701 = vmatpush1.msra.mxu0 %v175
    %702 = vmatprep.subr.mxu0 0.0
    %703 = vmatpush1.msra.mxu0 %v176
    %704 = vmatprep.subr.mxu0 0.0
    %705 = vmatpush1.msra.mxu0 %v177
    %706 = vmatprep.subr.mxu0 0.0
    %707 = vmatpush1.msra.mxu0 %v178
    %708 = vmatprep.subr.mxu0 0.0
    %709 = vmatpush1.msra.mxu0 %v179
    %710 = vmatprep.subr.mxu0 0.0
    %711 = vmatpush1.msra.mxu0 %v180
    %712 = vmatprep.subr.mxu0 0.0
    %713 = vmatpush1.msra.mxu0 %v181
    %714 = vmatprep.subr.mxu0 0.0
    %715 = vmatpush1.msra.mxu0 %v182
    %716 = vmatprep.subr.mxu0 0.0
    %717 = vmatpush1.msra.mxu0 %v183
    %718 = vmatprep.subr.mxu0 0.0
    %719 = vmatpush1.msra.mxu0 %v184
    %720 = vmatprep.mubr.f32.mxu0 %v341
    %721 = vmatmul.mubr.f32.gmra.mrb[0].mxu0 %v333
    %v722 = vpop.f32.mrb[0].mxu0
    %v723 = vadd.f32 %v653, %v722
    %v724 = vpop.f32.mrb[0].mxu0
    %725 = vdwg.mxu0
    %726 = vmatprep.subr.mxu0 0.0
    %727 = vmatpush1.msra.mxu0 %v185
    %728 = vmatprep.subr.mxu0 0.0
    %729 = vmatpush1.msra.mxu0 %v186
    %730 = vmatprep.subr.mxu0 0.0
    %731 = vmatpush1.msra.mxu0 %v187
    %732 = vmatprep.subr.mxu0 0.0
    %733 = vmatpush1.msra.mxu0 %v188
    %734 = vmatprep.subr.mxu0 0.0
    %735 = vmatpush1.msra.mxu0 %v189
    %736 = vmatprep.subr.mxu0 0.0
    %737 = vmatpush1.msra.mxu0 %v190
    %738 = vmatprep.subr.mxu0 0.0
    %739 = vmatpush1.msra.mxu0 %v191
    %740 = vmatprep.subr.mxu0 0.0
    %741 = vmatpush1.msra.mxu0 %v192
    %742 = vmatprep.subr.mxu0 0.0
    %743 = vmatpush1.msra.mxu0 %v193
    %744 = vmatprep.subr.mxu0 0.0
    %745 = vmatpush1.msra.mxu0 %v194
    %746 = vmatprep.subr.mxu0 0.0
    %747 = vmatpush1.msra.mxu0 %v195
    %748 = vmatprep.subr.mxu0 0.0
    %749 = vmatpush1.msra.mxu0 %v196
    %750 = vmatprep.subr.mxu0 0.0
    %751 = vmatpush1.msra.mxu0 %v197
    %752 = vmatprep.subr.mxu0 0.0
    %753 = vmatpush1.msra.mxu0 %v198
    %754 = vmatprep.subr.mxu0 0.0
    %755 = vmatpush1.msra.mxu0 %v199
    %756 = vmatprep.subr.mxu0 0.0
    %757 = vmatpush1.msra.mxu0 %v200
    %758 = vmatprep.subr.mxu0 0.0
    %759 = vmatpush1.msra.mxu0 %v201
    %760 = vmatprep.subr.mxu0 0.0
    %761 = vmatpush1.msra.mxu0 %v202
    %762 = vmatprep.subr.mxu0 0.0
    %763 = vmatpush1.msra.mxu0 %v203
    %764 = vmatprep.subr.mxu0 0.0
    %765 = vmatpush1.msra.mxu0 %v204
    %766 = vmatprep.subr.mxu0 0.0
    %767 = vmatpush1.msra.mxu0 %v205
    %768 = vmatprep.subr.mxu0 0.0
    %769 = vmatpush1.msra.mxu0 %v206
    %770 = vmatprep.subr.mxu0 0.0
    %771 = vmatpush1.msra.mxu0 %v207
    %772 = vmatprep.subr.mxu0 0.0
    %773 = vmatpush1.msra.mxu0 %v208
    %774 = vmatprep.subr.mxu0 0.0
    %775 = vmatpush1.msra.mxu0 %v209
    %776 = vmatprep.subr.mxu0 0.0
    %777 = vmatpush1.msra.mxu0 %v210
    %778 = vmatprep.subr.mxu0 0.0
    %779 = vmatpush1.msra.mxu0 %v211
    %780 = vmatprep.subr.mxu0 0.0
    %781 = vmatpush1.msra.mxu0 %v212
    %782 = vmatprep.subr.mxu0 0.0
    %783 = vmatpush1.msra.mxu0 %v213
    %784 = vmatprep.subr.mxu0 0.0
    %785 = vmatpush1.msra.mxu0 %v214
    %786 = vmatprep.subr.mxu0 0.0
    %787 = vmatpush1.msra.mxu0 %v215
    %788 = vmatprep.subr.mxu0 0.0
    %789 = vmatpush1.msra.mxu0 %v216
    %790 = vmatprep.mubr.f32.mxu0 %v342
    %791 = vmatmul.mubr.f32.gmra.mrb[0].mxu0 %v340
    %v792 = vpop.f32.mrb[0].mxu0
    %v793 = vadd.f32 %v723, %v792
    %v794 = vpop.f32.mrb[0].mxu0
    %795 = vdwg.mxu0
    %796 = vmatprep.subr.mxu0 0.0
    %797 = vmatpush1.msra.mxu0 %v217
    %798 = vmatprep.subr.mxu0 0.0
    %799 = vmatpush1.msra.mxu0 %v218
    %800 = vmatprep.subr.mxu0 0.0
    %801 = vmatpush1.msra.mxu0 %v219
    %802 = vmatprep.subr.mxu0 0.0
    %803 = vmatpush1.msra.mxu0 %v220
    %804 = vmatprep.subr.mxu0 0.0
    %805 = vmatpush1.msra.mxu0 %v221
    %806 = vmatprep.subr.mxu0 0.0
    %807 = vmatpush1.msra.mxu0 %v222
    %808 = vmatprep.subr.mxu0 0.0
    %809 = vmatpush1.msra.mxu0 %v223
    %810 = vmatprep.subr.mxu0 0.0
    %811 = vmatpush1.msra.mxu0 %v224
    %812 = vmatprep.subr.mxu0 0.0
    %813 = vmatpush1.msra.mxu0 %v225
    %814 = vmatprep.subr.mxu0 0.0
    %815 = vmatpush1.msra.mxu0 %v226
    %816 = vmatprep.subr.mxu0 0.0
    %817 = vmatpush1.msra.mxu0 %v227
    %818 = vmatprep.subr.mxu0 0.0
    %819 = vmatpush1.msra.mxu0 %v228
    %820 = vmatprep.subr.mxu0 0.0
    %821 = vmatpush1.msra.mxu0 %v229
    %822 = vmatprep.subr.mxu0 0.0
    %823 = vmatpush1.msra.mxu0 %v230
    %824 = vmatprep.subr.mxu0 0.0
    %825 = vmatpush1.msra.mxu0 %v231
    %826 = vmatprep.subr.mxu0 0.0
    %827 = vmatpush1.msra.mxu0 %v232
    %828 = vmatprep.subr.mxu0 0.0
    %829 = vmatpush1.msra.mxu0 %v233
    %830 = vmatprep.subr.mxu0 0.0
    %831 = vmatpush1.msra.mxu0 %v234
    %832 = vmatprep.subr.mxu0 0.0
    %833 = vmatpush1.msra.mxu0 %v235
    %834 = vmatprep.subr.mxu0 0.0
    %835 = vmatpush1.msra.mxu0 %v236
    %836 = vmatprep.subr.mxu0 0.0
    %837 = vmatpush1.msra.mxu0 %v237
    %838 = vmatprep.subr.mxu0 0.0
    %839 = vmatpush1.msra.mxu0 %v238
    %840 = vmatprep.subr.mxu0 0.0
    %841 = vmatpush1.msra.mxu0 %v239
    %842 = vmatprep.subr.mxu0 0.0
    %843 = vmatpush1.msra.mxu0 %v240
    %844 = vmatprep.subr.mxu0 0.0
    %845 = vmatpush1.msra.mxu0 %v241
    %846 = vmatprep.subr.mxu0 0.0
    %847 = vmatpush1.msra.mxu0 %v242
    %848 = vmatprep.subr.mxu0 0.0
    %849 = vmatpush1.msra.mxu0 %v243
    %850 = vmatprep.subr.mxu0 0.0
    %851 = vmatpush1.msra.mxu0 %v244
    %852 = vmatprep.subr.mxu0 0.0
    %853 = vmatpush1.msra.mxu0 %v245
    %854 = vmatprep.subr.mxu0 0.0
    %855 = vmatpush1.msra.mxu0 %v246
    %856 = vmatprep.subr.mxu0 0.0
    %857 = vmatpush1.msra.mxu0 %v247
    %858 = vmatprep.subr.mxu0 0.0
    %859 = vmatpush1.msra.mxu0 %v248
    %860 = vmatprep.mubr.f32.mxu0 %v358
    %861 = vmatmul.mubr.f32.gmra.mrb[0].mxu0 %v350
    %v862 = vpop.f32.mrb[0].mxu0
    %v863 = vadd.f32 %v793, %v862
    %v864 = vpop.f32.mrb[0].mxu0
    %865 = vdwg.mxu0
    %866 = vmatprep.subr.mxu0 0.0
    %867 = vmatpush1.msra.mxu0 %v249
    %868 = vmatprep.subr.mxu0 0.0
    %869 = vmatpush1.msra.mxu0 %v250
    %870 = vmatprep.subr.mxu0 0.0
    %871 = vmatpush1.msra.mxu0 %v251
    %872 = vmatprep.subr.mxu0 0.0
    %873 = vmatpush1.msra.mxu0 %v252
    %874 = vmatprep.subr.mxu0 0.0
    %875 = vmatpush1.msra.mxu0 %v253
    %876 = vmatprep.subr.mxu0 0.0
    %877 = vmatpush1.msra.mxu0 %v254
    %878 = vmatprep.subr.mxu0 0.0
    %879 = vmatpush1.msra.mxu0 %v255
    %880 = vmatprep.subr.mxu0 0.0
    %881 = vmatpush1.msra.mxu0 %v256
    %882 = vmatprep.subr.mxu0 0.0
    %883 = vmatpush1.msra.mxu0 %v257
    %884 = vmatprep.subr.mxu0 0.0
    %885 = vmatpush1.msra.mxu0 %v258
    %886 = vmatprep.subr.mxu0 0.0
    %887 = vmatpush1.msra.mxu0 %v259
    %888 = vmatprep.subr.mxu0 0.0
    %889 = vmatpush1.msra.mxu0 %v260
    %890 = vmatprep.subr.mxu0 0.0
    %891 = vmatpush1.msra.mxu0 %v261
    %892 = vmatprep.subr.mxu0 0.0
    %893 = vmatpush1.msra.mxu0 %v262
    %894 = vmatprep.subr.mxu0 0.0
    %895 = vmatpush1.msra.mxu0 %v263
    %896 = vmatprep.subr.mxu0 0.0
    %897 = vmatpush1.msra.mxu0 %v264
    %898 = vmatprep.subr.mxu0 0.0
    %899 = vmatpush1.msra.mxu0 %v265
    %900 = vmatprep.subr.mxu0 0.0
    %901 = vmatpush1.msra.mxu0 %v266
    %902 = vmatprep.subr.mxu0 0.0
    %903 = vmatpush1.msra.mxu0 %v267
    %904 = vmatprep.subr.mxu0 0.0
    %905 = vmatpush1.msra.mxu0 %v268
    %906 = vmatprep.subr.mxu0 0.0
    %907 = vmatpush1.msra.mxu0 %v269
    %908 = vmatprep.subr.mxu0 0.0
    %909 = vmatpush1.msra.mxu0 %v270
    %910 = vmatprep.subr.mxu0 0.0
    %911 = vmatpush1.msra.mxu0 %v271
    %912 = vmatprep.subr.mxu0 0.0
    %913 = vmatpush1.msra.mxu0 %v272
    %914 = vmatprep.subr.mxu0 0.0
    %915 = vmatpush1.msra.mxu0 %v273
    %916 = vmatprep.subr.mxu0 0.0
    %917 = vmatpush1.msra.mxu0 %v274
    %918 = vmatprep.subr.mxu0 0.0
    %919 = vmatpush1.msra.mxu0 %v275
    %920 = vmatprep.subr.mxu0 0.0
    %921 = vmatpush1.msra.mxu0 %v276
    %922 = vmatprep.subr.mxu0 0.0
    %923 = vmatpush1.msra.mxu0 %v277
    %924 = vmatprep.subr.mxu0 0.0
    %925 = vmatpush1.msra.mxu0 %v278
    %926 = vmatprep.subr.mxu0 0.0
    %927 = vmatpush1.msra.mxu0 %v279
    %928 = vmatprep.subr.mxu0 0.0
    %929 = vmatpush1.msra.mxu0 %v280
    %930 = vmatprep.mubr.f32.mxu0 %v359
    %931 = vmatmul.mubr.f32.gmra.mrb[0].mxu0 %v357
    %v932 = vpop.f32.mrb[0].mxu0
    %v933 = vadd.f32 %v863, %v932
    %v934 = vpop.f32.mrb[0].mxu0
    %935 = vdwg.mxu0
    %v936 = vmax.f32 %v933, 0.0
    %v937 = vld [vmem:[%s3] sm:$0xff]
    %v938 = vld [vmem:[%s3 + $0x8] sm:$0xff]
    %v939 = vld [vmem:[%s3 + $0x10] sm:$0xff]
    %v940 = vld [vmem:[%s3 + $0x18] sm:$0xff]
    %v941 = vld [vmem:[%s3 + $0x20] sm:$0xff]
    %v942 = vld [vmem:[%s3 + $0x28] sm:$0xff]
    %v943 = vld [vmem:[%s3 + $0x30] sm:$0xff]
    %v944 = vld [vmem:[%s3 + $0x38] sm:$0xff]
    %v945 = vld [vmem:[%s3 + $0x40] sm:$0xff]
    %v946 = vld [vmem:[%s3 + $0x48] sm:$0xff]
    %v947 = vld [vmem:[%s3 + $0x50] sm:$0xff]
    %v948 = vld [vmem:[%s3 + $0x58] sm:$0xff]
    %v949 = vld [vmem:[%s3 + $0x60] sm:$0xff]
    %v950 = vld [vmem:[%s3 + $0x68] sm:$0xff]
    %v951 = vld [vmem:[%s3 + $0x70] sm:$0xff]
    %v952 = vld [vmem:[%s3 + $0x78] sm:$0xff]
    %v953 = vld [vmem:[%s4] sm:$0x1]
    %v955 = vlaneseq
    %v956 = vshrl.u32 %v955, 7
    %v957 = vsub.s32 0, %v956
    %v958 = vrot.slane %v953, %v957
    %960 = vmatprep.subr.mxu0 0.0
    %961 = vmatpush1.msra.mxu0 %v937
    %962 = vmatprep.subr.mxu0 0.0
    %963 = vmatpush1.msra.mxu0 %v938
    %964 = vmatprep.subr.mxu0 0.0
    %965 = vmatpush1.msra.mxu0 %v939
    %966 = vmatprep.subr.mxu0 0.0
    %967 = vmatpush1.msra.mxu0 %v940
    %968 = vmatprep.subr.mxu0 0.0
    %969 = vmatpush1.msra.mxu0 %v941
    %970 = vmatprep.subr.mxu0 0.0
    %971 = vmatpush1.msra.mxu0 %v942
    %972 = vmatprep.subr.mxu0 0.0
    %973 = vmatpush1.msra.mxu0 %v943
    %974 = vmatprep.subr.mxu0 0.0
    %975 = vmatpush1.msra.mxu0 %v944
    %976 = vmatprep.subr.mxu0 0.0
    %977 = vmatpush1.msra.mxu0 %v945
    %978 = vmatprep.subr.mxu0 0.0
    %979 = vmatpush1.msra.mxu0 %v946
    %980 = vmatprep.subr.mxu0 0.0
    %981 = vmatpush1.msra.mxu0 %v947
    %982 = vmatprep.subr.mxu0 0.0
    %983 = vmatpush1.msra.mxu0 %v948
    %984 = vmatprep.subr.mxu0 0.0
    %985 = vmatpush1.msra.mxu0 %v949
    %986 = vmatprep.subr.mxu0 0.0
    %987 = vmatpush1.msra.mxu0 %v950
    %988 = vmatprep.subr.mxu0 0.0
    %989 = vmatpush1.msra.mxu0 %v951
    %990 = vmatprep.subr.mxu0 0.0
    %991 = vmatpush1.msra.mxu0 %v952
    %992 = vmatprep.subr.mxu0 0.0
    %993 = vmatpush1.msra.mxu0 0.0
    %994 = vmatprep.subr.mxu0 0.0
    %995 = vmatpush1.msra.mxu0 0.0
    %996 = vmatprep.subr.mxu0 0.0
    %997 = vmatpush1.msra.mxu0 0.0
    %998 = vmatprep.subr.mxu0 0.0
    %999 = vmatpush1.msra.mxu0 0.0
    %1000 = vmatprep.subr.mxu0 0.0
    %1001 = vmatpush1.msra.mxu0 0.0
    %1002 = vmatprep.subr.mxu0 0.0
    %1003 = vmatpush1.msra.mxu0 0.0
    %1004 = vmatprep.subr.mxu0 0.0
    %1005 = vmatpush1.msra.mxu0 0.0
    %1006 = vmatprep.subr.mxu0 0.0
    %1007 = vmatpush1.msra.mxu0 0.0
    %1008 = vmatprep.subr.mxu0 0.0
    %1009 = vmatpush1.msra.mxu0 0.0
    %1010 = vmatprep.subr.mxu0 0.0
    %1011 = vmatpush1.msra.mxu0 0.0
    %1012 = vmatprep.subr.mxu0 0.0
    %1013 = vmatpush1.msra.mxu0 0.0
    %1014 = vmatprep.subr.mxu0 0.0
    %1015 = vmatpush1.msra.mxu0 0.0
    %1016 = vmatprep.subr.mxu0 0.0
    %1017 = vmatpush1.msra.mxu0 0.0
    %1018 = vmatprep.subr.mxu0 0.0
    %1019 = vmatpush1.msra.mxu0 0.0
    %1020 = vmatprep.subr.mxu0 0.0
    %1021 = vmatpush1.msra.mxu0 0.0
    %1022 = vmatprep.subr.mxu0 0.0
    %1023 = vmatpush1.msra.mxu0 0.0
    %1024 = vmatprep.mubr.f32.mxu0 0.0
    %1025 = vmatmul.mubr.f32.gmra.mrb[0].mxu0 %v936
    %v1026 = vpop.f32.mrb[0].mxu0
    %v1027 = vadd.f32 %v958, %v1026
    %v1028 = vpop.f32.mrb[0].mxu0
    %1029 = vdwg.mxu0
    %v1030 = vlaneseq
    %v1031 = vand.u32 %v1030, 127
    %vm1032 = vcmp.lt.s32.totalorder %v1031, 10
    %v1033 = vsel %vm1032, %v1027, -1e+30
    %vm1034 = vcmask 1041408
    %v1035 = vsel %vm1034, %v1033, -inf
    %1036 = vmax.xlane.f32.xlu0 %v1035
    %v1037 = vpop.xlane.xlu0 %1036
    %v1038 = vsub.f32 %v1033, %v1037
    %v1039 = vmul.f32 %v1038, 1.442695
    %v1040 = vpow.pop %v1039
    %v1041 = vsel %vm1034, %v1040, 0.0
    %1042 = vadd.xlane.f32.xlu0 %v1041
    %v1043 = vpop.xlane.xlu0 %1042
    %v1044 = vlog2.pop %v1043
    %v1045 = vmul.f32 %v1044, 0.6931472
    %v1046 = vadd.f32 %v1037, %v1045
    %v1047 = vsub.f32 %v1033, %v1046
    %1048 = vst [vmem:[#allocation2] sm:$0x3] %v1047
    // Predicated region
    $region22: #{net_forward.5} parent=1 // pred_check
      _
    $region23: #{net_forward.5} parent=1 // pred_check_branch
      %1050 = sbr.rel (0) target = $region25
    $region24: #{net_forward.5} parent=1 // pred_region
      %s1052 = ssub.s32 32, 32
      %1053 = vsyncadd [#allocation3], %s1052
      %s1055 = sshll.u32 [#allocation2], 4
      %s1056 = int_to_ptr.vmem [resolvable:$true] %s1055
      %1058 = dma.vmem_to_hbm [thread:$0]  %s1056, 32, %s5, [#allocation3]
    $region25: #{net_forward.5} parent=1 // pred_fallthru
      _
    // Predicated region
    $region26: #{net_forward.5} parent=1 // pred_check
      _
    $region27: #{net_forward.5} parent=1 // pred_check_branch
      %1060 = sbr.rel (0) target = $region29
    $region28: #{net_forward.5} parent=1 // pred_region
      %1061 = dma.done [#allocation3], 32
    $region29: #{net_forward.5} parent=1 // pred_fallthru
      _
    %1062 = vsyncpa [#allocation3], 1

</llo_original>
